<compile_context>
chip_gen: v6e
topology: v6e:2x2x1
jax: 0.10.0
libtpu: 0.0.40
codegen_flags: <defaults>
</compile_context>

<pallas_src>
import jax
import jax.numpy as jnp
from jax.experimental import pallas as pl
from jax.experimental.pallas import tpu as pltpu

# ----------------------------- configuration --------------------------------
BATCH = 2
SEQ = 8
HIDDEN = 32
NUM_HEADS = 2
HEAD_DIM = HIDDEN // NUM_HEADS
FFN = 64
VOCAB = 128
NUM_LAYERS = 2
TYPE_VOCAB = 2
LN_EPS = 1e-12  # BERT default


def _layer_norm(x, gamma, beta):
    mu = jnp.mean(x, axis=-1, keepdims=True)
    var = jnp.mean((x - mu) ** 2, axis=-1, keepdims=True)
    return (x - mu) * jax.lax.rsqrt(var + LN_EPS) * gamma + beta


def _gelu(x):
    # TODO(synk): HF BERT uses the exact erf GELU; tanh approximation is used
    # here (EUP-friendly, erf has no guaranteed Mosaic lowering).
    c = 0.7978845608028654  # sqrt(2/pi)
    return 0.5 * x * (1.0 + jnp.tanh(c * (x + 0.044715 * x * x * x)))


# -------------------- fused kernel: embed + L layers + pool ------------------
def fused_bert_kernel(ids_ref, tok_ref, pos_ref, typ_ref, eg_ref, eb_ref,
                      wq_ref, bq_ref, wk_ref, bk_ref, wv_ref, bv_ref,
                      wo_ref, bo_ref, g1_ref, b1_ref,
                      w1_ref, bf1_ref, w2_ref, bf2_ref, g2_ref, b2_ref,
                      out_ref):
    # One grid program == one sequence of the batch.
    # ids_ref: (S, 1) int32; tok_ref: (V, H); pos_ref: (S, H); typ_ref: (1, H)
    # stacked per-layer weights carry a leading NUM_LAYERS axis.

    # ---- embeddings + LayerNorm ---------------------------------------------
    # TODO(synk): at real vocab sizes (30522) replace the one-hot matmul with a
    # scalar-prefetch row gather (tok_emb in HBM via memory_space=pl.ANY);
    # at V=128 the one-hot is a single lane-dense MXU pass and is fine.
    ids = ids_ref[...]                                            # (S, 1)
    iota = jax.lax.broadcasted_iota(jnp.int32, (SEQ, VOCAB), 1)
    onehot = (iota == ids).astype(jnp.float32)                    # (S, V)
    x = jnp.dot(onehot, tok_ref[...], preferred_element_type=jnp.float32)
    # TODO(synk): no attention/padding mask; all tokens are token_type 0.
    x = x + pos_ref[...] + typ_ref[...]
    x = _layer_norm(x, eg_ref[...], eb_ref[...])                  # (S, H) f32

    scale = 1.0 / (HEAD_DIM ** 0.5)

    # ---- transformer encoder layers (weights resident in VMEM) --------------
    def layer_body(l, x):
        xb = x.astype(jnp.bfloat16)

        wq_l = wq_ref[l]          # (NH*H, HD) bf16, per-head blocks on sublanes
        wk_l = wk_ref[l]
        wv_l = wv_ref[l]
        wo_l = wo_ref[l]          # (NH*HD, H) bf16
        bq_l = bq_ref[l]          # (NH, HD) f32
        bk_l = bk_ref[l]
        bv_l = bv_ref[l]

        attn = jnp.zeros((SEQ, HIDDEN), jnp.float32)
        for h in range(NUM_HEADS):                 # static unroll, no lane slicing
            r0, r1 = h * HIDDEN, (h + 1) * HIDDEN
            qh = jnp.dot(xb, wq_l[r0:r1],
                         preferred_element_type=jnp.float32) + bq_l[h:h + 1, :]
            kh = jnp.dot(xb, wk_l[r0:r1],
                         preferred_element_type=jnp.float32) + bk_l[h:h + 1, :]
            vh = jnp.dot(xb, wv_l[r0:r1],
                         preferred_element_type=jnp.float32) + bv_l[h:h + 1, :]

            s = jnp.einsum('qd,kd->qk',
                           qh.astype(jnp.bfloat16), kh.astype(jnp.bfloat16),
                           preferred_element_type=jnp.float32) * scale
            s = s - jnp.max(s, axis=-1, keepdims=True)
            p = jnp.exp(s)
            p = p * pl.reciprocal(jnp.sum(p, axis=-1, keepdims=True), approx=True)

            ctx = jnp.dot(p.astype(jnp.bfloat16), vh.astype(jnp.bfloat16),
                          preferred_element_type=jnp.float32)     # (S, HD)
            # output projection accumulated per head (replaces lane concat)
            attn = attn + jnp.dot(ctx.astype(jnp.bfloat16),
                                  wo_l[h * HEAD_DIM:(h + 1) * HEAD_DIM],
                                  preferred_element_type=jnp.float32)
        attn = attn + bo_ref[l]

        h1 = _layer_norm(x + attn, g1_ref[l], b1_ref[l])

        ff = jnp.dot(h1.astype(jnp.bfloat16), w1_ref[l],
                     preferred_element_type=jnp.float32) + bf1_ref[l]
        ff = _gelu(ff)
        ff = jnp.dot(ff.astype(jnp.bfloat16), w2_ref[l],
                     preferred_element_type=jnp.float32) + bf2_ref[l]
        return _layer_norm(h1 + ff, g2_ref[l], b2_ref[l])

    x = jax.lax.fori_loop(0, NUM_LAYERS, layer_body, x, unroll=True)

    # ---- mean pool over the sequence (last_hidden_state.mean(dim=1)) --------
    out_ref[...] = jnp.mean(x, axis=0, keepdims=True).reshape(1, 1, HIDDEN)


# ------------------------------- wrappers ------------------------------------
def _full_spec(shape):
    zeros = (0,) * len(shape)
    return pl.BlockSpec(shape, lambda i: zeros)


def init_params(key):
    def normal(k, shape, dtype=jnp.float32):
        return (0.02 * jax.random.normal(k, shape, dtype=jnp.float32)).astype(dtype)

    L, NH, H, HD, F = NUM_LAYERS, NUM_HEADS, HIDDEN, HEAD_DIM, FFN
    keys = jax.random.split(key, 9)
    return {
        "tok_emb": normal(keys[0], (VOCAB, H)),
        "pos_emb": normal(keys[1], (SEQ, H)),
        "typ_emb": normal(keys[2], (TYPE_VOCAB, H)),
        "emb_g": jnp.ones((1, H), jnp.float32),
        "emb_b": jnp.zeros((1, H), jnp.float32),
        # stacked per-layer, per-head weights (bf16 for the MXU)
        "wq": normal(keys[3], (L, NH * H, HD), jnp.bfloat16),
        "wk": normal(keys[4], (L, NH * H, HD), jnp.bfloat16),
        "wv": normal(keys[5], (L, NH * H, HD), jnp.bfloat16),
        "bq": jnp.zeros((L, NH, HD), jnp.float32),
        "bk": jnp.zeros((L, NH, HD), jnp.float32),
        "bv": jnp.zeros((L, NH, HD), jnp.float32),
        "wo": normal(keys[6], (L, NH * HD, H), jnp.bfloat16),
        "bo": jnp.zeros((L, 1, H), jnp.float32),
        "g1": jnp.ones((L, 1, H), jnp.float32),
        "b1": jnp.zeros((L, 1, H), jnp.float32),
        "w1": normal(keys[7], (L, H, F), jnp.bfloat16),
        "bf1": jnp.zeros((L, 1, F), jnp.float32),
        "w2": normal(keys[8], (L, F, H), jnp.bfloat16),
        "bf2": jnp.zeros((L, 1, H), jnp.float32),
        "g2": jnp.ones((L, 1, H), jnp.float32),
        "b2": jnp.zeros((L, 1, H), jnp.float32),
    }


@jax.jit
def text_embedding_forward(token_ids, params):
    """Equivalent of TextEmbedding.forward: BERT encoder + mean over seq dim."""
    b, s = token_ids.shape
    ids2d = token_ids.reshape(b * s, 1).astype(jnp.int32)   # row-major (batch, pos)
    typ0 = params["typ_emb"][0:1]                            # all tokens are type 0

    args = (ids2d, params["tok_emb"], params["pos_emb"], typ0,
            params["emb_g"], params["emb_b"],
            params["wq"], params["bq"], params["wk"], params["bk"],
            params["wv"], params["bv"], params["wo"], params["bo"],
            params["g1"], params["b1"],
            params["w1"], params["bf1"], params["w2"], params["bf2"],
            params["g2"], params["b2"])

    in_specs = [pl.BlockSpec((s, 1), lambda i: (i, 0))]      # token ids per sequence
    in_specs += [_full_spec(a.shape) for a in args[1:]]      # weights: resident, shared

    pooled = pl.pallas_call(
        fused_bert_kernel,
        out_shape=jax.ShapeDtypeStruct((b, 1, HIDDEN), jnp.float32),
        grid=(b,),
        in_specs=in_specs,
        out_specs=pl.BlockSpec((1, 1, HIDDEN), lambda i: (i, 0, 0)),
        compiler_params=pltpu.CompilerParams(dimension_semantics=("parallel",)),
    )(*args)
    return pooled.reshape(b, HIDDEN)


if __name__ == "__main__":
    key = jax.random.PRNGKey(0)
    k_ids, k_params = jax.random.split(key)
    # TODO(synk): BertTokenizer has no Pallas equivalent; synthesize token ids.
    token_ids = jax.random.randint(k_ids, (BATCH, SEQ), 0, VOCAB, dtype=jnp.int32)
    params = init_params(k_params)

    out = text_embedding_forward(token_ids, params)
    out = jax.block_until_ready(out)
    assert out.shape == (BATCH, HIDDEN) and out.dtype == jnp.float32
    print("KERNEL_OK")
</pallas_src>

<mosaic_0001>
module attributes {stable_mosaic.version = 11 : i64} {
  func.func @fused_bert_kernel(%arg0: i32, %arg1: memref<8x1xi32, #tpu.memory_space<vmem>>, %arg2: memref<128x32xf32, #tpu.memory_space<vmem>>, %arg3: memref<8x32xf32, #tpu.memory_space<vmem>>, %arg4: memref<1x32xf32, #tpu.memory_space<vmem>>, %arg5: memref<1x32xf32, #tpu.memory_space<vmem>>, %arg6: memref<1x32xf32, #tpu.memory_space<vmem>>, %arg7: memref<2x64x16xbf16, #tpu.memory_space<vmem>>, %arg8: memref<2x2x16xf32, #tpu.memory_space<vmem>>, %arg9: memref<2x64x16xbf16, #tpu.memory_space<vmem>>, %arg10: memref<2x2x16xf32, #tpu.memory_space<vmem>>, %arg11: memref<2x64x16xbf16, #tpu.memory_space<vmem>>, %arg12: memref<2x2x16xf32, #tpu.memory_space<vmem>>, %arg13: memref<2x32x32xbf16, #tpu.memory_space<vmem>>, %arg14: memref<2x1x32xf32, #tpu.memory_space<vmem>>, %arg15: memref<2x1x32xf32, #tpu.memory_space<vmem>>, %arg16: memref<2x1x32xf32, #tpu.memory_space<vmem>>, %arg17: memref<2x32x64xbf16, #tpu.memory_space<vmem>>, %arg18: memref<2x1x64xf32, #tpu.memory_space<vmem>>, %arg19: memref<2x64x32xbf16, #tpu.memory_space<vmem>>, %arg20: memref<2x1x32xf32, #tpu.memory_space<vmem>>, %arg21: memref<2x1x32xf32, #tpu.memory_space<vmem>>, %arg22: memref<2x1x32xf32, #tpu.memory_space<vmem>>, %arg23: memref<1x1x32xf32, #tpu.memory_space<vmem>>) attributes {dimension_semantics = [#tpu.dimension_semantics<parallel>], iteration_bounds = array<i64: 2>, scalar_prefetch = 0 : i64, scratch_operands = 0 : i64, tpu.core_type = #tpu.core_type<tc>, window_params = [{transform_indices = @transform_0, window_bounds = array<i64: 8, 1>}, {pipeline_mode = #tpu.pipeline_mode<synchronous>, transform_indices = @transform_1, window_bounds = array<i64: 128, 32>}, {pipeline_mode = #tpu.pipeline_mode<synchronous>, transform_indices = @transform_2, window_bounds = array<i64: 8, 32>}, {pipeline_mode = #tpu.pipeline_mode<synchronous>, transform_indices = @transform_3, window_bounds = array<i64: 1, 32>}, {pipeline_mode = #tpu.pipeline_mode<synchronous>, transform_indices = @transform_4, window_bounds = array<i64: 1, 32>}, {pipeline_mode = #tpu.pipeline_mode<synchronous>, transform_indices = @transform_5, window_bounds = array<i64: 1, 32>}, {pipeline_mode = #tpu.pipeline_mode<synchronous>, transform_indices = @transform_6, window_bounds = array<i64: 2, 64, 16>}, {pipeline_mode = #tpu.pipeline_mode<synchronous>, transform_indices = @transform_7, window_bounds = array<i64: 2, 2, 16>}, {pipeline_mode = #tpu.pipeline_mode<synchronous>, transform_indices = @transform_8, window_bounds = array<i64: 2, 64, 16>}, {pipeline_mode = #tpu.pipeline_mode<synchronous>, transform_indices = @transform_9, window_bounds = array<i64: 2, 2, 16>}, {pipeline_mode = #tpu.pipeline_mode<synchronous>, transform_indices = @transform_10, window_bounds = array<i64: 2, 64, 16>}, {pipeline_mode = #tpu.pipeline_mode<synchronous>, transform_indices = @transform_11, window_bounds = array<i64: 2, 2, 16>}, {pipeline_mode = #tpu.pipeline_mode<synchronous>, transform_indices = @transform_12, window_bounds = array<i64: 2, 32, 32>}, {pipeline_mode = #tpu.pipeline_mode<synchronous>, transform_indices = @transform_13, window_bounds = array<i64: 2, 1, 32>}, {pipeline_mode = #tpu.pipeline_mode<synchronous>, transform_indices = @transform_14, window_bounds = array<i64: 2, 1, 32>}, {pipeline_mode = #tpu.pipeline_mode<synchronous>, transform_indices = @transform_15, window_bounds = array<i64: 2, 1, 32>}, {pipeline_mode = #tpu.pipeline_mode<synchronous>, transform_indices = @transform_16, window_bounds = array<i64: 2, 32, 64>}, {pipeline_mode = #tpu.pipeline_mode<synchronous>, transform_indices = @transform_17, window_bounds = array<i64: 2, 1, 64>}, {pipeline_mode = #tpu.pipeline_mode<synchronous>, transform_indices = @transform_18, window_bounds = array<i64: 2, 64, 32>}, {pipeline_mode = #tpu.pipeline_mode<synchronous>, transform_indices = @transform_19, window_bounds = array<i64: 2, 1, 32>}, {pipeline_mode = #tpu.pipeline_mode<synchronous>, transform_indices = @transform_20, window_bounds = array<i64: 2, 1, 32>}, {pipeline_mode = #tpu.pipeline_mode<synchronous>, transform_indices = @transform_21, window_bounds = array<i64: 2, 1, 32>}, {transform_indices = @transform_22, window_bounds = array<i64: 1, 1, 32>}]} {
    %c0 = arith.constant 0 : index
    %c0_0 = arith.constant 0 : index
    %0 = vector.load %arg1[%c0, %c0_0] : memref<8x1xi32, #tpu.memory_space<vmem>>, vector<8x1xi32>
    %1 = tpu.iota {dimensions = array<i32: 1>} : vector<8x128xi32>
    %2 = vector.broadcast %0 : vector<8x1xi32> to vector<8x128xi32>
    %3 = arith.cmpi eq, %1, %2 : vector<8x128xi32>
    %4 = arith.extui %3 : vector<8x128xi1> to vector<8x128xi32>
    %5 = arith.sitofp %4 : vector<8x128xi32> to vector<8x128xf32>
    %c0_1 = arith.constant 0 : index
    %c0_2 = arith.constant 0 : index
    %6 = vector.load %arg2[%c0_1, %c0_2] : memref<128x32xf32, #tpu.memory_space<vmem>>, vector<128x32xf32>
    %cst = arith.constant dense<0.000000e+00> : vector<8x32xf32>
    %7 = tpu.matmul %5, %6, %cst {dimension_numbers = #tpu.dot_dimension_numbers<[1], [0], [0], [1], [0, 0, 1, 1], [], []>} : vector<8x128xf32>, vector<128x32xf32>, vector<8x32xf32> -> vector<8x32xf32>
    %c0_3 = arith.constant 0 : index
    %c0_4 = arith.constant 0 : index
    %8 = vector.load %arg3[%c0_3, %c0_4] : memref<8x32xf32, #tpu.memory_space<vmem>>, vector<8x32xf32>
    %9 = arith.addf %7, %8 : vector<8x32xf32>
    %c0_5 = arith.constant 0 : index
    %c0_6 = arith.constant 0 : index
    %10 = vector.load %arg4[%c0_5, %c0_6] : memref<1x32xf32, #tpu.memory_space<vmem>>, vector<1x32xf32>
    %11 = vector.broadcast %10 : vector<1x32xf32> to vector<8x32xf32>
    %12 = arith.addf %9, %11 : vector<8x32xf32>
    %c0_7 = arith.constant 0 : index
    %c0_8 = arith.constant 0 : index
    %13 = vector.load %arg5[%c0_7, %c0_8] : memref<1x32xf32, #tpu.memory_space<vmem>>, vector<1x32xf32>
    %c0_9 = arith.constant 0 : index
    %c0_10 = arith.constant 0 : index
    %14 = vector.load %arg6[%c0_9, %c0_10] : memref<1x32xf32, #tpu.memory_space<vmem>>, vector<1x32xf32>
    %cst_11 = arith.constant dense<0.000000e+00> : vector<8xf32>
    %15 = vector.multi_reduction <add>, %12, %cst_11 [1] : vector<8x32xf32> to vector<8xf32>
    %16 = vector.shape_cast %15 : vector<8xf32> to vector<8x1xf32>
    %cst_12 = arith.constant 3.200000e+01 : f32
    %17 = vector.broadcast %cst_12 : f32 to vector<8x1xf32>
    %18 = arith.divf %16, %17 : vector<8x1xf32>
    %19 = vector.broadcast %18 : vector<8x1xf32> to vector<8x32xf32>
    %20 = arith.subf %12, %19 : vector<8x32xf32>
    %21 = arith.mulf %20, %20 : vector<8x32xf32>
    %cst_13 = arith.constant dense<0.000000e+00> : vector<8xf32>
    %22 = vector.multi_reduction <add>, %21, %cst_13 [1] : vector<8x32xf32> to vector<8xf32>
    %23 = vector.shape_cast %22 : vector<8xf32> to vector<8x1xf32>
    %cst_14 = arith.constant 3.200000e+01 : f32
    %24 = vector.broadcast %cst_14 : f32 to vector<8x1xf32>
    %25 = arith.divf %23, %24 : vector<8x1xf32>
    %26 = vector.broadcast %18 : vector<8x1xf32> to vector<8x32xf32>
    %27 = arith.subf %12, %26 : vector<8x32xf32>
    %cst_15 = arith.constant 9.99999996E-13 : f32
    %28 = vector.broadcast %cst_15 : f32 to vector<8x1xf32>
    %29 = arith.addf %25, %28 : vector<8x1xf32>
    %30 = math.rsqrt %29 : vector<8x1xf32>
    %31 = vector.broadcast %30 : vector<8x1xf32> to vector<8x32xf32>
    %32 = arith.mulf %27, %31 : vector<8x32xf32>
    %33 = vector.broadcast %13 : vector<1x32xf32> to vector<8x32xf32>
    %34 = arith.mulf %32, %33 : vector<8x32xf32>
    %35 = vector.broadcast %14 : vector<1x32xf32> to vector<8x32xf32>
    %36 = arith.addf %34, %35 : vector<8x32xf32>
    %c0_i32 = arith.constant 0 : i32
    %37 = arith.truncf %36 : vector<8x32xf32> to vector<8x32xbf16>
    %38 = arith.index_cast %c0_i32 : i32 to index
    %c0_16 = arith.constant 0 : index
    %c0_17 = arith.constant 0 : index
    %39 = vector.load %arg7[%38, %c0_16, %c0_17] : memref<2x64x16xbf16, #tpu.memory_space<vmem>>, vector<1x64x16xbf16>
    %40 = vector.shape_cast %39 : vector<1x64x16xbf16> to vector<64x16xbf16>
    %41 = arith.index_cast %c0_i32 : i32 to index
    %c0_18 = arith.constant 0 : index
    %c0_19 = arith.constant 0 : index
    %42 = vector.load %arg9[%41, %c0_18, %c0_19] : memref<2x64x16xbf16, #tpu.memory_space<vmem>>, vector<1x64x16xbf16>
    %43 = vector.shape_cast %42 : vector<1x64x16xbf16> to vector<64x16xbf16>
    %44 = arith.index_cast %c0_i32 : i32 to index
    %c0_20 = arith.constant 0 : index
    %c0_21 = arith.constant 0 : index
    %45 = vector.load %arg11[%44, %c0_20, %c0_21] : memref<2x64x16xbf16, #tpu.memory_space<vmem>>, vector<1x64x16xbf16>
    %46 = vector.shape_cast %45 : vector<1x64x16xbf16> to vector<64x16xbf16>
    %47 = arith.index_cast %c0_i32 : i32 to index
    %c0_22 = arith.constant 0 : index
    %c0_23 = arith.constant 0 : index
    %48 = vector.load %arg13[%47, %c0_22, %c0_23] : memref<2x32x32xbf16, #tpu.memory_space<vmem>>, vector<1x32x32xbf16>
    %49 = vector.shape_cast %48 : vector<1x32x32xbf16> to vector<32x32xbf16>
    %50 = arith.index_cast %c0_i32 : i32 to index
    %c0_24 = arith.constant 0 : index
    %c0_25 = arith.constant 0 : index
    %51 = vector.load %arg8[%50, %c0_24, %c0_25] : memref<2x2x16xf32, #tpu.memory_space<vmem>>, vector<1x2x16xf32>
    %52 = vector.shape_cast %51 : vector<1x2x16xf32> to vector<2x16xf32>
    %53 = arith.index_cast %c0_i32 : i32 to index
    %c0_26 = arith.constant 0 : index
    %c0_27 = arith.constant 0 : index
    %54 = vector.load %arg10[%53, %c0_26, %c0_27] : memref<2x2x16xf32, #tpu.memory_space<vmem>>, vector<1x2x16xf32>
    %55 = vector.shape_cast %54 : vector<1x2x16xf32> to vector<2x16xf32>
    %56 = arith.index_cast %c0_i32 : i32 to index
    %c0_28 = arith.constant 0 : index
    %c0_29 = arith.constant 0 : index
    %57 = vector.load %arg12[%56, %c0_28, %c0_29] : memref<2x2x16xf32, #tpu.memory_space<vmem>>, vector<1x2x16xf32>
    %58 = vector.shape_cast %57 : vector<1x2x16xf32> to vector<2x16xf32>
    %cst_30 = arith.constant 0.000000e+00 : f32
    %59 = vector.broadcast %cst_30 : f32 to vector<8x32xf32>
    %60 = vector.extract_strided_slice %40 {offsets = [0, 0], sizes = [32, 16], strides = [1, 1]} : vector<64x16xbf16> to vector<32x16xbf16>
    %cst_31 = arith.constant dense<0.000000e+00> : vector<8x16xf32>
    %61 = tpu.matmul %37, %60, %cst_31 {dimension_numbers = #tpu.dot_dimension_numbers<[1], [0], [0], [1], [0, 0, 1, 1], [], []>} : vector<8x32xbf16>, vector<32x16xbf16>, vector<8x16xf32> -> vector<8x16xf32>
    %62 = vector.extract_strided_slice %52 {offsets = [0, 0], sizes = [1, 16], strides = [1, 1]} : vector<2x16xf32> to vector<1x16xf32>
    %63 = vector.broadcast %62 : vector<1x16xf32> to vector<8x16xf32>
    %64 = arith.addf %61, %63 : vector<8x16xf32>
    %65 = vector.extract_strided_slice %43 {offsets = [0, 0], sizes = [32, 16], strides = [1, 1]} : vector<64x16xbf16> to vector<32x16xbf16>
    %cst_32 = arith.constant dense<0.000000e+00> : vector<8x16xf32>
    %66 = tpu.matmul %37, %65, %cst_32 {dimension_numbers = #tpu.dot_dimension_numbers<[1], [0], [0], [1], [0, 0, 1, 1], [], []>} : vector<8x32xbf16>, vector<32x16xbf16>, vector<8x16xf32> -> vector<8x16xf32>
    %67 = vector.extract_strided_slice %55 {offsets = [0, 0], sizes = [1, 16], strides = [1, 1]} : vector<2x16xf32> to vector<1x16xf32>
    %68 = vector.broadcast %67 : vector<1x16xf32> to vector<8x16xf32>
    %69 = arith.addf %66, %68 : vector<8x16xf32>
    %70 = vector.extract_strided_slice %46 {offsets = [0, 0], sizes = [32, 16], strides = [1, 1]} : vector<64x16xbf16> to vector<32x16xbf16>
    %cst_33 = arith.constant dense<0.000000e+00> : vector<8x16xf32>
    %71 = tpu.matmul %37, %70, %cst_33 {dimension_numbers = #tpu.dot_dimension_numbers<[1], [0], [0], [1], [0, 0, 1, 1], [], []>} : vector<8x32xbf16>, vector<32x16xbf16>, vector<8x16xf32> -> vector<8x16xf32>
    %72 = vector.extract_strided_slice %58 {offsets = [0, 0], sizes = [1, 16], strides = [1, 1]} : vector<2x16xf32> to vector<1x16xf32>
    %73 = vector.broadcast %72 : vector<1x16xf32> to vector<8x16xf32>
    %74 = arith.addf %71, %73 : vector<8x16xf32>
    %75 = arith.truncf %64 : vector<8x16xf32> to vector<8x16xbf16>
    %76 = arith.truncf %69 : vector<8x16xf32> to vector<8x16xbf16>
    "tpu.trace_start"() <{level = 10 : i32, message = "qd,kd->qk"}> : () -> ()
    %cst_34 = arith.constant dense<0.000000e+00> : vector<8x8xf32>
    %77 = tpu.matmul %75, %76, %cst_34 {dimension_numbers = #tpu.dot_dimension_numbers<[1], [1], [0], [0], [0, 0, 1, 0], [], []>} : vector<8x16xbf16>, vector<8x16xbf16>, vector<8x8xf32> -> vector<8x8xf32>
    "tpu.trace_stop"() : () -> ()
    %cst_35 = arith.constant 2.500000e-01 : f32
    %78 = vector.broadcast %cst_35 : f32 to vector<8x8xf32>
    %79 = arith.mulf %77, %78 : vector<8x8xf32>
    %cst_36 = arith.constant dense<0xFF800000> : vector<8xf32>
    %80 = vector.multi_reduction <maximumf>, %79, %cst_36 [1] : vector<8x8xf32> to vector<8xf32>
    %81 = vector.shape_cast %80 : vector<8xf32> to vector<8x1xf32>
    %82 = vector.broadcast %81 : vector<8x1xf32> to vector<8x8xf32>
    %83 = arith.subf %79, %82 : vector<8x8xf32>
    %84 = math.exp %83 : vector<8x8xf32>
    %cst_37 = arith.constant dense<0.000000e+00> : vector<8xf32>
    %85 = vector.multi_reduction <add>, %84, %cst_37 [1] : vector<8x8xf32> to vector<8xf32>
    %86 = vector.shape_cast %85 : vector<8xf32> to vector<8x1xf32>
    %87 = tpu.reciprocal %86 {approx = true} : vector<8x1xf32> -> vector<8x1xf32>
    %88 = vector.broadcast %87 : vector<8x1xf32> to vector<8x8xf32>
    %89 = arith.mulf %84, %88 : vector<8x8xf32>
    %90 = arith.truncf %89 : vector<8x8xf32> to vector<8x8xbf16>
    %91 = arith.truncf %74 : vector<8x16xf32> to vector<8x16xbf16>
    %cst_38 = arith.constant dense<0.000000e+00> : vector<8x16xf32>
    %92 = tpu.matmul %90, %91, %cst_38 {dimension_numbers = #tpu.dot_dimension_numbers<[1], [0], [0], [1], [0, 0, 1, 1], [], []>} : vector<8x8xbf16>, vector<8x16xbf16>, vector<8x16xf32> -> vector<8x16xf32>
    %93 = arith.truncf %92 : vector<8x16xf32> to vector<8x16xbf16>
    %94 = vector.extract_strided_slice %49 {offsets = [0, 0], sizes = [16, 32], strides = [1, 1]} : vector<32x32xbf16> to vector<16x32xbf16>
    %cst_39 = arith.constant dense<0.000000e+00> : vector<8x32xf32>
    %95 = tpu.matmul %93, %94, %cst_39 {dimension_numbers = #tpu.dot_dimension_numbers<[1], [0], [0], [1], [0, 0, 1, 1], [], []>} : vector<8x16xbf16>, vector<16x32xbf16>, vector<8x32xf32> -> vector<8x32xf32>
    %96 = arith.addf %59, %95 : vector<8x32xf32>
    %97 = vector.extract_strided_slice %40 {offsets = [32, 0], sizes = [32, 16], strides = [1, 1]} : vector<64x16xbf16> to vector<32x16xbf16>
    %cst_40 = arith.constant dense<0.000000e+00> : vector<8x16xf32>
    %98 = tpu.matmul %37, %97, %cst_40 {dimension_numbers = #tpu.dot_dimension_numbers<[1], [0], [0], [1], [0, 0, 1, 1], [], []>} : vector<8x32xbf16>, vector<32x16xbf16>, vector<8x16xf32> -> vector<8x16xf32>
    %99 = vector.extract_strided_slice %52 {offsets = [1, 0], sizes = [1, 16], strides = [1, 1]} : vector<2x16xf32> to vector<1x16xf32>
    %100 = vector.broadcast %99 : vector<1x16xf32> to vector<8x16xf32>
    %101 = arith.addf %98, %100 : vector<8x16xf32>
    %102 = vector.extract_strided_slice %43 {offsets = [32, 0], sizes = [32, 16], strides = [1, 1]} : vector<64x16xbf16> to vector<32x16xbf16>
    %cst_41 = arith.constant dense<0.000000e+00> : vector<8x16xf32>
    %103 = tpu.matmul %37, %102, %cst_41 {dimension_numbers = #tpu.dot_dimension_numbers<[1], [0], [0], [1], [0, 0, 1, 1], [], []>} : vector<8x32xbf16>, vector<32x16xbf16>, vector<8x16xf32> -> vector<8x16xf32>
    %104 = vector.extract_strided_slice %55 {offsets = [1, 0], sizes = [1, 16], strides = [1, 1]} : vector<2x16xf32> to vector<1x16xf32>
    %105 = vector.broadcast %104 : vector<1x16xf32> to vector<8x16xf32>
    %106 = arith.addf %103, %105 : vector<8x16xf32>
    %107 = vector.extract_strided_slice %46 {offsets = [32, 0], sizes = [32, 16], strides = [1, 1]} : vector<64x16xbf16> to vector<32x16xbf16>
    %cst_42 = arith.constant dense<0.000000e+00> : vector<8x16xf32>
    %108 = tpu.matmul %37, %107, %cst_42 {dimension_numbers = #tpu.dot_dimension_numbers<[1], [0], [0], [1], [0, 0, 1, 1], [], []>} : vector<8x32xbf16>, vector<32x16xbf16>, vector<8x16xf32> -> vector<8x16xf32>
    %109 = vector.extract_strided_slice %58 {offsets = [1, 0], sizes = [1, 16], strides = [1, 1]} : vector<2x16xf32> to vector<1x16xf32>
    %110 = vector.broadcast %109 : vector<1x16xf32> to vector<8x16xf32>
    %111 = arith.addf %108, %110 : vector<8x16xf32>
    %112 = arith.truncf %101 : vector<8x16xf32> to vector<8x16xbf16>
    %113 = arith.truncf %106 : vector<8x16xf32> to vector<8x16xbf16>
    "tpu.trace_start"() <{level = 10 : i32, message = "qd,kd->qk"}> : () -> ()
    %cst_43 = arith.constant dense<0.000000e+00> : vector<8x8xf32>
    %114 = tpu.matmul %112, %113, %cst_43 {dimension_numbers = #tpu.dot_dimension_numbers<[1], [1], [0], [0], [0, 0, 1, 0], [], []>} : vector<8x16xbf16>, vector<8x16xbf16>, vector<8x8xf32> -> vector<8x8xf32>
    "tpu.trace_stop"() : () -> ()
    %cst_44 = arith.constant 2.500000e-01 : f32
    %115 = vector.broadcast %cst_44 : f32 to vector<8x8xf32>
    %116 = arith.mulf %114, %115 : vector<8x8xf32>
    %cst_45 = arith.constant dense<0xFF800000> : vector<8xf32>
    %117 = vector.multi_reduction <maximumf>, %116, %cst_45 [1] : vector<8x8xf32> to vector<8xf32>
    %118 = vector.shape_cast %117 : vector<8xf32> to vector<8x1xf32>
    %119 = vector.broadcast %118 : vector<8x1xf32> to vector<8x8xf32>
    %120 = arith.subf %116, %119 : vector<8x8xf32>
    %121 = math.exp %120 : vector<8x8xf32>
    %cst_46 = arith.constant dense<0.000000e+00> : vector<8xf32>
    %122 = vector.multi_reduction <add>, %121, %cst_46 [1] : vector<8x8xf32> to vector<8xf32>
    %123 = vector.shape_cast %122 : vector<8xf32> to vector<8x1xf32>
    %124 = tpu.reciprocal %123 {approx = true} : vector<8x1xf32> -> vector<8x1xf32>
    %125 = vector.broadcast %124 : vector<8x1xf32> to vector<8x8xf32>
    %126 = arith.mulf %121, %125 : vector<8x8xf32>
    %127 = arith.truncf %126 : vector<8x8xf32> to vector<8x8xbf16>
    %128 = arith.truncf %111 : vector<8x16xf32> to vector<8x16xbf16>
    %cst_47 = arith.constant dense<0.000000e+00> : vector<8x16xf32>
    %129 = tpu.matmul %127, %128, %cst_47 {dimension_numbers = #tpu.dot_dimension_numbers<[1], [0], [0], [1], [0, 0, 1, 1], [], []>} : vector<8x8xbf16>, vector<8x16xbf16>, vector<8x16xf32> -> vector<8x16xf32>
    %130 = arith.truncf %129 : vector<8x16xf32> to vector<8x16xbf16>
    %131 = vector.extract_strided_slice %49 {offsets = [16, 0], sizes = [16, 32], strides = [1, 1]} : vector<32x32xbf16> to vector<16x32xbf16>
    %cst_48 = arith.constant dense<0.000000e+00> : vector<8x32xf32>
    %132 = tpu.matmul %130, %131, %cst_48 {dimension_numbers = #tpu.dot_dimension_numbers<[1], [0], [0], [1], [0, 0, 1, 1], [], []>} : vector<8x16xbf16>, vector<16x32xbf16>, vector<8x32xf32> -> vector<8x32xf32>
    %133 = arith.addf %96, %132 : vector<8x32xf32>
    %134 = arith.index_cast %c0_i32 : i32 to index
    %c0_49 = arith.constant 0 : index
    %c0_50 = arith.constant 0 : index
    %135 = vector.load %arg14[%134, %c0_49, %c0_50] : memref<2x1x32xf32, #tpu.memory_space<vmem>>, vector<1x1x32xf32>
    %136 = vector.shape_cast %135 : vector<1x1x32xf32> to vector<1x32xf32>
    %137 = vector.broadcast %136 : vector<1x32xf32> to vector<8x32xf32>
    %138 = arith.addf %133, %137 : vector<8x32xf32>
    %139 = arith.addf %36, %138 : vector<8x32xf32>
    %140 = arith.index_cast %c0_i32 : i32 to index
    %c0_51 = arith.constant 0 : index
    %c0_52 = arith.constant 0 : index
    %141 = vector.load %arg15[%140, %c0_51, %c0_52] : memref<2x1x32xf32, #tpu.memory_space<vmem>>, vector<1x1x32xf32>
    %142 = vector.shape_cast %141 : vector<1x1x32xf32> to vector<1x32xf32>
    %143 = arith.index_cast %c0_i32 : i32 to index
    %c0_53 = arith.constant 0 : index
    %c0_54 = arith.constant 0 : index
    %144 = vector.load %arg16[%143, %c0_53, %c0_54] : memref<2x1x32xf32, #tpu.memory_space<vmem>>, vector<1x1x32xf32>
    %145 = vector.shape_cast %144 : vector<1x1x32xf32> to vector<1x32xf32>
    %cst_55 = arith.constant dense<0.000000e+00> : vector<8xf32>
    %146 = vector.multi_reduction <add>, %139, %cst_55 [1] : vector<8x32xf32> to vector<8xf32>
    %147 = vector.shape_cast %146 : vector<8xf32> to vector<8x1xf32>
    %cst_56 = arith.constant 3.200000e+01 : f32
    %148 = vector.broadcast %cst_56 : f32 to vector<8x1xf32>
    %149 = arith.divf %147, %148 : vector<8x1xf32>
    %150 = vector.broadcast %149 : vector<8x1xf32> to vector<8x32xf32>
    %151 = arith.subf %139, %150 : vector<8x32xf32>
    %152 = arith.mulf %151, %151 : vector<8x32xf32>
    %cst_57 = arith.constant dense<0.000000e+00> : vector<8xf32>
    %153 = vector.multi_reduction <add>, %152, %cst_57 [1] : vector<8x32xf32> to vector<8xf32>
    %154 = vector.shape_cast %153 : vector<8xf32> to vector<8x1xf32>
    %cst_58 = arith.constant 3.200000e+01 : f32
    %155 = vector.broadcast %cst_58 : f32 to vector<8x1xf32>
    %156 = arith.divf %154, %155 : vector<8x1xf32>
    %157 = vector.broadcast %149 : vector<8x1xf32> to vector<8x32xf32>
    %158 = arith.subf %139, %157 : vector<8x32xf32>
    %cst_59 = arith.constant 9.99999996E-13 : f32
    %159 = vector.broadcast %cst_59 : f32 to vector<8x1xf32>
    %160 = arith.addf %156, %159 : vector<8x1xf32>
    %161 = math.rsqrt %160 : vector<8x1xf32>
    %162 = vector.broadcast %161 : vector<8x1xf32> to vector<8x32xf32>
    %163 = arith.mulf %158, %162 : vector<8x32xf32>
    %164 = vector.broadcast %142 : vector<1x32xf32> to vector<8x32xf32>
    %165 = arith.mulf %163, %164 : vector<8x32xf32>
    %166 = vector.broadcast %145 : vector<1x32xf32> to vector<8x32xf32>
    %167 = arith.addf %165, %166 : vector<8x32xf32>
    %168 = arith.truncf %167 : vector<8x32xf32> to vector<8x32xbf16>
    %169 = arith.index_cast %c0_i32 : i32 to index
    %c0_60 = arith.constant 0 : index
    %c0_61 = arith.constant 0 : index
    %170 = vector.load %arg17[%169, %c0_60, %c0_61] : memref<2x32x64xbf16, #tpu.memory_space<vmem>>, vector<1x32x64xbf16>
    %171 = vector.shape_cast %170 : vector<1x32x64xbf16> to vector<32x64xbf16>
    %cst_62 = arith.constant dense<0.000000e+00> : vector<8x64xf32>
    %172 = tpu.matmul %168, %171, %cst_62 {dimension_numbers = #tpu.dot_dimension_numbers<[1], [0], [0], [1], [0, 0, 1, 1], [], []>} : vector<8x32xbf16>, vector<32x64xbf16>, vector<8x64xf32> -> vector<8x64xf32>
    %173 = arith.index_cast %c0_i32 : i32 to index
    %c0_63 = arith.constant 0 : index
    %c0_64 = arith.constant 0 : index
    %174 = vector.load %arg18[%173, %c0_63, %c0_64] : memref<2x1x64xf32, #tpu.memory_space<vmem>>, vector<1x1x64xf32>
    %175 = vector.shape_cast %174 : vector<1x1x64xf32> to vector<1x64xf32>
    %176 = vector.broadcast %175 : vector<1x64xf32> to vector<8x64xf32>
    %177 = arith.addf %172, %176 : vector<8x64xf32>
    %cst_65 = arith.constant 5.000000e-01 : f32
    %178 = vector.broadcast %cst_65 : f32 to vector<8x64xf32>
    %179 = arith.mulf %178, %177 : vector<8x64xf32>
    %cst_66 = arith.constant 4.471500e-02 : f32
    %180 = vector.broadcast %cst_66 : f32 to vector<8x64xf32>
    %181 = arith.mulf %180, %177 : vector<8x64xf32>
    %182 = arith.mulf %181, %177 : vector<8x64xf32>
    %183 = arith.mulf %182, %177 : vector<8x64xf32>
    %184 = arith.addf %177, %183 : vector<8x64xf32>
    %cst_67 = arith.constant 0.797884583 : f32
    %185 = vector.broadcast %cst_67 : f32 to vector<8x64xf32>
    %186 = arith.mulf %185, %184 : vector<8x64xf32>
    %187 = math.tanh %186 : vector<8x64xf32>
    %cst_68 = arith.constant 1.000000e+00 : f32
    %188 = vector.broadcast %cst_68 : f32 to vector<8x64xf32>
    %189 = arith.addf %188, %187 : vector<8x64xf32>
    %190 = arith.mulf %179, %189 : vector<8x64xf32>
    %191 = arith.truncf %190 : vector<8x64xf32> to vector<8x64xbf16>
    %192 = arith.index_cast %c0_i32 : i32 to index
    %c0_69 = arith.constant 0 : index
    %c0_70 = arith.constant 0 : index
    %193 = vector.load %arg19[%192, %c0_69, %c0_70] : memref<2x64x32xbf16, #tpu.memory_space<vmem>>, vector<1x64x32xbf16>
    %194 = vector.shape_cast %193 : vector<1x64x32xbf16> to vector<64x32xbf16>
    %cst_71 = arith.constant dense<0.000000e+00> : vector<8x32xf32>
    %195 = tpu.matmul %191, %194, %cst_71 {dimension_numbers = #tpu.dot_dimension_numbers<[1], [0], [0], [1], [0, 0, 1, 1], [], []>} : vector<8x64xbf16>, vector<64x32xbf16>, vector<8x32xf32> -> vector<8x32xf32>
    %196 = arith.index_cast %c0_i32 : i32 to index
    %c0_72 = arith.constant 0 : index
    %c0_73 = arith.constant 0 : index
    %197 = vector.load %arg20[%196, %c0_72, %c0_73] : memref<2x1x32xf32, #tpu.memory_space<vmem>>, vector<1x1x32xf32>
    %198 = vector.shape_cast %197 : vector<1x1x32xf32> to vector<1x32xf32>
    %199 = vector.broadcast %198 : vector<1x32xf32> to vector<8x32xf32>
    %200 = arith.addf %195, %199 : vector<8x32xf32>
    %201 = arith.addf %167, %200 : vector<8x32xf32>
    %202 = arith.index_cast %c0_i32 : i32 to index
    %c0_74 = arith.constant 0 : index
    %c0_75 = arith.constant 0 : index
    %203 = vector.load %arg21[%202, %c0_74, %c0_75] : memref<2x1x32xf32, #tpu.memory_space<vmem>>, vector<1x1x32xf32>
    %204 = vector.shape_cast %203 : vector<1x1x32xf32> to vector<1x32xf32>
    %205 = arith.index_cast %c0_i32 : i32 to index
    %c0_76 = arith.constant 0 : index
    %c0_77 = arith.constant 0 : index
    %206 = vector.load %arg22[%205, %c0_76, %c0_77] : memref<2x1x32xf32, #tpu.memory_space<vmem>>, vector<1x1x32xf32>
    %207 = vector.shape_cast %206 : vector<1x1x32xf32> to vector<1x32xf32>
    %cst_78 = arith.constant dense<0.000000e+00> : vector<8xf32>
    %208 = vector.multi_reduction <add>, %201, %cst_78 [1] : vector<8x32xf32> to vector<8xf32>
    %209 = vector.shape_cast %208 : vector<8xf32> to vector<8x1xf32>
    %cst_79 = arith.constant 3.200000e+01 : f32
    %210 = vector.broadcast %cst_79 : f32 to vector<8x1xf32>
    %211 = arith.divf %209, %210 : vector<8x1xf32>
    %212 = vector.broadcast %211 : vector<8x1xf32> to vector<8x32xf32>
    %213 = arith.subf %201, %212 : vector<8x32xf32>
    %214 = arith.mulf %213, %213 : vector<8x32xf32>
    %cst_80 = arith.constant dense<0.000000e+00> : vector<8xf32>
    %215 = vector.multi_reduction <add>, %214, %cst_80 [1] : vector<8x32xf32> to vector<8xf32>
    %216 = vector.shape_cast %215 : vector<8xf32> to vector<8x1xf32>
    %cst_81 = arith.constant 3.200000e+01 : f32
    %217 = vector.broadcast %cst_81 : f32 to vector<8x1xf32>
    %218 = arith.divf %216, %217 : vector<8x1xf32>
    %219 = vector.broadcast %211 : vector<8x1xf32> to vector<8x32xf32>
    %220 = arith.subf %201, %219 : vector<8x32xf32>
    %cst_82 = arith.constant 9.99999996E-13 : f32
    %221 = vector.broadcast %cst_82 : f32 to vector<8x1xf32>
    %222 = arith.addf %218, %221 : vector<8x1xf32>
    %223 = math.rsqrt %222 : vector<8x1xf32>
    %224 = vector.broadcast %223 : vector<8x1xf32> to vector<8x32xf32>
    %225 = arith.mulf %220, %224 : vector<8x32xf32>
    %226 = vector.broadcast %204 : vector<1x32xf32> to vector<8x32xf32>
    %227 = arith.mulf %225, %226 : vector<8x32xf32>
    %228 = vector.broadcast %207 : vector<1x32xf32> to vector<8x32xf32>
    %229 = arith.addf %227, %228 : vector<8x32xf32>
    %c1_i32 = arith.constant 1 : i32
    %230 = arith.truncf %229 : vector<8x32xf32> to vector<8x32xbf16>
    %231 = arith.index_cast %c1_i32 : i32 to index
    %c0_83 = arith.constant 0 : index
    %c0_84 = arith.constant 0 : index
    %232 = vector.load %arg7[%231, %c0_83, %c0_84] : memref<2x64x16xbf16, #tpu.memory_space<vmem>>, vector<1x64x16xbf16>
    %233 = vector.shape_cast %232 : vector<1x64x16xbf16> to vector<64x16xbf16>
    %234 = arith.index_cast %c1_i32 : i32 to index
    %c0_85 = arith.constant 0 : index
    %c0_86 = arith.constant 0 : index
    %235 = vector.load %arg9[%234, %c0_85, %c0_86] : memref<2x64x16xbf16, #tpu.memory_space<vmem>>, vector<1x64x16xbf16>
    %236 = vector.shape_cast %235 : vector<1x64x16xbf16> to vector<64x16xbf16>
    %237 = arith.index_cast %c1_i32 : i32 to index
    %c0_87 = arith.constant 0 : index
    %c0_88 = arith.constant 0 : index
    %238 = vector.load %arg11[%237, %c0_87, %c0_88] : memref<2x64x16xbf16, #tpu.memory_space<vmem>>, vector<1x64x16xbf16>
    %239 = vector.shape_cast %238 : vector<1x64x16xbf16> to vector<64x16xbf16>
    %240 = arith.index_cast %c1_i32 : i32 to index
    %c0_89 = arith.constant 0 : index
    %c0_90 = arith.constant 0 : index
    %241 = vector.load %arg13[%240, %c0_89, %c0_90] : memref<2x32x32xbf16, #tpu.memory_space<vmem>>, vector<1x32x32xbf16>
    %242 = vector.shape_cast %241 : vector<1x32x32xbf16> to vector<32x32xbf16>
    %243 = arith.index_cast %c1_i32 : i32 to index
    %c0_91 = arith.constant 0 : index
    %c0_92 = arith.constant 0 : index
    %244 = vector.load %arg8[%243, %c0_91, %c0_92] : memref<2x2x16xf32, #tpu.memory_space<vmem>>, vector<1x2x16xf32>
    %245 = vector.shape_cast %244 : vector<1x2x16xf32> to vector<2x16xf32>
    %246 = arith.index_cast %c1_i32 : i32 to index
    %c0_93 = arith.constant 0 : index
    %c0_94 = arith.constant 0 : index
    %247 = vector.load %arg10[%246, %c0_93, %c0_94] : memref<2x2x16xf32, #tpu.memory_space<vmem>>, vector<1x2x16xf32>
    %248 = vector.shape_cast %247 : vector<1x2x16xf32> to vector<2x16xf32>
    %249 = arith.index_cast %c1_i32 : i32 to index
    %c0_95 = arith.constant 0 : index
    %c0_96 = arith.constant 0 : index
    %250 = vector.load %arg12[%249, %c0_95, %c0_96] : memref<2x2x16xf32, #tpu.memory_space<vmem>>, vector<1x2x16xf32>
    %251 = vector.shape_cast %250 : vector<1x2x16xf32> to vector<2x16xf32>
    %cst_97 = arith.constant 0.000000e+00 : f32
    %252 = vector.broadcast %cst_97 : f32 to vector<8x32xf32>
    %253 = vector.extract_strided_slice %233 {offsets = [0, 0], sizes = [32, 16], strides = [1, 1]} : vector<64x16xbf16> to vector<32x16xbf16>
    %cst_98 = arith.constant dense<0.000000e+00> : vector<8x16xf32>
    %254 = tpu.matmul %230, %253, %cst_98 {dimension_numbers = #tpu.dot_dimension_numbers<[1], [0], [0], [1], [0, 0, 1, 1], [], []>} : vector<8x32xbf16>, vector<32x16xbf16>, vector<8x16xf32> -> vector<8x16xf32>
    %255 = vector.extract_strided_slice %245 {offsets = [0, 0], sizes = [1, 16], strides = [1, 1]} : vector<2x16xf32> to vector<1x16xf32>
    %256 = vector.broadcast %255 : vector<1x16xf32> to vector<8x16xf32>
    %257 = arith.addf %254, %256 : vector<8x16xf32>
    %258 = vector.extract_strided_slice %236 {offsets = [0, 0], sizes = [32, 16], strides = [1, 1]} : vector<64x16xbf16> to vector<32x16xbf16>
    %cst_99 = arith.constant dense<0.000000e+00> : vector<8x16xf32>
    %259 = tpu.matmul %230, %258, %cst_99 {dimension_numbers = #tpu.dot_dimension_numbers<[1], [0], [0], [1], [0, 0, 1, 1], [], []>} : vector<8x32xbf16>, vector<32x16xbf16>, vector<8x16xf32> -> vector<8x16xf32>
    %260 = vector.extract_strided_slice %248 {offsets = [0, 0], sizes = [1, 16], strides = [1, 1]} : vector<2x16xf32> to vector<1x16xf32>
    %261 = vector.broadcast %260 : vector<1x16xf32> to vector<8x16xf32>
    %262 = arith.addf %259, %261 : vector<8x16xf32>
    %263 = vector.extract_strided_slice %239 {offsets = [0, 0], sizes = [32, 16], strides = [1, 1]} : vector<64x16xbf16> to vector<32x16xbf16>
    %cst_100 = arith.constant dense<0.000000e+00> : vector<8x16xf32>
    %264 = tpu.matmul %230, %263, %cst_100 {dimension_numbers = #tpu.dot_dimension_numbers<[1], [0], [0], [1], [0, 0, 1, 1], [], []>} : vector<8x32xbf16>, vector<32x16xbf16>, vector<8x16xf32> -> vector<8x16xf32>
    %265 = vector.extract_strided_slice %251 {offsets = [0, 0], sizes = [1, 16], strides = [1, 1]} : vector<2x16xf32> to vector<1x16xf32>
    %266 = vector.broadcast %265 : vector<1x16xf32> to vector<8x16xf32>
    %267 = arith.addf %264, %266 : vector<8x16xf32>
    %268 = arith.truncf %257 : vector<8x16xf32> to vector<8x16xbf16>
    %269 = arith.truncf %262 : vector<8x16xf32> to vector<8x16xbf16>
    "tpu.trace_start"() <{level = 10 : i32, message = "qd,kd->qk"}> : () -> ()
    %cst_101 = arith.constant dense<0.000000e+00> : vector<8x8xf32>
    %270 = tpu.matmul %268, %269, %cst_101 {dimension_numbers = #tpu.dot_dimension_numbers<[1], [1], [0], [0], [0, 0, 1, 0], [], []>} : vector<8x16xbf16>, vector<8x16xbf16>, vector<8x8xf32> -> vector<8x8xf32>
    "tpu.trace_stop"() : () -> ()
    %cst_102 = arith.constant 2.500000e-01 : f32
    %271 = vector.broadcast %cst_102 : f32 to vector<8x8xf32>
    %272 = arith.mulf %270, %271 : vector<8x8xf32>
    %cst_103 = arith.constant dense<0xFF800000> : vector<8xf32>
    %273 = vector.multi_reduction <maximumf>, %272, %cst_103 [1] : vector<8x8xf32> to vector<8xf32>
    %274 = vector.shape_cast %273 : vector<8xf32> to vector<8x1xf32>
    %275 = vector.broadcast %274 : vector<8x1xf32> to vector<8x8xf32>
    %276 = arith.subf %272, %275 : vector<8x8xf32>
    %277 = math.exp %276 : vector<8x8xf32>
    %cst_104 = arith.constant dense<0.000000e+00> : vector<8xf32>
    %278 = vector.multi_reduction <add>, %277, %cst_104 [1] : vector<8x8xf32> to vector<8xf32>
    %279 = vector.shape_cast %278 : vector<8xf32> to vector<8x1xf32>
    %280 = tpu.reciprocal %279 {approx = true} : vector<8x1xf32> -> vector<8x1xf32>
    %281 = vector.broadcast %280 : vector<8x1xf32> to vector<8x8xf32>
    %282 = arith.mulf %277, %281 : vector<8x8xf32>
    %283 = arith.truncf %282 : vector<8x8xf32> to vector<8x8xbf16>
    %284 = arith.truncf %267 : vector<8x16xf32> to vector<8x16xbf16>
    %cst_105 = arith.constant dense<0.000000e+00> : vector<8x16xf32>
    %285 = tpu.matmul %283, %284, %cst_105 {dimension_numbers = #tpu.dot_dimension_numbers<[1], [0], [0], [1], [0, 0, 1, 1], [], []>} : vector<8x8xbf16>, vector<8x16xbf16>, vector<8x16xf32> -> vector<8x16xf32>
    %286 = arith.truncf %285 : vector<8x16xf32> to vector<8x16xbf16>
    %287 = vector.extract_strided_slice %242 {offsets = [0, 0], sizes = [16, 32], strides = [1, 1]} : vector<32x32xbf16> to vector<16x32xbf16>
    %cst_106 = arith.constant dense<0.000000e+00> : vector<8x32xf32>
    %288 = tpu.matmul %286, %287, %cst_106 {dimension_numbers = #tpu.dot_dimension_numbers<[1], [0], [0], [1], [0, 0, 1, 1], [], []>} : vector<8x16xbf16>, vector<16x32xbf16>, vector<8x32xf32> -> vector<8x32xf32>
    %289 = arith.addf %252, %288 : vector<8x32xf32>
    %290 = vector.extract_strided_slice %233 {offsets = [32, 0], sizes = [32, 16], strides = [1, 1]} : vector<64x16xbf16> to vector<32x16xbf16>
    %cst_107 = arith.constant dense<0.000000e+00> : vector<8x16xf32>
    %291 = tpu.matmul %230, %290, %cst_107 {dimension_numbers = #tpu.dot_dimension_numbers<[1], [0], [0], [1], [0, 0, 1, 1], [], []>} : vector<8x32xbf16>, vector<32x16xbf16>, vector<8x16xf32> -> vector<8x16xf32>
    %292 = vector.extract_strided_slice %245 {offsets = [1, 0], sizes = [1, 16], strides = [1, 1]} : vector<2x16xf32> to vector<1x16xf32>
    %293 = vector.broadcast %292 : vector<1x16xf32> to vector<8x16xf32>
    %294 = arith.addf %291, %293 : vector<8x16xf32>
    %295 = vector.extract_strided_slice %236 {offsets = [32, 0], sizes = [32, 16], strides = [1, 1]} : vector<64x16xbf16> to vector<32x16xbf16>
    %cst_108 = arith.constant dense<0.000000e+00> : vector<8x16xf32>
    %296 = tpu.matmul %230, %295, %cst_108 {dimension_numbers = #tpu.dot_dimension_numbers<[1], [0], [0], [1], [0, 0, 1, 1], [], []>} : vector<8x32xbf16>, vector<32x16xbf16>, vector<8x16xf32> -> vector<8x16xf32>
    %297 = vector.extract_strided_slice %248 {offsets = [1, 0], sizes = [1, 16], strides = [1, 1]} : vector<2x16xf32> to vector<1x16xf32>
    %298 = vector.broadcast %297 : vector<1x16xf32> to vector<8x16xf32>
    %299 = arith.addf %296, %298 : vector<8x16xf32>
    %300 = vector.extract_strided_slice %239 {offsets = [32, 0], sizes = [32, 16], strides = [1, 1]} : vector<64x16xbf16> to vector<32x16xbf16>
    %cst_109 = arith.constant dense<0.000000e+00> : vector<8x16xf32>
    %301 = tpu.matmul %230, %300, %cst_109 {dimension_numbers = #tpu.dot_dimension_numbers<[1], [0], [0], [1], [0, 0, 1, 1], [], []>} : vector<8x32xbf16>, vector<32x16xbf16>, vector<8x16xf32> -> vector<8x16xf32>
    %302 = vector.extract_strided_slice %251 {offsets = [1, 0], sizes = [1, 16], strides = [1, 1]} : vector<2x16xf32> to vector<1x16xf32>
    %303 = vector.broadcast %302 : vector<1x16xf32> to vector<8x16xf32>
    %304 = arith.addf %301, %303 : vector<8x16xf32>
    %305 = arith.truncf %294 : vector<8x16xf32> to vector<8x16xbf16>
    %306 = arith.truncf %299 : vector<8x16xf32> to vector<8x16xbf16>
    "tpu.trace_start"() <{level = 10 : i32, message = "qd,kd->qk"}> : () -> ()
    %cst_110 = arith.constant dense<0.000000e+00> : vector<8x8xf32>
    %307 = tpu.matmul %305, %306, %cst_110 {dimension_numbers = #tpu.dot_dimension_numbers<[1], [1], [0], [0], [0, 0, 1, 0], [], []>} : vector<8x16xbf16>, vector<8x16xbf16>, vector<8x8xf32> -> vector<8x8xf32>
    "tpu.trace_stop"() : () -> ()
    %cst_111 = arith.constant 2.500000e-01 : f32
    %308 = vector.broadcast %cst_111 : f32 to vector<8x8xf32>
    %309 = arith.mulf %307, %308 : vector<8x8xf32>
    %cst_112 = arith.constant dense<0xFF800000> : vector<8xf32>
    %310 = vector.multi_reduction <maximumf>, %309, %cst_112 [1] : vector<8x8xf32> to vector<8xf32>
    %311 = vector.shape_cast %310 : vector<8xf32> to vector<8x1xf32>
    %312 = vector.broadcast %311 : vector<8x1xf32> to vector<8x8xf32>
    %313 = arith.subf %309, %312 : vector<8x8xf32>
    %314 = math.exp %313 : vector<8x8xf32>
    %cst_113 = arith.constant dense<0.000000e+00> : vector<8xf32>
    %315 = vector.multi_reduction <add>, %314, %cst_113 [1] : vector<8x8xf32> to vector<8xf32>
    %316 = vector.shape_cast %315 : vector<8xf32> to vector<8x1xf32>
    %317 = tpu.reciprocal %316 {approx = true} : vector<8x1xf32> -> vector<8x1xf32>
    %318 = vector.broadcast %317 : vector<8x1xf32> to vector<8x8xf32>
    %319 = arith.mulf %314, %318 : vector<8x8xf32>
    %320 = arith.truncf %319 : vector<8x8xf32> to vector<8x8xbf16>
    %321 = arith.truncf %304 : vector<8x16xf32> to vector<8x16xbf16>
    %cst_114 = arith.constant dense<0.000000e+00> : vector<8x16xf32>
    %322 = tpu.matmul %320, %321, %cst_114 {dimension_numbers = #tpu.dot_dimension_numbers<[1], [0], [0], [1], [0, 0, 1, 1], [], []>} : vector<8x8xbf16>, vector<8x16xbf16>, vector<8x16xf32> -> vector<8x16xf32>
    %323 = arith.truncf %322 : vector<8x16xf32> to vector<8x16xbf16>
    %324 = vector.extract_strided_slice %242 {offsets = [16, 0], sizes = [16, 32], strides = [1, 1]} : vector<32x32xbf16> to vector<16x32xbf16>
    %cst_115 = arith.constant dense<0.000000e+00> : vector<8x32xf32>
    %325 = tpu.matmul %323, %324, %cst_115 {dimension_numbers = #tpu.dot_dimension_numbers<[1], [0], [0], [1], [0, 0, 1, 1], [], []>} : vector<8x16xbf16>, vector<16x32xbf16>, vector<8x32xf32> -> vector<8x32xf32>
    %326 = arith.addf %289, %325 : vector<8x32xf32>
    %327 = arith.index_cast %c1_i32 : i32 to index
    %c0_116 = arith.constant 0 : index
    %c0_117 = arith.constant 0 : index
    %328 = vector.load %arg14[%327, %c0_116, %c0_117] : memref<2x1x32xf32, #tpu.memory_space<vmem>>, vector<1x1x32xf32>
    %329 = vector.shape_cast %328 : vector<1x1x32xf32> to vector<1x32xf32>
    %330 = vector.broadcast %329 : vector<1x32xf32> to vector<8x32xf32>
    %331 = arith.addf %326, %330 : vector<8x32xf32>
    %332 = arith.addf %229, %331 : vector<8x32xf32>
    %333 = arith.index_cast %c1_i32 : i32 to index
    %c0_118 = arith.constant 0 : index
    %c0_119 = arith.constant 0 : index
    %334 = vector.load %arg15[%333, %c0_118, %c0_119] : memref<2x1x32xf32, #tpu.memory_space<vmem>>, vector<1x1x32xf32>
    %335 = vector.shape_cast %334 : vector<1x1x32xf32> to vector<1x32xf32>
    %336 = arith.index_cast %c1_i32 : i32 to index
    %c0_120 = arith.constant 0 : index
    %c0_121 = arith.constant 0 : index
    %337 = vector.load %arg16[%336, %c0_120, %c0_121] : memref<2x1x32xf32, #tpu.memory_space<vmem>>, vector<1x1x32xf32>
    %338 = vector.shape_cast %337 : vector<1x1x32xf32> to vector<1x32xf32>
    %cst_122 = arith.constant dense<0.000000e+00> : vector<8xf32>
    %339 = vector.multi_reduction <add>, %332, %cst_122 [1] : vector<8x32xf32> to vector<8xf32>
    %340 = vector.shape_cast %339 : vector<8xf32> to vector<8x1xf32>
    %cst_123 = arith.constant 3.200000e+01 : f32
    %341 = vector.broadcast %cst_123 : f32 to vector<8x1xf32>
    %342 = arith.divf %340, %341 : vector<8x1xf32>
    %343 = vector.broadcast %342 : vector<8x1xf32> to vector<8x32xf32>
    %344 = arith.subf %332, %343 : vector<8x32xf32>
    %345 = arith.mulf %344, %344 : vector<8x32xf32>
    %cst_124 = arith.constant dense<0.000000e+00> : vector<8xf32>
    %346 = vector.multi_reduction <add>, %345, %cst_124 [1] : vector<8x32xf32> to vector<8xf32>
    %347 = vector.shape_cast %346 : vector<8xf32> to vector<8x1xf32>
    %cst_125 = arith.constant 3.200000e+01 : f32
    %348 = vector.broadcast %cst_125 : f32 to vector<8x1xf32>
    %349 = arith.divf %347, %348 : vector<8x1xf32>
    %350 = vector.broadcast %342 : vector<8x1xf32> to vector<8x32xf32>
    %351 = arith.subf %332, %350 : vector<8x32xf32>
    %cst_126 = arith.constant 9.99999996E-13 : f32
    %352 = vector.broadcast %cst_126 : f32 to vector<8x1xf32>
    %353 = arith.addf %349, %352 : vector<8x1xf32>
    %354 = math.rsqrt %353 : vector<8x1xf32>
    %355 = vector.broadcast %354 : vector<8x1xf32> to vector<8x32xf32>
    %356 = arith.mulf %351, %355 : vector<8x32xf32>
    %357 = vector.broadcast %335 : vector<1x32xf32> to vector<8x32xf32>
    %358 = arith.mulf %356, %357 : vector<8x32xf32>
    %359 = vector.broadcast %338 : vector<1x32xf32> to vector<8x32xf32>
    %360 = arith.addf %358, %359 : vector<8x32xf32>
    %361 = arith.truncf %360 : vector<8x32xf32> to vector<8x32xbf16>
    %362 = arith.index_cast %c1_i32 : i32 to index
    %c0_127 = arith.constant 0 : index
    %c0_128 = arith.constant 0 : index
    %363 = vector.load %arg17[%362, %c0_127, %c0_128] : memref<2x32x64xbf16, #tpu.memory_space<vmem>>, vector<1x32x64xbf16>
    %364 = vector.shape_cast %363 : vector<1x32x64xbf16> to vector<32x64xbf16>
    %cst_129 = arith.constant dense<0.000000e+00> : vector<8x64xf32>
    %365 = tpu.matmul %361, %364, %cst_129 {dimension_numbers = #tpu.dot_dimension_numbers<[1], [0], [0], [1], [0, 0, 1, 1], [], []>} : vector<8x32xbf16>, vector<32x64xbf16>, vector<8x64xf32> -> vector<8x64xf32>
    %366 = arith.index_cast %c1_i32 : i32 to index
    %c0_130 = arith.constant 0 : index
    %c0_131 = arith.constant 0 : index
    %367 = vector.load %arg18[%366, %c0_130, %c0_131] : memref<2x1x64xf32, #tpu.memory_space<vmem>>, vector<1x1x64xf32>
    %368 = vector.shape_cast %367 : vector<1x1x64xf32> to vector<1x64xf32>
    %369 = vector.broadcast %368 : vector<1x64xf32> to vector<8x64xf32>
    %370 = arith.addf %365, %369 : vector<8x64xf32>
    %cst_132 = arith.constant 5.000000e-01 : f32
    %371 = vector.broadcast %cst_132 : f32 to vector<8x64xf32>
    %372 = arith.mulf %371, %370 : vector<8x64xf32>
    %cst_133 = arith.constant 4.471500e-02 : f32
    %373 = vector.broadcast %cst_133 : f32 to vector<8x64xf32>
    %374 = arith.mulf %373, %370 : vector<8x64xf32>
    %375 = arith.mulf %374, %370 : vector<8x64xf32>
    %376 = arith.mulf %375, %370 : vector<8x64xf32>
    %377 = arith.addf %370, %376 : vector<8x64xf32>
    %cst_134 = arith.constant 0.797884583 : f32
    %378 = vector.broadcast %cst_134 : f32 to vector<8x64xf32>
    %379 = arith.mulf %378, %377 : vector<8x64xf32>
    %380 = math.tanh %379 : vector<8x64xf32>
    %cst_135 = arith.constant 1.000000e+00 : f32
    %381 = vector.broadcast %cst_135 : f32 to vector<8x64xf32>
    %382 = arith.addf %381, %380 : vector<8x64xf32>
    %383 = arith.mulf %372, %382 : vector<8x64xf32>
    %384 = arith.truncf %383 : vector<8x64xf32> to vector<8x64xbf16>
    %385 = arith.index_cast %c1_i32 : i32 to index
    %c0_136 = arith.constant 0 : index
    %c0_137 = arith.constant 0 : index
    %386 = vector.load %arg19[%385, %c0_136, %c0_137] : memref<2x64x32xbf16, #tpu.memory_space<vmem>>, vector<1x64x32xbf16>
    %387 = vector.shape_cast %386 : vector<1x64x32xbf16> to vector<64x32xbf16>
    %cst_138 = arith.constant dense<0.000000e+00> : vector<8x32xf32>
    %388 = tpu.matmul %384, %387, %cst_138 {dimension_numbers = #tpu.dot_dimension_numbers<[1], [0], [0], [1], [0, 0, 1, 1], [], []>} : vector<8x64xbf16>, vector<64x32xbf16>, vector<8x32xf32> -> vector<8x32xf32>
    %389 = arith.index_cast %c1_i32 : i32 to index
    %c0_139 = arith.constant 0 : index
    %c0_140 = arith.constant 0 : index
    %390 = vector.load %arg20[%389, %c0_139, %c0_140] : memref<2x1x32xf32, #tpu.memory_space<vmem>>, vector<1x1x32xf32>
    %391 = vector.shape_cast %390 : vector<1x1x32xf32> to vector<1x32xf32>
    %392 = vector.broadcast %391 : vector<1x32xf32> to vector<8x32xf32>
    %393 = arith.addf %388, %392 : vector<8x32xf32>
    %394 = arith.addf %360, %393 : vector<8x32xf32>
    %395 = arith.index_cast %c1_i32 : i32 to index
    %c0_141 = arith.constant 0 : index
    %c0_142 = arith.constant 0 : index
    %396 = vector.load %arg21[%395, %c0_141, %c0_142] : memref<2x1x32xf32, #tpu.memory_space<vmem>>, vector<1x1x32xf32>
    %397 = vector.shape_cast %396 : vector<1x1x32xf32> to vector<1x32xf32>
    %398 = arith.index_cast %c1_i32 : i32 to index
    %c0_143 = arith.constant 0 : index
    %c0_144 = arith.constant 0 : index
    %399 = vector.load %arg22[%398, %c0_143, %c0_144] : memref<2x1x32xf32, #tpu.memory_space<vmem>>, vector<1x1x32xf32>
    %400 = vector.shape_cast %399 : vector<1x1x32xf32> to vector<1x32xf32>
    %cst_145 = arith.constant dense<0.000000e+00> : vector<8xf32>
    %401 = vector.multi_reduction <add>, %394, %cst_145 [1] : vector<8x32xf32> to vector<8xf32>
    %402 = vector.shape_cast %401 : vector<8xf32> to vector<8x1xf32>
    %cst_146 = arith.constant 3.200000e+01 : f32
    %403 = vector.broadcast %cst_146 : f32 to vector<8x1xf32>
    %404 = arith.divf %402, %403 : vector<8x1xf32>
    %405 = vector.broadcast %404 : vector<8x1xf32> to vector<8x32xf32>
    %406 = arith.subf %394, %405 : vector<8x32xf32>
    %407 = arith.mulf %406, %406 : vector<8x32xf32>
    %cst_147 = arith.constant dense<0.000000e+00> : vector<8xf32>
    %408 = vector.multi_reduction <add>, %407, %cst_147 [1] : vector<8x32xf32> to vector<8xf32>
    %409 = vector.shape_cast %408 : vector<8xf32> to vector<8x1xf32>
    %cst_148 = arith.constant 3.200000e+01 : f32
    %410 = vector.broadcast %cst_148 : f32 to vector<8x1xf32>
    %411 = arith.divf %409, %410 : vector<8x1xf32>
    %412 = vector.broadcast %404 : vector<8x1xf32> to vector<8x32xf32>
    %413 = arith.subf %394, %412 : vector<8x32xf32>
    %cst_149 = arith.constant 9.99999996E-13 : f32
    %414 = vector.broadcast %cst_149 : f32 to vector<8x1xf32>
    %415 = arith.addf %411, %414 : vector<8x1xf32>
    %416 = math.rsqrt %415 : vector<8x1xf32>
    %417 = vector.broadcast %416 : vector<8x1xf32> to vector<8x32xf32>
    %418 = arith.mulf %413, %417 : vector<8x32xf32>
    %419 = vector.broadcast %397 : vector<1x32xf32> to vector<8x32xf32>
    %420 = arith.mulf %418, %419 : vector<8x32xf32>
    %421 = vector.broadcast %400 : vector<1x32xf32> to vector<8x32xf32>
    %422 = arith.addf %420, %421 : vector<8x32xf32>
    %c2_i32 = arith.constant 2 : i32
    %cst_150 = arith.constant dense<0.000000e+00> : vector<32xf32>
    %423 = vector.multi_reduction <add>, %422, %cst_150 [0] : vector<8x32xf32> to vector<32xf32>
    %424 = vector.shape_cast %423 : vector<32xf32> to vector<1x32xf32>
    %cst_151 = arith.constant 8.000000e+00 : f32
    %425 = vector.broadcast %cst_151 : f32 to vector<1x32xf32>
    %426 = arith.divf %424, %425 : vector<1x32xf32>
    %427 = vector.shape_cast %426 : vector<1x32xf32> to vector<1x1x32xf32>
    %c0_152 = arith.constant 0 : index
    %c0_153 = arith.constant 0 : index
    %c0_154 = arith.constant 0 : index
    %428 = vector.load %arg23[%c0_152, %c0_153, %c0_154] : memref<1x1x32xf32, #tpu.memory_space<vmem>>, vector<1x1x32xf32>
    tpu.vector_store %arg23[%c0_152, %c0_153, %c0_154], %427 {strides = array<i32>} : memref<1x1x32xf32, #tpu.memory_space<vmem>>, vector<1x1x32xf32>,
    return
  }
  func.func @transform_0(%arg0: i32) -> (i32, i32) {
    %c0_i32 = arith.constant 0 : i32
    %c0_i32_0 = arith.constant 0 : i32
    return %arg0, %c0_i32 : i32, i32
  }
  func.func @transform_1(%arg0: i32) -> (i32, i32) {
    %c0_i32 = arith.constant 0 : i32
    %c0_i32_0 = arith.constant 0 : i32
    %c0_i32_1 = arith.constant 0 : i32
    return %c0_i32, %c0_i32_0 : i32, i32
  }
  func.func @transform_2(%arg0: i32) -> (i32, i32) {
    %c0_i32 = arith.constant 0 : i32
    %c0_i32_0 = arith.constant 0 : i32
    %c0_i32_1 = arith.constant 0 : i32
    return %c0_i32, %c0_i32_0 : i32, i32
  }
  func.func @transform_3(%arg0: i32) -> (i32, i32) {
    %c0_i32 = arith.constant 0 : i32
    %c0_i32_0 = arith.constant 0 : i32
    %c0_i32_1 = arith.constant 0 : i32
    return %c0_i32, %c0_i32_0 : i32, i32
  }
  func.func @transform_4(%arg0: i32) -> (i32, i32) {
    %c0_i32 = arith.constant 0 : i32
    %c0_i32_0 = arith.constant 0 : i32
    %c0_i32_1 = arith.constant 0 : i32
    return %c0_i32, %c0_i32_0 : i32, i32
  }
  func.func @transform_5(%arg0: i32) -> (i32, i32) {
    %c0_i32 = arith.constant 0 : i32
    %c0_i32_0 = arith.constant 0 : i32
    %c0_i32_1 = arith.constant 0 : i32
    return %c0_i32, %c0_i32_0 : i32, i32
  }
  func.func @transform_6(%arg0: i32) -> (i32, i32, i32) {
    %c0_i32 = arith.constant 0 : i32
    %c0_i32_0 = arith.constant 0 : i32
    %c0_i32_1 = arith.constant 0 : i32
    %c0_i32_2 = arith.constant 0 : i32
    return %c0_i32, %c0_i32_0, %c0_i32_1 : i32, i32, i32
  }
  func.func @transform_7(%arg0: i32) -> (i32, i32, i32) {
    %c0_i32 = arith.constant 0 : i32
    %c0_i32_0 = arith.constant 0 : i32
    %c0_i32_1 = arith.constant 0 : i32
    %c0_i32_2 = arith.constant 0 : i32
    return %c0_i32, %c0_i32_0, %c0_i32_1 : i32, i32, i32
  }
  func.func @transform_8(%arg0: i32) -> (i32, i32, i32) {
    %c0_i32 = arith.constant 0 : i32
    %c0_i32_0 = arith.constant 0 : i32
    %c0_i32_1 = arith.constant 0 : i32
    %c0_i32_2 = arith.constant 0 : i32
    return %c0_i32, %c0_i32_0, %c0_i32_1 : i32, i32, i32
  }
  func.func @transform_9(%arg0: i32) -> (i32, i32, i32) {
    %c0_i32 = arith.constant 0 : i32
    %c0_i32_0 = arith.constant 0 : i32
    %c0_i32_1 = arith.constant 0 : i32
    %c0_i32_2 = arith.constant 0 : i32
    return %c0_i32, %c0_i32_0, %c0_i32_1 : i32, i32, i32
  }
  func.func @transform_10(%arg0: i32) -> (i32, i32, i32) {
    %c0_i32 = arith.constant 0 : i32
    %c0_i32_0 = arith.constant 0 : i32
    %c0_i32_1 = arith.constant 0 : i32
    %c0_i32_2 = arith.constant 0 : i32
    return %c0_i32, %c0_i32_0, %c0_i32_1 : i32, i32, i32
  }
  func.func @transform_11(%arg0: i32) -> (i32, i32, i32) {
    %c0_i32 = arith.constant 0 : i32
    %c0_i32_0 = arith.constant 0 : i32
    %c0_i32_1 = arith.constant 0 : i32
    %c0_i32_2 = arith.constant 0 : i32
    return %c0_i32, %c0_i32_0, %c0_i32_1 : i32, i32, i32
  }
  func.func @transform_12(%arg0: i32) -> (i32, i32, i32) {
    %c0_i32 = arith.constant 0 : i32
    %c0_i32_0 = arith.constant 0 : i32
    %c0_i32_1 = arith.constant 0 : i32
    %c0_i32_2 = arith.constant 0 : i32
    return %c0_i32, %c0_i32_0, %c0_i32_1 : i32, i32, i32
  }
  func.func @transform_13(%arg0: i32) -> (i32, i32, i32) {
    %c0_i32 = arith.constant 0 : i32
    %c0_i32_0 = arith.constant 0 : i32
    %c0_i32_1 = arith.constant 0 : i32
    %c0_i32_2 = arith.constant 0 : i32
    return %c0_i32, %c0_i32_0, %c0_i32_1 : i32, i32, i32
  }
  func.func @transform_14(%arg0: i32) -> (i32, i32, i32) {
    %c0_i32 = arith.constant 0 : i32
    %c0_i32_0 = arith.constant 0 : i32
    %c0_i32_1 = arith.constant 0 : i32
    %c0_i32_2 = arith.constant 0 : i32
    return %c0_i32, %c0_i32_0, %c0_i32_1 : i32, i32, i32
  }
  func.func @transform_15(%arg0: i32) -> (i32, i32, i32) {
    %c0_i32 = arith.constant 0 : i32
    %c0_i32_0 = arith.constant 0 : i32
    %c0_i32_1 = arith.constant 0 : i32
    %c0_i32_2 = arith.constant 0 : i32
    return %c0_i32, %c0_i32_0, %c0_i32_1 : i32, i32, i32
  }
  func.func @transform_16(%arg0: i32) -> (i32, i32, i32) {
    %c0_i32 = arith.constant 0 : i32
    %c0_i32_0 = arith.constant 0 : i32
    %c0_i32_1 = arith.constant 0 : i32
    %c0_i32_2 = arith.constant 0 : i32
    return %c0_i32, %c0_i32_0, %c0_i32_1 : i32, i32, i32
  }
  func.func @transform_17(%arg0: i32) -> (i32, i32, i32) {
    %c0_i32 = arith.constant 0 : i32
    %c0_i32_0 = arith.constant 0 : i32
    %c0_i32_1 = arith.constant 0 : i32
    %c0_i32_2 = arith.constant 0 : i32
    return %c0_i32, %c0_i32_0, %c0_i32_1 : i32, i32, i32
  }
  func.func @transform_18(%arg0: i32) -> (i32, i32, i32) {
    %c0_i32 = arith.constant 0 : i32
    %c0_i32_0 = arith.constant 0 : i32
    %c0_i32_1 = arith.constant 0 : i32
    %c0_i32_2 = arith.constant 0 : i32
    return %c0_i32, %c0_i32_0, %c0_i32_1 : i32, i32, i32
  }
  func.func @transform_19(%arg0: i32) -> (i32, i32, i32) {
    %c0_i32 = arith.constant 0 : i32
    %c0_i32_0 = arith.constant 0 : i32
    %c0_i32_1 = arith.constant 0 : i32
    %c0_i32_2 = arith.constant 0 : i32
    return %c0_i32, %c0_i32_0, %c0_i32_1 : i32, i32, i32
  }
  func.func @transform_20(%arg0: i32) -> (i32, i32, i32) {
    %c0_i32 = arith.constant 0 : i32
    %c0_i32_0 = arith.constant 0 : i32
    %c0_i32_1 = arith.constant 0 : i32
    %c0_i32_2 = arith.constant 0 : i32
    return %c0_i32, %c0_i32_0, %c0_i32_1 : i32, i32, i32
  }
  func.func @transform_21(%arg0: i32) -> (i32, i32, i32) {
    %c0_i32 = arith.constant 0 : i32
    %c0_i32_0 = arith.constant 0 : i32
    %c0_i32_1 = arith.constant 0 : i32
    %c0_i32_2 = arith.constant 0 : i32
    return %c0_i32, %c0_i32_0, %c0_i32_1 : i32, i32, i32
  }
  func.func @transform_22(%arg0: i32) -> (i32, i32, i32) {
    %c0_i32 = arith.constant 0 : i32
    %c0_i32_0 = arith.constant 0 : i32
    %c0_i32_1 = arith.constant 0 : i32
    return %arg0, %c0_i32, %c0_i32_0 : i32, i32, i32
  }
}

</mosaic_0001>

<llo_original>
// kernel: text_embedding_forward.1
$region0: #{text_embedding_forward.1}
  #allocation0 [shape = 'u32[]', space=smem, size = 0x4, offset = 0x4, fixed_abs, tag = 'smem constant byte address 0x4 - core index']
  #allocation1 [shape = 'u32[144,128]{1,0:T(1,128)}', space=vmem, size = 0x12000, scoped, tag = 'internal scratch']
  %s0 = inlined_call_operand.vmem [shape: s32[16,1], index: 0, kind: input, shape index: {}]
  %s1 = inlined_call_operand.vmem [shape: f32[128,32], index: 1, kind: input, shape index: {}]
  %s2 = inlined_call_operand.vmem [shape: f32[8,32], index: 2, kind: input, shape index: {}]
  %s3 = inlined_call_operand.vmem [shape: f32[1,32], index: 3, kind: input, shape index: {}]
  %s4 = inlined_call_operand.vmem [shape: f32[1,32], index: 4, kind: input, shape index: {}]
  %s5 = inlined_call_operand.vmem [shape: f32[1,32], index: 5, kind: input, shape index: {}]
  %s6 = inlined_call_operand.vmem [shape: bf16[2,64,16], index: 6, kind: input, shape index: {}]
  %s7 = inlined_call_operand.vmem [shape: f32[2,2,16], index: 7, kind: input, shape index: {}]
  %s8 = inlined_call_operand.vmem [shape: bf16[2,64,16], index: 8, kind: input, shape index: {}]
  %s9 = inlined_call_operand.vmem [shape: f32[2,2,16], index: 9, kind: input, shape index: {}]
  %s10 = inlined_call_operand.vmem [shape: bf16[2,64,16], index: 10, kind: input, shape index: {}]
  %s11 = inlined_call_operand.vmem [shape: f32[2,2,16], index: 11, kind: input, shape index: {}]
  %s12 = inlined_call_operand.vmem [shape: bf16[2,32,32], index: 12, kind: input, shape index: {}]
  %s13 = inlined_call_operand.vmem [shape: f32[2,1,32], index: 13, kind: input, shape index: {}]
  %s14 = inlined_call_operand.vmem [shape: f32[2,1,32], index: 14, kind: input, shape index: {}]
  %s15 = inlined_call_operand.vmem [shape: f32[2,1,32], index: 15, kind: input, shape index: {}]
  %s16 = inlined_call_operand.vmem [shape: bf16[2,32,64], index: 16, kind: input, shape index: {}]
  %s17 = inlined_call_operand.vmem [shape: f32[2,1,64], index: 17, kind: input, shape index: {}]
  %s18 = inlined_call_operand.vmem [shape: bf16[2,64,32], index: 18, kind: input, shape index: {}]
  %s19 = inlined_call_operand.vmem [shape: f32[2,1,32], index: 19, kind: input, shape index: {}]
  %s20 = inlined_call_operand.vmem [shape: f32[2,1,32], index: 20, kind: input, shape index: {}]
  %s21 = inlined_call_operand.vmem [shape: f32[2,1,32], index: 21, kind: input, shape index: {}]
  %s22 = inlined_call_operand.hbm [shape: f32[2,1,32], index: 22, kind: output, shape index: {}]
  %s23 = sld [smem:[#allocation0]]
  $region121: #{text_embedding_forward.1} parent=0
    _
  %s25 = ssub.s32 1, %s23
  %s26 = scalar_select 0, %s25, %s23
  $region1: #{text_embedding_forward.1} parent=0
    #allocation2 [shape = 'u8[1024]{0}', space=vmem, size = 0x400, scoped, tag = 'output window, operand 0']
    #allocation3 [shape = 's32[2]{0}', space=sflag, size = 0x8, scoped, tag = 'scoped memory for text_embedding_forward.1']
    %27 = vsyncpa [#allocation3], 0
    %s28 = scalar_lea.sflag [#allocation3], 1
    %29 = vsyncpa %s28, 0
    loop: start=0, step=1, limit=4
    $region2: #{text_embedding_forward.1} parent=1 // loop_pre_header
      _
    $region3: #{text_embedding_forward.1} parent=1 // loop_header
      %s31 = sphi 0, %s35
      %p32 = scmp.ge.s32.totalorder %s31, 4
      %s41 = sphi 0, %s43
      %s44 = sphi 0, %s41
      %s45 = sphi 0, %s44
      %s61 = sphi 0, %s45
      %s65 = sphi 0, %s65
      %s67 = sphi 0, %s65
      %s68 = sphi 0, %s67
      %s82 = sphi 0, %s68
      %s86 = sphi 0, %s86
      %s88 = sphi 0, %s86
      %s89 = sphi 0, %s88
      %s103 = sphi 0, %s89
      %s107 = sphi 0, %s107
      %s109 = sphi 0, %s107
      %s110 = sphi 0, %s109
      %s124 = sphi 0, %s110
      %s128 = sphi 0, %s128
      %s130 = sphi 0, %s128
      %s131 = sphi 0, %s130
      %s145 = sphi 0, %s131
      %s149 = sphi 0, %s149
      %s151 = sphi 0, %s149
      %s152 = sphi 0, %s151
      %s166 = sphi 0, %s152
      %s170 = sphi 0, %s170
      %s172 = sphi 0, %s170
      %s173 = sphi 0, %s172
      %s187 = sphi 0, %s173
      %s191 = sphi 0, %s191
      %s193 = sphi 0, %s191
      %s194 = sphi 0, %s193
      %s208 = sphi 0, %s194
      %s212 = sphi 0, %s212
      %s214 = sphi 0, %s212
      %s215 = sphi 0, %s214
      %s229 = sphi 0, %s215
      %s233 = sphi 0, %s233
      %s235 = sphi 0, %s233
      %s236 = sphi 0, %s235
      %s250 = sphi 0, %s236
      %s254 = sphi 0, %s254
      %s256 = sphi 0, %s254
      %s257 = sphi 0, %s256
      %s271 = sphi 0, %s257
      %s275 = sphi 0, %s275
      %s277 = sphi 0, %s275
      %s278 = sphi 0, %s277
      %s292 = sphi 0, %s278
      %s296 = sphi 0, %s296
      %s298 = sphi 0, %s296
      %s299 = sphi 0, %s298
      %s313 = sphi 0, %s299
      %s317 = sphi 0, %s317
      %s319 = sphi 0, %s317
      %s320 = sphi 0, %s319
      %s334 = sphi 0, %s320
      %s338 = sphi 0, %s338
      %s340 = sphi 0, %s338
      %s341 = sphi 0, %s340
      %s355 = sphi 0, %s341
      %s359 = sphi 0, %s359
      %s361 = sphi 0, %s359
      %s362 = sphi 0, %s361
      %s376 = sphi 0, %s362
      %s380 = sphi 0, %s380
      %s382 = sphi 0, %s380
      %s383 = sphi 0, %s382
      %s397 = sphi 0, %s383
      %s401 = sphi 0, %s401
      %s403 = sphi 0, %s401
      %s404 = sphi 0, %s403
      %s418 = sphi 0, %s404
      %s422 = sphi 0, %s422
      %s424 = sphi 0, %s422
      %s425 = sphi 0, %s424
      %s439 = sphi 0, %s425
      %s443 = sphi 0, %s443
      %s445 = sphi 0, %s443
      %s446 = sphi 0, %s445
      %s460 = sphi 0, %s446
      %s464 = sphi 0, %s464
      %s466 = sphi 0, %s464
      %s467 = sphi 0, %s466
      %s481 = sphi 0, %s467
      %s485 = sphi 0, %s485
      %s487 = sphi 0, %s485
      %s488 = sphi 0, %s487
      %s502 = sphi 0, %s488
      %s508 = sphi 0, %s510
      %s511 = sphi 0, %s508
      %s512 = sphi 0, %s511
      %s528 = sphi 0, %s512
    $region4: #{text_embedding_forward.1} parent=1 // loop_header_branch
      %34 = sbr.rel (%p32) target = $region8
    $region5: #{text_embedding_forward.1} parent=1 // loop_body
      %s36 = ssub.s32 %s31, 1
      %s37 = ssub.s32 %s31, 2
      %s38 = sadd.s32 %s31, 1
      %s39 = ssub.s32 %s31, %s38
      %p40 = scmp.eq.s32.totalorder %s39, 0
      %s42 = sadd.s32 %s41, 1
      %s43 = scalar_select %p40, %s41, %s42
      %p46 = pneg %p40
      %p47 = scmp.eq.s32.totalorder %s31, 1
      %p48 = por %p46, %p47
      %p49 = scmp.ne.s32.totalorder %s41, %s44
      %p50 = scmp.eq.s32.totalorder %s31, 0
      %p51 = por %p49, %p50
      %p52 = scmp.ne.s32.totalorder %s41, %s44
      %p53 = scmp.eq.s32.totalorder %s36, 1
      %p54 = por %p52, %p53
      %p55 = scmp.ne.s32.totalorder %s44, %s45
      %p56 = scmp.eq.s32.totalorder %s36, 0
      %p57 = por %p55, %p56
      %p58 = scmp.ne.s32.totalorder %s44, %s45
      %p59 = scmp.eq.s32.totalorder %s37, 1
      %p60 = por %p58, %p59
      %p62 = scmp.ne.s32.totalorder %s45, %s61
      %p63 = scmp.eq.s32.totalorder %s37, 0
      %p64 = por %p62, %p63
      %s66 = sadd.s32 %s65, 1
      %p69 = scmp.eq.s32.totalorder %s31, 1
      %p70 = scmp.ne.s32.totalorder %s65, %s67
      %p71 = scmp.eq.s32.totalorder %s31, 0
      %p72 = por %p70, %p71
      %p73 = scmp.ne.s32.totalorder %s65, %s67
      %p74 = scmp.eq.s32.totalorder %s36, 1
      %p75 = por %p73, %p74
      %p76 = scmp.ne.s32.totalorder %s67, %s68
      %p77 = scmp.eq.s32.totalorder %s36, 0
      %p78 = por %p76, %p77
      %p79 = scmp.ne.s32.totalorder %s67, %s68
      %p80 = scmp.eq.s32.totalorder %s37, 1
      %p81 = por %p79, %p80
      %p83 = scmp.ne.s32.totalorder %s68, %s82
      %p84 = scmp.eq.s32.totalorder %s37, 0
      %p85 = por %p83, %p84
      %s87 = sadd.s32 %s86, 1
      %p90 = scmp.eq.s32.totalorder %s31, 1
      %p91 = scmp.ne.s32.totalorder %s86, %s88
      %p92 = scmp.eq.s32.totalorder %s31, 0
      %p93 = por %p91, %p92
      %p94 = scmp.ne.s32.totalorder %s86, %s88
      %p95 = scmp.eq.s32.totalorder %s36, 1
      %p96 = por %p94, %p95
      %p97 = scmp.ne.s32.totalorder %s88, %s89
      %p98 = scmp.eq.s32.totalorder %s36, 0
      %p99 = por %p97, %p98
      %p100 = scmp.ne.s32.totalorder %s88, %s89
      %p101 = scmp.eq.s32.totalorder %s37, 1
      %p102 = por %p100, %p101
      %p104 = scmp.ne.s32.totalorder %s89, %s103
      %p105 = scmp.eq.s32.totalorder %s37, 0
      %p106 = por %p104, %p105
      %s108 = sadd.s32 %s107, 1
      %p111 = scmp.eq.s32.totalorder %s31, 1
      %p112 = scmp.ne.s32.totalorder %s107, %s109
      %p113 = scmp.eq.s32.totalorder %s31, 0
      %p114 = por %p112, %p113
      %p115 = scmp.ne.s32.totalorder %s107, %s109
      %p116 = scmp.eq.s32.totalorder %s36, 1
      %p117 = por %p115, %p116
      %p118 = scmp.ne.s32.totalorder %s109, %s110
      %p119 = scmp.eq.s32.totalorder %s36, 0
      %p120 = por %p118, %p119
      %p121 = scmp.ne.s32.totalorder %s109, %s110
      %p122 = scmp.eq.s32.totalorder %s37, 1
      %p123 = por %p121, %p122
      %p125 = scmp.ne.s32.totalorder %s110, %s124
      %p126 = scmp.eq.s32.totalorder %s37, 0
      %p127 = por %p125, %p126
      %s129 = sadd.s32 %s128, 1
      %p132 = scmp.eq.s32.totalorder %s31, 1
      %p133 = scmp.ne.s32.totalorder %s128, %s130
      %p134 = scmp.eq.s32.totalorder %s31, 0
      %p135 = por %p133, %p134
      %p136 = scmp.ne.s32.totalorder %s128, %s130
      %p137 = scmp.eq.s32.totalorder %s36, 1
      %p138 = por %p136, %p137
      %p139 = scmp.ne.s32.totalorder %s130, %s131
      %p140 = scmp.eq.s32.totalorder %s36, 0
      %p141 = por %p139, %p140
      %p142 = scmp.ne.s32.totalorder %s130, %s131
      %p143 = scmp.eq.s32.totalorder %s37, 1
      %p144 = por %p142, %p143
      %p146 = scmp.ne.s32.totalorder %s131, %s145
      %p147 = scmp.eq.s32.totalorder %s37, 0
      %p148 = por %p146, %p147
      %s150 = sadd.s32 %s149, 1
      %p153 = scmp.eq.s32.totalorder %s31, 1
      %p154 = scmp.ne.s32.totalorder %s149, %s151
      %p155 = scmp.eq.s32.totalorder %s31, 0
      %p156 = por %p154, %p155
      %p157 = scmp.ne.s32.totalorder %s149, %s151
      %p158 = scmp.eq.s32.totalorder %s36, 1
      %p159 = por %p157, %p158
      %p160 = scmp.ne.s32.totalorder %s151, %s152
      %p161 = scmp.eq.s32.totalorder %s36, 0
      %p162 = por %p160, %p161
      %p163 = scmp.ne.s32.totalorder %s151, %s152
      %p164 = scmp.eq.s32.totalorder %s37, 1
      %p165 = por %p163, %p164
      %p167 = scmp.ne.s32.totalorder %s152, %s166
      %p168 = scmp.eq.s32.totalorder %s37, 0
      %p169 = por %p167, %p168
      %s171 = sadd.s32 %s170, 1
      %p174 = scmp.eq.s32.totalorder %s31, 1
      %p175 = scmp.ne.s32.totalorder %s170, %s172
      %p176 = scmp.eq.s32.totalorder %s31, 0
      %p177 = por %p175, %p176
      %p178 = scmp.ne.s32.totalorder %s170, %s172
      %p179 = scmp.eq.s32.totalorder %s36, 1
      %p180 = por %p178, %p179
      %p181 = scmp.ne.s32.totalorder %s172, %s173
      %p182 = scmp.eq.s32.totalorder %s36, 0
      %p183 = por %p181, %p182
      %p184 = scmp.ne.s32.totalorder %s172, %s173
      %p185 = scmp.eq.s32.totalorder %s37, 1
      %p186 = por %p184, %p185
      %p188 = scmp.ne.s32.totalorder %s173, %s187
      %p189 = scmp.eq.s32.totalorder %s37, 0
      %p190 = por %p188, %p189
      %s192 = sadd.s32 %s191, 1
      %p195 = scmp.eq.s32.totalorder %s31, 1
      %p196 = scmp.ne.s32.totalorder %s191, %s193
      %p197 = scmp.eq.s32.totalorder %s31, 0
      %p198 = por %p196, %p197
      %p199 = scmp.ne.s32.totalorder %s191, %s193
      %p200 = scmp.eq.s32.totalorder %s36, 1
      %p201 = por %p199, %p200
      %p202 = scmp.ne.s32.totalorder %s193, %s194
      %p203 = scmp.eq.s32.totalorder %s36, 0
      %p204 = por %p202, %p203
      %p205 = scmp.ne.s32.totalorder %s193, %s194
      %p206 = scmp.eq.s32.totalorder %s37, 1
      %p207 = por %p205, %p206
      %p209 = scmp.ne.s32.totalorder %s194, %s208
      %p210 = scmp.eq.s32.totalorder %s37, 0
      %p211 = por %p209, %p210
      %s213 = sadd.s32 %s212, 1
      %p216 = scmp.eq.s32.totalorder %s31, 1
      %p217 = scmp.ne.s32.totalorder %s212, %s214
      %p218 = scmp.eq.s32.totalorder %s31, 0
      %p219 = por %p217, %p218
      %p220 = scmp.ne.s32.totalorder %s212, %s214
      %p221 = scmp.eq.s32.totalorder %s36, 1
      %p222 = por %p220, %p221
      %p223 = scmp.ne.s32.totalorder %s214, %s215
      %p224 = scmp.eq.s32.totalorder %s36, 0
      %p225 = por %p223, %p224
      %p226 = scmp.ne.s32.totalorder %s214, %s215
      %p227 = scmp.eq.s32.totalorder %s37, 1
      %p228 = por %p226, %p227
      %p230 = scmp.ne.s32.totalorder %s215, %s229
      %p231 = scmp.eq.s32.totalorder %s37, 0
      %p232 = por %p230, %p231
      %s234 = sadd.s32 %s233, 1
      %p237 = scmp.eq.s32.totalorder %s31, 1
      %p238 = scmp.ne.s32.totalorder %s233, %s235
      %p239 = scmp.eq.s32.totalorder %s31, 0
      %p240 = por %p238, %p239
      %p241 = scmp.ne.s32.totalorder %s233, %s235
      %p242 = scmp.eq.s32.totalorder %s36, 1
      %p243 = por %p241, %p242
      %p244 = scmp.ne.s32.totalorder %s235, %s236
      %p245 = scmp.eq.s32.totalorder %s36, 0
      %p246 = por %p244, %p245
      %p247 = scmp.ne.s32.totalorder %s235, %s236
      %p248 = scmp.eq.s32.totalorder %s37, 1
      %p249 = por %p247, %p248
      %p251 = scmp.ne.s32.totalorder %s236, %s250
      %p252 = scmp.eq.s32.totalorder %s37, 0
      %p253 = por %p251, %p252
      %s255 = sadd.s32 %s254, 1
      %p258 = scmp.eq.s32.totalorder %s31, 1
      %p259 = scmp.ne.s32.totalorder %s254, %s256
      %p260 = scmp.eq.s32.totalorder %s31, 0
      %p261 = por %p259, %p260
      %p262 = scmp.ne.s32.totalorder %s254, %s256
      %p263 = scmp.eq.s32.totalorder %s36, 1
      %p264 = por %p262, %p263
      %p265 = scmp.ne.s32.totalorder %s256, %s257
      %p266 = scmp.eq.s32.totalorder %s36, 0
      %p267 = por %p265, %p266
      %p268 = scmp.ne.s32.totalorder %s256, %s257
      %p269 = scmp.eq.s32.totalorder %s37, 1
      %p270 = por %p268, %p269
      %p272 = scmp.ne.s32.totalorder %s257, %s271
      %p273 = scmp.eq.s32.totalorder %s37, 0
      %p274 = por %p272, %p273
      %s276 = sadd.s32 %s275, 1
      %p279 = scmp.eq.s32.totalorder %s31, 1
      %p280 = scmp.ne.s32.totalorder %s275, %s277
      %p281 = scmp.eq.s32.totalorder %s31, 0
      %p282 = por %p280, %p281
      %p283 = scmp.ne.s32.totalorder %s275, %s277
      %p284 = scmp.eq.s32.totalorder %s36, 1
      %p285 = por %p283, %p284
      %p286 = scmp.ne.s32.totalorder %s277, %s278
      %p287 = scmp.eq.s32.totalorder %s36, 0
      %p288 = por %p286, %p287
      %p289 = scmp.ne.s32.totalorder %s277, %s278
      %p290 = scmp.eq.s32.totalorder %s37, 1
      %p291 = por %p289, %p290
      %p293 = scmp.ne.s32.totalorder %s278, %s292
      %p294 = scmp.eq.s32.totalorder %s37, 0
      %p295 = por %p293, %p294
      %s297 = sadd.s32 %s296, 1
      %p300 = scmp.eq.s32.totalorder %s31, 1
      %p301 = scmp.ne.s32.totalorder %s296, %s298
      %p302 = scmp.eq.s32.totalorder %s31, 0
      %p303 = por %p301, %p302
      %p304 = scmp.ne.s32.totalorder %s296, %s298
      %p305 = scmp.eq.s32.totalorder %s36, 1
      %p306 = por %p304, %p305
      %p307 = scmp.ne.s32.totalorder %s298, %s299
      %p308 = scmp.eq.s32.totalorder %s36, 0
      %p309 = por %p307, %p308
      %p310 = scmp.ne.s32.totalorder %s298, %s299
      %p311 = scmp.eq.s32.totalorder %s37, 1
      %p312 = por %p310, %p311
      %p314 = scmp.ne.s32.totalorder %s299, %s313
      %p315 = scmp.eq.s32.totalorder %s37, 0
      %p316 = por %p314, %p315
      %s318 = sadd.s32 %s317, 1
      %p321 = scmp.eq.s32.totalorder %s31, 1
      %p322 = scmp.ne.s32.totalorder %s317, %s319
      %p323 = scmp.eq.s32.totalorder %s31, 0
      %p324 = por %p322, %p323
      %p325 = scmp.ne.s32.totalorder %s317, %s319
      %p326 = scmp.eq.s32.totalorder %s36, 1
      %p327 = por %p325, %p326
      %p328 = scmp.ne.s32.totalorder %s319, %s320
      %p329 = scmp.eq.s32.totalorder %s36, 0
      %p330 = por %p328, %p329
      %p331 = scmp.ne.s32.totalorder %s319, %s320
      %p332 = scmp.eq.s32.totalorder %s37, 1
      %p333 = por %p331, %p332
      %p335 = scmp.ne.s32.totalorder %s320, %s334
      %p336 = scmp.eq.s32.totalorder %s37, 0
      %p337 = por %p335, %p336
      %s339 = sadd.s32 %s338, 1
      %p342 = scmp.eq.s32.totalorder %s31, 1
      %p343 = scmp.ne.s32.totalorder %s338, %s340
      %p344 = scmp.eq.s32.totalorder %s31, 0
      %p345 = por %p343, %p344
      %p346 = scmp.ne.s32.totalorder %s338, %s340
      %p347 = scmp.eq.s32.totalorder %s36, 1
      %p348 = por %p346, %p347
      %p349 = scmp.ne.s32.totalorder %s340, %s341
      %p350 = scmp.eq.s32.totalorder %s36, 0
      %p351 = por %p349, %p350
      %p352 = scmp.ne.s32.totalorder %s340, %s341
      %p353 = scmp.eq.s32.totalorder %s37, 1
      %p354 = por %p352, %p353
      %p356 = scmp.ne.s32.totalorder %s341, %s355
      %p357 = scmp.eq.s32.totalorder %s37, 0
      %p358 = por %p356, %p357
      %s360 = sadd.s32 %s359, 1
      %p363 = scmp.eq.s32.totalorder %s31, 1
      %p364 = scmp.ne.s32.totalorder %s359, %s361
      %p365 = scmp.eq.s32.totalorder %s31, 0
      %p366 = por %p364, %p365
      %p367 = scmp.ne.s32.totalorder %s359, %s361
      %p368 = scmp.eq.s32.totalorder %s36, 1
      %p369 = por %p367, %p368
      %p370 = scmp.ne.s32.totalorder %s361, %s362
      %p371 = scmp.eq.s32.totalorder %s36, 0
      %p372 = por %p370, %p371
      %p373 = scmp.ne.s32.totalorder %s361, %s362
      %p374 = scmp.eq.s32.totalorder %s37, 1
      %p375 = por %p373, %p374
      %p377 = scmp.ne.s32.totalorder %s362, %s376
      %p378 = scmp.eq.s32.totalorder %s37, 0
      %p379 = por %p377, %p378
      %s381 = sadd.s32 %s380, 1
      %p384 = scmp.eq.s32.totalorder %s31, 1
      %p385 = scmp.ne.s32.totalorder %s380, %s382
      %p386 = scmp.eq.s32.totalorder %s31, 0
      %p387 = por %p385, %p386
      %p388 = scmp.ne.s32.totalorder %s380, %s382
      %p389 = scmp.eq.s32.totalorder %s36, 1
      %p390 = por %p388, %p389
      %p391 = scmp.ne.s32.totalorder %s382, %s383
      %p392 = scmp.eq.s32.totalorder %s36, 0
      %p393 = por %p391, %p392
      %p394 = scmp.ne.s32.totalorder %s382, %s383
      %p395 = scmp.eq.s32.totalorder %s37, 1
      %p396 = por %p394, %p395
      %p398 = scmp.ne.s32.totalorder %s383, %s397
      %p399 = scmp.eq.s32.totalorder %s37, 0
      %p400 = por %p398, %p399
      %s402 = sadd.s32 %s401, 1
      %p405 = scmp.eq.s32.totalorder %s31, 1
      %p406 = scmp.ne.s32.totalorder %s401, %s403
      %p407 = scmp.eq.s32.totalorder %s31, 0
      %p408 = por %p406, %p407
      %p409 = scmp.ne.s32.totalorder %s401, %s403
      %p410 = scmp.eq.s32.totalorder %s36, 1
      %p411 = por %p409, %p410
      %p412 = scmp.ne.s32.totalorder %s403, %s404
      %p413 = scmp.eq.s32.totalorder %s36, 0
      %p414 = por %p412, %p413
      %p415 = scmp.ne.s32.totalorder %s403, %s404
      %p416 = scmp.eq.s32.totalorder %s37, 1
      %p417 = por %p415, %p416
      %p419 = scmp.ne.s32.totalorder %s404, %s418
      %p420 = scmp.eq.s32.totalorder %s37, 0
      %p421 = por %p419, %p420
      %s423 = sadd.s32 %s422, 1
      %p426 = scmp.eq.s32.totalorder %s31, 1
      %p427 = scmp.ne.s32.totalorder %s422, %s424
      %p428 = scmp.eq.s32.totalorder %s31, 0
      %p429 = por %p427, %p428
      %p430 = scmp.ne.s32.totalorder %s422, %s424
      %p431 = scmp.eq.s32.totalorder %s36, 1
      %p432 = por %p430, %p431
      %p433 = scmp.ne.s32.totalorder %s424, %s425
      %p434 = scmp.eq.s32.totalorder %s36, 0
      %p435 = por %p433, %p434
      %p436 = scmp.ne.s32.totalorder %s424, %s425
      %p437 = scmp.eq.s32.totalorder %s37, 1
      %p438 = por %p436, %p437
      %p440 = scmp.ne.s32.totalorder %s425, %s439
      %p441 = scmp.eq.s32.totalorder %s37, 0
      %p442 = por %p440, %p441
      %s444 = sadd.s32 %s443, 1
      %p447 = scmp.eq.s32.totalorder %s31, 1
      %p448 = scmp.ne.s32.totalorder %s443, %s445
      %p449 = scmp.eq.s32.totalorder %s31, 0
      %p450 = por %p448, %p449
      %p451 = scmp.ne.s32.totalorder %s443, %s445
      %p452 = scmp.eq.s32.totalorder %s36, 1
      %p453 = por %p451, %p452
      %p454 = scmp.ne.s32.totalorder %s445, %s446
      %p455 = scmp.eq.s32.totalorder %s36, 0
      %p456 = por %p454, %p455
      %p457 = scmp.ne.s32.totalorder %s445, %s446
      %p458 = scmp.eq.s32.totalorder %s37, 1
      %p459 = por %p457, %p458
      %p461 = scmp.ne.s32.totalorder %s446, %s460
      %p462 = scmp.eq.s32.totalorder %s37, 0
      %p463 = por %p461, %p462
      %s465 = sadd.s32 %s464, 1
      %p468 = scmp.eq.s32.totalorder %s31, 1
      %p469 = scmp.ne.s32.totalorder %s464, %s466
      %p470 = scmp.eq.s32.totalorder %s31, 0
      %p471 = por %p469, %p470
      %p472 = scmp.ne.s32.totalorder %s464, %s466
      %p473 = scmp.eq.s32.totalorder %s36, 1
      %p474 = por %p472, %p473
      %p475 = scmp.ne.s32.totalorder %s466, %s467
      %p476 = scmp.eq.s32.totalorder %s36, 0
      %p477 = por %p475, %p476
      %p478 = scmp.ne.s32.totalorder %s466, %s467
      %p479 = scmp.eq.s32.totalorder %s37, 1
      %p480 = por %p478, %p479
      %p482 = scmp.ne.s32.totalorder %s467, %s481
      %p483 = scmp.eq.s32.totalorder %s37, 0
      %p484 = por %p482, %p483
      %s486 = sadd.s32 %s485, 1
      %p489 = scmp.eq.s32.totalorder %s31, 1
      %p490 = scmp.ne.s32.totalorder %s485, %s487
      %p491 = scmp.eq.s32.totalorder %s31, 0
      %p492 = por %p490, %p491
      %p493 = scmp.ne.s32.totalorder %s485, %s487
      %p494 = scmp.eq.s32.totalorder %s36, 1
      %p495 = por %p493, %p494
      %p496 = scmp.ne.s32.totalorder %s487, %s488
      %p497 = scmp.eq.s32.totalorder %s36, 0
      %p498 = por %p496, %p497
      %p499 = scmp.ne.s32.totalorder %s487, %s488
      %p500 = scmp.eq.s32.totalorder %s37, 1
      %p501 = por %p499, %p500
      %p503 = scmp.ne.s32.totalorder %s488, %s502
      %p504 = scmp.eq.s32.totalorder %s37, 0
      %p505 = por %p503, %p504
      %s506 = ssub.s32 %s31, %s38
      %p507 = scmp.eq.s32.totalorder %s506, 0
      %s509 = sadd.s32 %s508, 1
      %s510 = scalar_select %p507, %s508, %s509
      %p513 = pneg %p507
      %p514 = scmp.eq.s32.totalorder %s31, 1
      %p515 = por %p513, %p514
      %p516 = scmp.ne.s32.totalorder %s508, %s511
      %p517 = scmp.eq.s32.totalorder %s31, 0
      %p518 = por %p516, %p517
      %p519 = scmp.ne.s32.totalorder %s508, %s511
      %p520 = scmp.eq.s32.totalorder %s36, 1
      %p521 = por %p519, %p520
      %p522 = scmp.ne.s32.totalorder %s511, %s512
      %p523 = scmp.eq.s32.totalorder %s36, 0
      %p524 = por %p522, %p523
      %p525 = scmp.ne.s32.totalorder %s511, %s512
      %p526 = scmp.eq.s32.totalorder %s37, 1
      %p527 = por %p525, %p526
      %p529 = scmp.ne.s32.totalorder %s512, %s528
      %p530 = scmp.eq.s32.totalorder %s37, 0
      %p531 = por %p529, %p530
      %p532 = scmp.le.s32.totalorder 1, %s31
      %p533 = scmp.lt.s32.totalorder %s31, 3
      %p534 = pnand %p532, %p533
      %p535 = pneg %p534
      // Predicated region
      $region9: #{text_embedding_forward.1} parent=5 // pred_check
        _
      $region10: #{text_embedding_forward.1} parent=5 // pred_check_branch
        %537 = sbr.rel (%p534) target = $region12
      $region11: #{text_embedding_forward.1} parent=5 // pred_region
        %s538 = ssub.s32 %s31, 1
        // Predicated region
        $region13: #{text_embedding_forward.1} parent=11 // pred_check
          %p539 = pneg %p78
        $region14: #{text_embedding_forward.1} parent=11 // pred_check_branch
          %541 = sbr.rel (%p539) target = $region16
        $region15: #{text_embedding_forward.1} parent=11 // pred_region
          _
        $region16: #{text_embedding_forward.1} parent=11 // pred_fallthru
          _
        // Predicated region
        $region17: #{text_embedding_forward.1} parent=11 // pred_check
          %p542 = pneg %p99
        $region18: #{text_embedding_forward.1} parent=11 // pred_check_branch
          %544 = sbr.rel (%p542) target = $region20
        $region19: #{text_embedding_forward.1} parent=11 // pred_region
          _
        $region20: #{text_embedding_forward.1} parent=11 // pred_fallthru
          _
        // Predicated region
        $region21: #{text_embedding_forward.1} parent=11 // pred_check
          %p545 = pneg %p120
        $region22: #{text_embedding_forward.1} parent=11 // pred_check_branch
          %547 = sbr.rel (%p545) target = $region24
        $region23: #{text_embedding_forward.1} parent=11 // pred_region
          _
        $region24: #{text_embedding_forward.1} parent=11 // pred_fallthru
          _
        // Predicated region
        $region25: #{text_embedding_forward.1} parent=11 // pred_check
          %p548 = pneg %p141
        $region26: #{text_embedding_forward.1} parent=11 // pred_check_branch
          %550 = sbr.rel (%p548) target = $region28
        $region27: #{text_embedding_forward.1} parent=11 // pred_region
          _
        $region28: #{text_embedding_forward.1} parent=11 // pred_fallthru
          _
        // Predicated region
        $region29: #{text_embedding_forward.1} parent=11 // pred_check
          %p551 = pneg %p162
        $region30: #{text_embedding_forward.1} parent=11 // pred_check_branch
          %553 = sbr.rel (%p551) target = $region32
        $region31: #{text_embedding_forward.1} parent=11 // pred_region
          _
        $region32: #{text_embedding_forward.1} parent=11 // pred_fallthru
          _
        // Predicated region
        $region33: #{text_embedding_forward.1} parent=11 // pred_check
          %p554 = pneg %p183
        $region34: #{text_embedding_forward.1} parent=11 // pred_check_branch
          %556 = sbr.rel (%p554) target = $region36
        $region35: #{text_embedding_forward.1} parent=11 // pred_region
          _
        $region36: #{text_embedding_forward.1} parent=11 // pred_fallthru
          _
        // Predicated region
        $region37: #{text_embedding_forward.1} parent=11 // pred_check
          %p557 = pneg %p204
        $region38: #{text_embedding_forward.1} parent=11 // pred_check_branch
          %559 = sbr.rel (%p557) target = $region40
        $region39: #{text_embedding_forward.1} parent=11 // pred_region
          _
        $region40: #{text_embedding_forward.1} parent=11 // pred_fallthru
          _
        // Predicated region
        $region41: #{text_embedding_forward.1} parent=11 // pred_check
          %p560 = pneg %p225
        $region42: #{text_embedding_forward.1} parent=11 // pred_check_branch
          %562 = sbr.rel (%p560) target = $region44
        $region43: #{text_embedding_forward.1} parent=11 // pred_region
          _
        $region44: #{text_embedding_forward.1} parent=11 // pred_fallthru
          _
        // Predicated region
        $region45: #{text_embedding_forward.1} parent=11 // pred_check
          %p563 = pneg %p246
        $region46: #{text_embedding_forward.1} parent=11 // pred_check_branch
          %565 = sbr.rel (%p563) target = $region48
        $region47: #{text_embedding_forward.1} parent=11 // pred_region
          _
        $region48: #{text_embedding_forward.1} parent=11 // pred_fallthru
          _
        // Predicated region
        $region49: #{text_embedding_forward.1} parent=11 // pred_check
          %p566 = pneg %p267
        $region50: #{text_embedding_forward.1} parent=11 // pred_check_branch
          %568 = sbr.rel (%p566) target = $region52
        $region51: #{text_embedding_forward.1} parent=11 // pred_region
          _
        $region52: #{text_embedding_forward.1} parent=11 // pred_fallthru
          _
        // Predicated region
        $region53: #{text_embedding_forward.1} parent=11 // pred_check
          %p569 = pneg %p288
        $region54: #{text_embedding_forward.1} parent=11 // pred_check_branch
          %571 = sbr.rel (%p569) target = $region56
        $region55: #{text_embedding_forward.1} parent=11 // pred_region
          _
        $region56: #{text_embedding_forward.1} parent=11 // pred_fallthru
          _
        // Predicated region
        $region57: #{text_embedding_forward.1} parent=11 // pred_check
          %p572 = pneg %p309
        $region58: #{text_embedding_forward.1} parent=11 // pred_check_branch
          %574 = sbr.rel (%p572) target = $region60
        $region59: #{text_embedding_forward.1} parent=11 // pred_region
          _
        $region60: #{text_embedding_forward.1} parent=11 // pred_fallthru
          _
        // Predicated region
        $region61: #{text_embedding_forward.1} parent=11 // pred_check
          %p575 = pneg %p330
        $region62: #{text_embedding_forward.1} parent=11 // pred_check_branch
          %577 = sbr.rel (%p575) target = $region64
        $region63: #{text_embedding_forward.1} parent=11 // pred_region
          _
        $region64: #{text_embedding_forward.1} parent=11 // pred_fallthru
          _
        // Predicated region
        $region65: #{text_embedding_forward.1} parent=11 // pred_check
          %p578 = pneg %p351
        $region66: #{text_embedding_forward.1} parent=11 // pred_check_branch
          %580 = sbr.rel (%p578) target = $region68
        $region67: #{text_embedding_forward.1} parent=11 // pred_region
          _
        $region68: #{text_embedding_forward.1} parent=11 // pred_fallthru
          _
        // Predicated region
        $region69: #{text_embedding_forward.1} parent=11 // pred_check
          %p581 = pneg %p372
        $region70: #{text_embedding_forward.1} parent=11 // pred_check_branch
          %583 = sbr.rel (%p581) target = $region72
        $region71: #{text_embedding_forward.1} parent=11 // pred_region
          _
        $region72: #{text_embedding_forward.1} parent=11 // pred_fallthru
          _
        // Predicated region
        $region73: #{text_embedding_forward.1} parent=11 // pred_check
          %p584 = pneg %p393
        $region74: #{text_embedding_forward.1} parent=11 // pred_check_branch
          %586 = sbr.rel (%p584) target = $region76
        $region75: #{text_embedding_forward.1} parent=11 // pred_region
          _
        $region76: #{text_embedding_forward.1} parent=11 // pred_fallthru
          _
        // Predicated region
        $region77: #{text_embedding_forward.1} parent=11 // pred_check
          %p587 = pneg %p414
        $region78: #{text_embedding_forward.1} parent=11 // pred_check_branch
          %589 = sbr.rel (%p587) target = $region80
        $region79: #{text_embedding_forward.1} parent=11 // pred_region
          _
        $region80: #{text_embedding_forward.1} parent=11 // pred_fallthru
          _
        // Predicated region
        $region81: #{text_embedding_forward.1} parent=11 // pred_check
          %p590 = pneg %p435
        $region82: #{text_embedding_forward.1} parent=11 // pred_check_branch
          %592 = sbr.rel (%p590) target = $region84
        $region83: #{text_embedding_forward.1} parent=11 // pred_region
          _
        $region84: #{text_embedding_forward.1} parent=11 // pred_fallthru
          _
        // Predicated region
        $region85: #{text_embedding_forward.1} parent=11 // pred_check
          %p593 = pneg %p456
        $region86: #{text_embedding_forward.1} parent=11 // pred_check_branch
          %595 = sbr.rel (%p593) target = $region88
        $region87: #{text_embedding_forward.1} parent=11 // pred_region
          _
        $region88: #{text_embedding_forward.1} parent=11 // pred_fallthru
          _
        // Predicated region
        $region89: #{text_embedding_forward.1} parent=11 // pred_check
          %p596 = pneg %p477
        $region90: #{text_embedding_forward.1} parent=11 // pred_check_branch
          %598 = sbr.rel (%p596) target = $region92
        $region91: #{text_embedding_forward.1} parent=11 // pred_region
          _
        $region92: #{text_embedding_forward.1} parent=11 // pred_fallthru
          _
        // Predicated region
        $region93: #{text_embedding_forward.1} parent=11 // pred_check
          %p599 = pneg %p498
        $region94: #{text_embedding_forward.1} parent=11 // pred_check_branch
          %601 = sbr.rel (%p599) target = $region96
        $region95: #{text_embedding_forward.1} parent=11 // pred_region
          _
        $region96: #{text_embedding_forward.1} parent=11 // pred_fallthru
          _
      $region12: #{text_embedding_forward.1} parent=5 // pred_fallthru
        _
      %p602 = scmp.lt.s32.totalorder %s31, 2
      // Predicated region
      $region97: #{text_embedding_forward.1} parent=5 // pred_check
        %p603 = pneg %p602
      $region98: #{text_embedding_forward.1} parent=5 // pred_check_branch
        %605 = sbr.rel (%p603) target = $region100
      $region99: #{text_embedding_forward.1} parent=5 // pred_region
        // Predicated region
        $region101: #{text_embedding_forward.1} parent=99 // pred_check
          %p606 = pneg %p51
        $region102: #{text_embedding_forward.1} parent=99 // pred_check_branch
          %608 = sbr.rel (%p606) target = $region104
        $region103: #{text_embedding_forward.1} parent=99 // pred_region
          %p609 = scmp.lt.s32.totalorder %s31, 1
          %s610 = scalar_select %p609, %s31, 1
          %s611 = smul.addr %s610, 8
          %s612 = scalar_lea.vmem %s0, %s611
        $region104: #{text_embedding_forward.1} parent=99 // pred_fallthru
          _
      $region100: #{text_embedding_forward.1} parent=5 // pred_fallthru
        _
      %p613 = scmp.le.s32.totalorder 1, %s31
      %p614 = scmp.lt.s32.totalorder %s31, 3
      %p615 = pnand %p613, %p614
      %p616 = pneg %p615
      // Predicated region
      $region105: #{text_embedding_forward.1} parent=5 // pred_check
        _
      $region106: #{text_embedding_forward.1} parent=5 // pred_check_branch
        %618 = sbr.rel (%p615) target = $region108
      $region107: #{text_embedding_forward.1} parent=5 // pred_region
        %s619 = ssub.s32 %s31, 1
        %p620 = scmp.lt.s32.totalorder %s36, 1
        %s621 = scalar_select %p620, %s36, 1
        %s622 = smul.addr %s621, 8
        %s623 = scalar_lea.vmem %s0, %s622
        %p624 = pneg %p57
        %p625 = pneg %p54
        %p626 = pneg %p78
        %p627 = pneg %p75
        %p628 = pneg %p99
        %p629 = pneg %p96
        %p630 = pneg %p120
        %p631 = pneg %p117
        %p632 = pneg %p141
        %p633 = pneg %p138
        %p634 = pneg %p162
        %p635 = pneg %p159
        %p636 = pneg %p183
        %p637 = pneg %p180
        %p638 = pneg %p204
        %p639 = pneg %p201
        %p640 = pneg %p225
        %p641 = pneg %p222
        %p642 = pneg %p246
        %p643 = pneg %p243
        %p644 = pneg %p267
        %p645 = pneg %p264
        %p646 = pneg %p288
        %p647 = pneg %p285
        %p648 = pneg %p309
        %p649 = pneg %p306
        %p650 = pneg %p330
        %p651 = pneg %p327
        %p652 = pneg %p351
        %p653 = pneg %p348
        %p654 = pneg %p372
        %p655 = pneg %p369
        %p656 = pneg %p393
        %p657 = pneg %p390
        %p658 = pneg %p414
        %p659 = pneg %p411
        %p660 = pneg %p435
        %p661 = pneg %p432
        %p662 = pneg %p456
        %p663 = pneg %p453
        %p664 = pneg %p477
        %p665 = pneg %p474
        %p666 = pneg %p498
        %p667 = pneg %p495
        %p668 = pneg %p524
        %p669 = pneg %p521
        %s670 = sand.u32 %s511, 1
        %s671 = scalar_lea.sflag [#allocation3], %s670
        %s672 = sand.u32 %s511, 1
        %s673 = scalar_lea.vmem [#allocation2], %s672
        %p674 = scmp.lt.s32.totalorder %s36, 1
        %s675 = scalar_select %p674, %s36, 1
        %s676 = smul.addr %s675, 8
        %s677 = scalar_lea.vmem %s0, %s676
        %v679 = vld [vmem:[%s677] sm:$0xff]
        %v680 = vlaneseq
        %v681 = vand.u32 %v680, 127
        %682 = vset.pattern.permute.xlu0 0
        %683 = vperm.xlu0 %682, %v679
        %v684 = vpop.permute.xlu0 %683
        %vm685 = vcmp.eq.s32.totalorder %v681, %v684
        %v686 = vsel %vm685, 1, 0
        %v687 = vcvt.s32.f32 %v686
        %v688 = vld [vmem:[%s1] sm:$0xff]
        %v689 = vld [vmem:[%s1 + $0x8] sm:$0xff]
        %v690 = vld [vmem:[%s1 + $0x10] sm:$0xff]
        %v691 = vld [vmem:[%s1 + $0x18] sm:$0xff]
        %v692 = vld [vmem:[%s1 + $0x20] sm:$0xff]
        %v693 = vld [vmem:[%s1 + $0x28] sm:$0xff]
        %v694 = vld [vmem:[%s1 + $0x30] sm:$0xff]
        %v695 = vld [vmem:[%s1 + $0x38] sm:$0xff]
        %v696 = vld [vmem:[%s1 + $0x40] sm:$0xff]
        %v697 = vld [vmem:[%s1 + $0x48] sm:$0xff]
        %v698 = vld [vmem:[%s1 + $0x50] sm:$0xff]
        %v699 = vld [vmem:[%s1 + $0x58] sm:$0xff]
        %v700 = vld [vmem:[%s1 + $0x60] sm:$0xff]
        %v701 = vld [vmem:[%s1 + $0x68] sm:$0xff]
        %v702 = vld [vmem:[%s1 + $0x70] sm:$0xff]
        %v703 = vld [vmem:[%s1 + $0x78] sm:$0xff]
        %v704 = vld [vmem:[%s2] sm:$0xff]
        %705 = vmatprep.subr.mxu0 0.0
        %706 = vmatpush1.msra.mxu0 %v703
        %707 = vmatprep.subr.mxu0 0.0
        %708 = vmatpush1.msra.mxu0 %v702
        %709 = vmatprep.subr.mxu0 0.0
        %710 = vmatpush1.msra.mxu0 %v701
        %711 = vmatprep.subr.mxu0 0.0
        %712 = vmatpush1.msra.mxu0 %v700
        %713 = vmatprep.subr.mxu0 0.0
        %714 = vmatpush1.msra.mxu0 %v699
        %715 = vmatprep.subr.mxu0 0.0
        %716 = vmatpush1.msra.mxu0 %v698
        %717 = vmatprep.subr.mxu0 0.0
        %718 = vmatpush1.msra.mxu0 %v697
        %719 = vmatprep.subr.mxu0 0.0
        %720 = vmatpush1.msra.mxu0 %v696
        %721 = vmatprep.subr.mxu0 0.0
        %722 = vmatpush1.msra.mxu0 %v695
        %723 = vmatprep.subr.mxu0 0.0
        %724 = vmatpush1.msra.mxu0 %v694
        %725 = vmatprep.subr.mxu0 0.0
        %726 = vmatpush1.msra.mxu0 %v693
        %727 = vmatprep.subr.mxu0 0.0
        %728 = vmatpush1.msra.mxu0 %v692
        %729 = vmatprep.subr.mxu0 0.0
        %730 = vmatpush1.msra.mxu0 %v691
        %731 = vmatprep.subr.mxu0 0.0
        %732 = vmatpush1.msra.mxu0 %v690
        %733 = vmatprep.subr.mxu0 0.0
        %734 = vmatpush1.msra.mxu0 %v689
        %735 = vmatprep.subr.mxu0 0.0
        %736 = vmatpush1.msra.mxu0 %v688
        %737 = vmatprep.subr.mxu0 0.0
        %738 = vmatpush2.msra.mxu0 0.0
        %739 = vmatprep.subr.mxu0 0.0
        %740 = vmatpush2.msra.mxu0 0.0
        %741 = vmatprep.subr.mxu0 0.0
        %742 = vmatpush2.msra.mxu0 0.0
        %743 = vmatprep.subr.mxu0 0.0
        %744 = vmatpush2.msra.mxu0 0.0
        %745 = vmatprep.subr.mxu0 0.0
        %746 = vmatpush2.msra.mxu0 0.0
        %747 = vmatprep.subr.mxu0 0.0
        %748 = vmatpush2.msra.mxu0 0.0
        %749 = vmatprep.subr.mxu0 0.0
        %750 = vmatpush2.msra.mxu0 0.0
        %751 = vmatprep.subr.mxu0 0.0
        %752 = vmatpush2.msra.mxu0 0.0
        %753 = vmatprep.subr.mxu0 0.0
        %754 = vmatpush2.msra.mxu0 0.0
        %755 = vmatprep.subr.mxu0 0.0
        %756 = vmatpush2.msra.mxu0 0.0
        %757 = vmatprep.subr.mxu0 0.0
        %758 = vmatpush2.msra.mxu0 0.0
        %759 = vmatprep.subr.mxu0 0.0
        %760 = vmatpush2.msra.mxu0 0.0
        %761 = vmatprep.subr.mxu0 0.0
        %762 = vmatpush2.msra.mxu0 0.0
        %763 = vmatprep.subr.mxu0 0.0
        %764 = vmatpush2.msra.mxu0 0.0
        %765 = vmatprep.subr.mxu0 0.0
        %766 = vmatpush2.msra.mxu0 0.0
        %767 = vmatprep.subr.mxu0 0.0
        %768 = vmatpush2.msra.mxu0 0.0
        %769 = vmatprep.mubr.f32.mxu0 0.0
        %770 = vmatmul.mubr.f32.gmra.mxu0 %v687
        %v771 = vpop.f32.mrf.mxu0
        %v772 = vadd.f32 %v704, %v771
        %v773 = vpop.f32.mrf.mxu0
        %774 = vdwg.mxu0
        %v775 = vld [vmem:[%s3] sm:$0x1]
        %v777 = vlaneseq
        %v778 = vshrl.u32 %v777, 7
        %v779 = vsub.s32 0, %v778
        %v780 = vrot.slane %v775, %v779
        %v782 = vadd.f32 %v772, %v780
        %v783 = vld [vmem:[%s4] sm:$0x1]
        %v784 = vld [vmem:[%s5] sm:$0x1]
        %vm785 = vcmask 261120
        %v786 = vsel %vm785, %v782, 0.0
        %787 = vadd.xlane.f32.xlu0 %v786
        %v788 = vpop.xlane.xlu0 %787
        %v789 = vrcp.pop 32.0
        %v790 = vmul.f32 %v788, %v789
        %v791 = vsub.f32 %v782, %v790
        %v792 = vmul.f32 %v791, %v791
        %v793 = vsel %vm785, %v792, 0.0
        %794 = vadd.xlane.f32.xlu0 %v793
        %v795 = vpop.xlane.xlu0 %794
        %v796 = vmul.f32 %v795, %v789
        %v797 = vadd.f32 %v796, 1e-12
        %v798 = vrsqrt.pop %v797
        %v799 = vmul.f32 %v791, %v798
        %v801 = vlaneseq
        %v802 = vshrl.u32 %v801, 7
        %v803 = vsub.s32 0, %v802
        %v804 = vrot.slane %v783, %v803
        %v806 = vmul.f32 %v799, %v804
        %v808 = vlaneseq
        %v809 = vshrl.u32 %v808, 7
        %v810 = vsub.s32 0, %v809
        %v811 = vrot.slane %v784, %v810
        %v813 = vadd.f32 %v806, %v811
        %v814 = vpack.c.bf16 %v813, %v813
        %v815 = vld [vmem:[%s6] sm:$0xf]
        %v816 = vld [vmem:[%s6 + $0x4] sm:$0xf]
        %v817 = vld [vmem:[%s6 + $0x8] sm:$0xf]
        %v818 = vld [vmem:[%s6 + $0xc] sm:$0xf]
        %v819 = vld [vmem:[%s6 + $0x10] sm:$0xf]
        %v820 = vld [vmem:[%s6 + $0x14] sm:$0xf]
        %v821 = vld [vmem:[%s6 + $0x18] sm:$0xf]
        %v822 = vld [vmem:[%s6 + $0x1c] sm:$0xf]
        %v823 = vld [vmem:[%s8] sm:$0xf]
        %v824 = vld [vmem:[%s8 + $0x4] sm:$0xf]
        %v825 = vld [vmem:[%s8 + $0x8] sm:$0xf]
        %v826 = vld [vmem:[%s8 + $0xc] sm:$0xf]
        %v827 = vld [vmem:[%s8 + $0x10] sm:$0xf]
        %v828 = vld [vmem:[%s8 + $0x14] sm:$0xf]
        %v829 = vld [vmem:[%s8 + $0x18] sm:$0xf]
        %v830 = vld [vmem:[%s8 + $0x1c] sm:$0xf]
        %v831 = vld [vmem:[%s10] sm:$0xf]
        %v832 = vld [vmem:[%s10 + $0x4] sm:$0xf]
        %v833 = vld [vmem:[%s10 + $0x8] sm:$0xf]
        %v834 = vld [vmem:[%s10 + $0xc] sm:$0xf]
        %v835 = vld [vmem:[%s10 + $0x10] sm:$0xf]
        %v836 = vld [vmem:[%s10 + $0x14] sm:$0xf]
        %v837 = vld [vmem:[%s10 + $0x18] sm:$0xf]
        %v838 = vld [vmem:[%s10 + $0x1c] sm:$0xf]
        %v839 = vld [vmem:[%s12] sm:$0xf]
        %v840 = vld [vmem:[%s12 + $0x4] sm:$0xf]
        %v841 = vld [vmem:[%s12 + $0x8] sm:$0xf]
        %v842 = vld [vmem:[%s12 + $0xc] sm:$0xf]
        %v843 = vld [vmem:[%s7] sm:$0x3]
        %v844 = vld [vmem:[%s9] sm:$0x3]
        %v845 = vld [vmem:[%s11] sm:$0x3]
        %v846 = vlaneseq
        %v847 = vshrl.u32 %v846, 7
        %v848 = vsub.s32 0, %v847
        %v849 = vrot.slane %v843, %v848
        %v854 = vunpack.c.l.b16 %v815
        %v855 = vunpack.c.l.b16 %v816
        %v856 = vunpack.c.l.b16 %v817
        %v857 = vunpack.c.l.b16 %v818
        %v858 = vpack.c.b16 %v855, %v854
        %v859 = vpack.c.b16 %v857, %v856
        %v863 = vsel %vm785, %v814, 0
        %865 = vmatprep.subr.bf16.mxu0 0
        %866 = vmatpush1.bf16.msra.mxu0 0
        %867 = vmatprep.subr.bf16.mxu0 0
        %868 = vmatpush1.bf16.msra.mxu0 0
        %869 = vmatprep.subr.bf16.mxu0 0
        %870 = vmatpush1.bf16.msra.mxu0 0
        %871 = vmatprep.subr.bf16.mxu0 0
        %872 = vmatpush1.bf16.msra.mxu0 0
        %873 = vmatprep.subr.bf16.mxu0 0
        %874 = vmatpush1.bf16.msra.mxu0 0
        %875 = vmatprep.subr.bf16.mxu0 0
        %876 = vmatpush1.bf16.msra.mxu0 0
        %877 = vmatprep.subr.bf16.mxu0 0
        %878 = vmatpush1.bf16.msra.mxu0 %v859
        %879 = vmatprep.subr.bf16.mxu0 0
        %880 = vmatpush1.bf16.msra.mxu0 %v858
        %881 = vmatprep.subr.bf16.mxu0 0
        %882 = vmatpush2.bf16.msra.mxu0 0
        %883 = vmatprep.subr.bf16.mxu0 0
        %884 = vmatpush2.bf16.msra.mxu0 0
        %885 = vmatprep.subr.bf16.mxu0 0
        %886 = vmatpush2.bf16.msra.mxu0 0
        %887 = vmatprep.subr.bf16.mxu0 0
        %888 = vmatpush2.bf16.msra.mxu0 0
        %889 = vmatprep.subr.bf16.mxu0 0
        %890 = vmatpush2.bf16.msra.mxu0 0
        %891 = vmatprep.subr.bf16.mxu0 0
        %892 = vmatpush2.bf16.msra.mxu0 0
        %893 = vmatprep.subr.bf16.mxu0 0
        %894 = vmatpush2.bf16.msra.mxu0 0
        %895 = vmatprep.subr.bf16.mxu0 0
        %896 = vmatpush2.bf16.msra.mxu0 0
        %897 = vmatprep.mubr.bf16.mxu0 0
        %898 = vmatmul.mubr.bf16.gmra.mxu0 %v863
        %v899 = vpop.f32.mrf.mxu0
        %v900 = vadd.f32 %v849, %v899
        %v901 = vpop.f32.mrf.mxu0
        %v902 = vpop.f32.mrf.mxu0
        %v903 = vpop.f32.mrf.mxu0
        %904 = vdwg.mxu0
        %v905 = vlaneseq
        %v906 = vshrl.u32 %v905, 7
        %v907 = vsub.s32 0, %v906
        %v908 = vrot.slane %v844, %v907
        %v913 = vunpack.c.l.b16 %v823
        %v914 = vunpack.c.l.b16 %v824
        %v915 = vunpack.c.l.b16 %v825
        %v916 = vunpack.c.l.b16 %v826
        %v917 = vpack.c.b16 %v914, %v913
        %v918 = vpack.c.b16 %v916, %v915
        %921 = vmatprep.subr.bf16.mxu0 0
        %922 = vmatpush1.bf16.msra.mxu0 0
        %923 = vmatprep.subr.bf16.mxu0 0
        %924 = vmatpush1.bf16.msra.mxu0 0
        %925 = vmatprep.subr.bf16.mxu0 0
        %926 = vmatpush1.bf16.msra.mxu0 0
        %927 = vmatprep.subr.bf16.mxu0 0
        %928 = vmatpush1.bf16.msra.mxu0 0
        %929 = vmatprep.subr.bf16.mxu0 0
        %930 = vmatpush1.bf16.msra.mxu0 0
        %931 = vmatprep.subr.bf16.mxu0 0
        %932 = vmatpush1.bf16.msra.mxu0 0
        %933 = vmatprep.subr.bf16.mxu0 0
        %934 = vmatpush1.bf16.msra.mxu0 %v918
        %935 = vmatprep.subr.bf16.mxu0 0
        %936 = vmatpush1.bf16.msra.mxu0 %v917
        %937 = vmatprep.subr.bf16.mxu0 0
        %938 = vmatpush2.bf16.msra.mxu0 0
        %939 = vmatprep.subr.bf16.mxu0 0
        %940 = vmatpush2.bf16.msra.mxu0 0
        %941 = vmatprep.subr.bf16.mxu0 0
        %942 = vmatpush2.bf16.msra.mxu0 0
        %943 = vmatprep.subr.bf16.mxu0 0
        %944 = vmatpush2.bf16.msra.mxu0 0
        %945 = vmatprep.subr.bf16.mxu0 0
        %946 = vmatpush2.bf16.msra.mxu0 0
        %947 = vmatprep.subr.bf16.mxu0 0
        %948 = vmatpush2.bf16.msra.mxu0 0
        %949 = vmatprep.subr.bf16.mxu0 0
        %950 = vmatpush2.bf16.msra.mxu0 0
        %951 = vmatprep.subr.bf16.mxu0 0
        %952 = vmatpush2.bf16.msra.mxu0 0
        %953 = vmatprep.mubr.bf16.mxu0 0
        %954 = vmatmul.mubr.bf16.gmra.mxu0 %v863
        %v955 = vpop.f32.mrf.mxu0
        %v956 = vadd.f32 %v908, %v955
        %v957 = vpop.f32.mrf.mxu0
        %v958 = vpop.f32.mrf.mxu0
        %v959 = vpop.f32.mrf.mxu0
        %960 = vdwg.mxu0
        %v961 = vlaneseq
        %v962 = vshrl.u32 %v961, 7
        %v963 = vsub.s32 0, %v962
        %v964 = vrot.slane %v845, %v963
        %v969 = vunpack.c.l.b16 %v831
        %v970 = vunpack.c.l.b16 %v832
        %v971 = vunpack.c.l.b16 %v833
        %v972 = vunpack.c.l.b16 %v834
        %v973 = vpack.c.b16 %v970, %v969
        %v974 = vpack.c.b16 %v972, %v971
        %977 = vmatprep.subr.bf16.mxu0 0
        %978 = vmatpush1.bf16.msra.mxu0 0
        %979 = vmatprep.subr.bf16.mxu0 0
        %980 = vmatpush1.bf16.msra.mxu0 0
        %981 = vmatprep.subr.bf16.mxu0 0
        %982 = vmatpush1.bf16.msra.mxu0 0
        %983 = vmatprep.subr.bf16.mxu0 0
        %984 = vmatpush1.bf16.msra.mxu0 0
        %985 = vmatprep.subr.bf16.mxu0 0
        %986 = vmatpush1.bf16.msra.mxu0 0
        %987 = vmatprep.subr.bf16.mxu0 0
        %988 = vmatpush1.bf16.msra.mxu0 0
        %989 = vmatprep.subr.bf16.mxu0 0
        %990 = vmatpush1.bf16.msra.mxu0 %v974
        %991 = vmatprep.subr.bf16.mxu0 0
        %992 = vmatpush1.bf16.msra.mxu0 %v973
        %993 = vmatprep.subr.bf16.mxu0 0
        %994 = vmatpush2.bf16.msra.mxu0 0
        %995 = vmatprep.subr.bf16.mxu0 0
        %996 = vmatpush2.bf16.msra.mxu0 0
        %997 = vmatprep.subr.bf16.mxu0 0
        %998 = vmatpush2.bf16.msra.mxu0 0
        %999 = vmatprep.subr.bf16.mxu0 0
        %1000 = vmatpush2.bf16.msra.mxu0 0
        %1001 = vmatprep.subr.bf16.mxu0 0
        %1002 = vmatpush2.bf16.msra.mxu0 0
        %1003 = vmatprep.subr.bf16.mxu0 0
        %1004 = vmatpush2.bf16.msra.mxu0 0
        %1005 = vmatprep.subr.bf16.mxu0 0
        %1006 = vmatpush2.bf16.msra.mxu0 0
        %1007 = vmatprep.subr.bf16.mxu0 0
        %1008 = vmatpush2.bf16.msra.mxu0 0
        %1009 = vmatprep.mubr.bf16.mxu0 0
        %1010 = vmatmul.mubr.bf16.gmra.mxu0 %v863
        %v1011 = vpop.f32.mrf.mxu0
        %v1012 = vadd.f32 %v964, %v1011
        %v1013 = vpop.f32.mrf.mxu0
        %v1014 = vpop.f32.mrf.mxu0
        %v1015 = vpop.f32.mrf.mxu0
        %1016 = vdwg.mxu0
        %v1017 = vpack.c.bf16 %v900, %v900
        %v1018 = vpack.c.bf16 %v956, %v956
        %vm1019 = vcmask 130048
        %v1021 = vsel %vm1019, %v1017, 0
        %v1024 = vsel %vm1019, %v1018, 0
        %1026 = vmatprep.subr.bf16.mxu0 0
        %1027 = vmatpush1.bf16.xpose.msra.mxu0 0
        %1028 = vmatprep.subr.bf16.mxu0 0
        %1029 = vmatpush1.bf16.xpose.msra.mxu0 0
        %1030 = vmatprep.subr.bf16.mxu0 0
        %1031 = vmatpush1.bf16.xpose.msra.mxu0 0
        %1032 = vmatprep.subr.bf16.mxu0 0
        %1033 = vmatpush1.bf16.xpose.msra.mxu0 0
        %1034 = vmatprep.subr.bf16.mxu0 0
        %1035 = vmatpush1.bf16.xpose.msra.mxu0 0
        %1036 = vmatprep.subr.bf16.mxu0 0
        %1037 = vmatpush1.bf16.xpose.msra.mxu0 0
        %1038 = vmatprep.subr.bf16.mxu0 0
        %1039 = vmatpush1.bf16.xpose.msra.mxu0 0
        %1040 = vmatprep.subr.bf16.mxu0 0
        %1041 = vmatpush1.bf16.xpose.msra.mxu0 %v1024
        %1042 = vmatprep.subr.bf16.mxu0 0
        %1043 = vmatpush2.bf16.xpose.msra.mxu0 0
        %1044 = vmatprep.subr.bf16.mxu0 0
        %1045 = vmatpush2.bf16.xpose.msra.mxu0 0
        %1046 = vmatprep.subr.bf16.mxu0 0
        %1047 = vmatpush2.bf16.xpose.msra.mxu0 0
        %1048 = vmatprep.subr.bf16.mxu0 0
        %1049 = vmatpush2.bf16.xpose.msra.mxu0 0
        %1050 = vmatprep.subr.bf16.mxu0 0
        %1051 = vmatpush2.bf16.xpose.msra.mxu0 0
        %1052 = vmatprep.subr.bf16.mxu0 0
        %1053 = vmatpush2.bf16.xpose.msra.mxu0 0
        %1054 = vmatprep.subr.bf16.mxu0 0
        %1055 = vmatpush2.bf16.xpose.msra.mxu0 0
        %1056 = vmatprep.subr.bf16.mxu0 0
        %1057 = vmatpush2.bf16.xpose.msra.mxu0 0
        %1058 = vmatprep.mubr.bf16.mxu0 0
        %1059 = vmatmul.mubr.bf16.gmra.mxu0 %v1021
        %v1060 = vpop.f32.mrf.mxu0
        %v1061 = vadd.f32 0.0, %v1060
        %v1062 = vpop.f32.mrf.mxu0
        %v1063 = vpop.f32.mrf.mxu0
        %v1064 = vpop.f32.mrf.mxu0
        %1065 = vdwg.mxu0
        %v1066 = vmul.f32 %v1061, 0.25
        %vm1067 = vcmask 64512
        %v1068 = vsel %vm1067, %v1066, -inf
        %1069 = vmax.xlane.f32.xlu0 %v1068
        %v1070 = vpop.xlane.xlu0 %1069
        %v1071 = vsub.f32 %v1066, %v1070
        %v1072 = vmul.f32 %v1071, 1.442695
        %v1073 = vpow.pop %v1072
        %v1074 = vsel %vm1067, %v1073, 0.0
        %1075 = vadd.xlane.f32.xlu0 %v1074
        %v1076 = vpop.xlane.xlu0 %1075
        %v1077 = vrcp.pop %v1076
        %v1078 = vmul.f32 %v1073, %v1077
        %v1079 = vpack.c.bf16 %v1078, %v1078
        %v1080 = vpack.c.bf16 %v1012, %v1012
        %v1082 = vsel %vm1067, %v1079, 0
        %vm1084 = vcmask 1043456
        %v1086 = vsel %vm1084, %v1080, 0
        %1088 = vmatprep.subr.bf16.mxu0 0
        %1089 = vmatpush1.bf16.msra.mxu0 0
        %1090 = vmatprep.subr.bf16.mxu0 0
        %1091 = vmatpush1.bf16.msra.mxu0 0
        %1092 = vmatprep.subr.bf16.mxu0 0
        %1093 = vmatpush1.bf16.msra.mxu0 0
        %1094 = vmatprep.subr.bf16.mxu0 0
        %1095 = vmatpush1.bf16.msra.mxu0 0
        %1096 = vmatprep.subr.bf16.mxu0 0
        %1097 = vmatpush1.bf16.msra.mxu0 0
        %1098 = vmatprep.subr.bf16.mxu0 0
        %1099 = vmatpush1.bf16.msra.mxu0 0
        %1100 = vmatprep.subr.bf16.mxu0 0
        %1101 = vmatpush1.bf16.msra.mxu0 0
        %1102 = vmatprep.subr.bf16.mxu0 0
        %1103 = vmatpush1.bf16.msra.mxu0 %v1086
        %1104 = vmatprep.subr.bf16.mxu0 0
        %1105 = vmatpush2.bf16.msra.mxu0 0
        %1106 = vmatprep.subr.bf16.mxu0 0
        %1107 = vmatpush2.bf16.msra.mxu0 0
        %1108 = vmatprep.subr.bf16.mxu0 0
        %1109 = vmatpush2.bf16.msra.mxu0 0
        %1110 = vmatprep.subr.bf16.mxu0 0
        %1111 = vmatpush2.bf16.msra.mxu0 0
        %1112 = vmatprep.subr.bf16.mxu0 0
        %1113 = vmatpush2.bf16.msra.mxu0 0
        %1114 = vmatprep.subr.bf16.mxu0 0
        %1115 = vmatpush2.bf16.msra.mxu0 0
        %1116 = vmatprep.subr.bf16.mxu0 0
        %1117 = vmatpush2.bf16.msra.mxu0 0
        %1118 = vmatprep.subr.bf16.mxu0 0
        %1119 = vmatpush2.bf16.msra.mxu0 0
        %1120 = vmatprep.mubr.bf16.mxu0 0
        %1121 = vmatmul.mubr.bf16.gmra.mxu0 %v1082
        %v1122 = vpop.f32.mrf.mxu0
        %v1123 = vadd.f32 0.0, %v1122
        %v1124 = vpop.f32.mrf.mxu0
        %v1125 = vpop.f32.mrf.mxu0
        %v1126 = vpop.f32.mrf.mxu0
        %1127 = vdwg.mxu0
        %v1128 = vpack.c.bf16 %v1123, %v1123
        %v1129 = vlaneseq
        %v1130 = vshrl.u32 %v1129, 7
        %v1131 = vsub.s32 1, %v1130
        %v1132 = vrot.slane %v843, %v1131
        %v1137 = vunpack.c.l.b16 %v819
        %v1138 = vunpack.c.l.b16 %v820
        %v1139 = vunpack.c.l.b16 %v821
        %v1140 = vunpack.c.l.b16 %v822
        %v1141 = vpack.c.b16 %v1138, %v1137
        %v1142 = vpack.c.b16 %v1140, %v1139
        %1145 = vmatprep.subr.bf16.mxu0 0
        %1146 = vmatpush1.bf16.msra.mxu0 0
        %1147 = vmatprep.subr.bf16.mxu0 0
        %1148 = vmatpush1.bf16.msra.mxu0 0
        %1149 = vmatprep.subr.bf16.mxu0 0
        %1150 = vmatpush1.bf16.msra.mxu0 0
        %1151 = vmatprep.subr.bf16.mxu0 0
        %1152 = vmatpush1.bf16.msra.mxu0 0
        %1153 = vmatprep.subr.bf16.mxu0 0
        %1154 = vmatpush1.bf16.msra.mxu0 0
        %1155 = vmatprep.subr.bf16.mxu0 0
        %1156 = vmatpush1.bf16.msra.mxu0 0
        %1157 = vmatprep.subr.bf16.mxu0 0
        %1158 = vmatpush1.bf16.msra.mxu0 %v1142
        %1159 = vmatprep.subr.bf16.mxu0 0
        %1160 = vmatpush1.bf16.msra.mxu0 %v1141
        %1161 = vmatprep.subr.bf16.mxu0 0
        %1162 = vmatpush2.bf16.msra.mxu0 0
        %1163 = vmatprep.subr.bf16.mxu0 0
        %1164 = vmatpush2.bf16.msra.mxu0 0
        %1165 = vmatprep.subr.bf16.mxu0 0
        %1166 = vmatpush2.bf16.msra.mxu0 0
        %1167 = vmatprep.subr.bf16.mxu0 0
        %1168 = vmatpush2.bf16.msra.mxu0 0
        %1169 = vmatprep.subr.bf16.mxu0 0
        %1170 = vmatpush2.bf16.msra.mxu0 0
        %1171 = vmatprep.subr.bf16.mxu0 0
        %1172 = vmatpush2.bf16.msra.mxu0 0
        %1173 = vmatprep.subr.bf16.mxu0 0
        %1174 = vmatpush2.bf16.msra.mxu0 0
        %1175 = vmatprep.subr.bf16.mxu0 0
        %1176 = vmatpush2.bf16.msra.mxu0 0
        %1177 = vmatprep.mubr.bf16.mxu0 0
        %1178 = vmatmul.mubr.bf16.gmra.mxu0 %v863
        %v1179 = vpop.f32.mrf.mxu0
        %v1180 = vadd.f32 %v1132, %v1179
        %v1181 = vpop.f32.mrf.mxu0
        %v1182 = vpop.f32.mrf.mxu0
        %v1183 = vpop.f32.mrf.mxu0
        %1184 = vdwg.mxu0
        %v1185 = vlaneseq
        %v1186 = vshrl.u32 %v1185, 7
        %v1187 = vsub.s32 1, %v1186
        %v1188 = vrot.slane %v844, %v1187
        %v1193 = vunpack.c.l.b16 %v827
        %v1194 = vunpack.c.l.b16 %v828
        %v1195 = vunpack.c.l.b16 %v829
        %v1196 = vunpack.c.l.b16 %v830
        %v1197 = vpack.c.b16 %v1194, %v1193
        %v1198 = vpack.c.b16 %v1196, %v1195
        %1201 = vmatprep.subr.bf16.mxu0 0
        %1202 = vmatpush1.bf16.msra.mxu0 0
        %1203 = vmatprep.subr.bf16.mxu0 0
        %1204 = vmatpush1.bf16.msra.mxu0 0
        %1205 = vmatprep.subr.bf16.mxu0 0
        %1206 = vmatpush1.bf16.msra.mxu0 0
        %1207 = vmatprep.subr.bf16.mxu0 0
        %1208 = vmatpush1.bf16.msra.mxu0 0
        %1209 = vmatprep.subr.bf16.mxu0 0
        %1210 = vmatpush1.bf16.msra.mxu0 0
        %1211 = vmatprep.subr.bf16.mxu0 0
        %1212 = vmatpush1.bf16.msra.mxu0 0
        %1213 = vmatprep.subr.bf16.mxu0 0
        %1214 = vmatpush1.bf16.msra.mxu0 %v1198
        %1215 = vmatprep.subr.bf16.mxu0 0
        %1216 = vmatpush1.bf16.msra.mxu0 %v1197
        %1217 = vmatprep.subr.bf16.mxu0 0
        %1218 = vmatpush2.bf16.msra.mxu0 0
        %1219 = vmatprep.subr.bf16.mxu0 0
        %1220 = vmatpush2.bf16.msra.mxu0 0
        %1221 = vmatprep.subr.bf16.mxu0 0
        %1222 = vmatpush2.bf16.msra.mxu0 0
        %1223 = vmatprep.subr.bf16.mxu0 0
        %1224 = vmatpush2.bf16.msra.mxu0 0
        %1225 = vmatprep.subr.bf16.mxu0 0
        %1226 = vmatpush2.bf16.msra.mxu0 0
        %1227 = vmatprep.subr.bf16.mxu0 0
        %1228 = vmatpush2.bf16.msra.mxu0 0
        %1229 = vmatprep.subr.bf16.mxu0 0
        %1230 = vmatpush2.bf16.msra.mxu0 0
        %1231 = vmatprep.subr.bf16.mxu0 0
        %1232 = vmatpush2.bf16.msra.mxu0 0
        %1233 = vmatprep.mubr.bf16.mxu0 0
        %1234 = vmatmul.mubr.bf16.gmra.mxu0 %v863
        %v1235 = vpop.f32.mrf.mxu0
        %v1236 = vadd.f32 %v1188, %v1235
        %v1237 = vpop.f32.mrf.mxu0
        %v1238 = vpop.f32.mrf.mxu0
        %v1239 = vpop.f32.mrf.mxu0
        %1240 = vdwg.mxu0
        %v1241 = vlaneseq
        %v1242 = vshrl.u32 %v1241, 7
        %v1243 = vsub.s32 1, %v1242
        %v1244 = vrot.slane %v845, %v1243
        %v1249 = vunpack.c.l.b16 %v835
        %v1250 = vunpack.c.l.b16 %v836
        %v1251 = vunpack.c.l.b16 %v837
        %v1252 = vunpack.c.l.b16 %v838
        %v1253 = vpack.c.b16 %v1250, %v1249
        %v1254 = vpack.c.b16 %v1252, %v1251
        %1257 = vmatprep.subr.bf16.mxu0 0
        %1258 = vmatpush1.bf16.msra.mxu0 0
        %1259 = vmatprep.subr.bf16.mxu0 0
        %1260 = vmatpush1.bf16.msra.mxu0 0
        %1261 = vmatprep.subr.bf16.mxu0 0
        %1262 = vmatpush1.bf16.msra.mxu0 0
        %1263 = vmatprep.subr.bf16.mxu0 0
        %1264 = vmatpush1.bf16.msra.mxu0 0
        %1265 = vmatprep.subr.bf16.mxu0 0
        %1266 = vmatpush1.bf16.msra.mxu0 0
        %1267 = vmatprep.subr.bf16.mxu0 0
        %1268 = vmatpush1.bf16.msra.mxu0 0
        %1269 = vmatprep.subr.bf16.mxu0 0
        %1270 = vmatpush1.bf16.msra.mxu0 %v1254
        %1271 = vmatprep.subr.bf16.mxu0 0
        %1272 = vmatpush1.bf16.msra.mxu0 %v1253
        %1273 = vmatprep.subr.bf16.mxu0 0
        %1274 = vmatpush2.bf16.msra.mxu0 0
        %1275 = vmatprep.subr.bf16.mxu0 0
        %1276 = vmatpush2.bf16.msra.mxu0 0
        %1277 = vmatprep.subr.bf16.mxu0 0
        %1278 = vmatpush2.bf16.msra.mxu0 0
        %1279 = vmatprep.subr.bf16.mxu0 0
        %1280 = vmatpush2.bf16.msra.mxu0 0
        %1281 = vmatprep.subr.bf16.mxu0 0
        %1282 = vmatpush2.bf16.msra.mxu0 0
        %1283 = vmatprep.subr.bf16.mxu0 0
        %1284 = vmatpush2.bf16.msra.mxu0 0
        %1285 = vmatprep.subr.bf16.mxu0 0
        %1286 = vmatpush2.bf16.msra.mxu0 0
        %1287 = vmatprep.subr.bf16.mxu0 0
        %1288 = vmatpush2.bf16.msra.mxu0 0
        %1289 = vmatprep.mubr.bf16.mxu0 0
        %1290 = vmatmul.mubr.bf16.gmra.mxu0 %v863
        %v1291 = vpop.f32.mrf.mxu0
        %v1292 = vadd.f32 %v1244, %v1291
        %v1293 = vpop.f32.mrf.mxu0
        %v1294 = vpop.f32.mrf.mxu0
        %v1295 = vpop.f32.mrf.mxu0
        %1296 = vdwg.mxu0
        %v1297 = vpack.c.bf16 %v1180, %v1180
        %v1298 = vpack.c.bf16 %v1236, %v1236
        %v1300 = vsel %vm1019, %v1297, 0
        %v1303 = vsel %vm1019, %v1298, 0
        %1305 = vmatprep.subr.bf16.mxu0 0
        %1306 = vmatpush1.bf16.xpose.msra.mxu0 0
        %1307 = vmatprep.subr.bf16.mxu0 0
        %1308 = vmatpush1.bf16.xpose.msra.mxu0 0
        %1309 = vmatprep.subr.bf16.mxu0 0
        %1310 = vmatpush1.bf16.xpose.msra.mxu0 0
        %1311 = vmatprep.subr.bf16.mxu0 0
        %1312 = vmatpush1.bf16.xpose.msra.mxu0 0
        %1313 = vmatprep.subr.bf16.mxu0 0
        %1314 = vmatpush1.bf16.xpose.msra.mxu0 0
        %1315 = vmatprep.subr.bf16.mxu0 0
        %1316 = vmatpush1.bf16.xpose.msra.mxu0 0
        %1317 = vmatprep.subr.bf16.mxu0 0
        %1318 = vmatpush1.bf16.xpose.msra.mxu0 0
        %1319 = vmatprep.subr.bf16.mxu0 0
        %1320 = vmatpush1.bf16.xpose.msra.mxu0 %v1303
        %1321 = vmatprep.subr.bf16.mxu0 0
        %1322 = vmatpush2.bf16.xpose.msra.mxu0 0
        %1323 = vmatprep.subr.bf16.mxu0 0
        %1324 = vmatpush2.bf16.xpose.msra.mxu0 0
        %1325 = vmatprep.subr.bf16.mxu0 0
        %1326 = vmatpush2.bf16.xpose.msra.mxu0 0
        %1327 = vmatprep.subr.bf16.mxu0 0
        %1328 = vmatpush2.bf16.xpose.msra.mxu0 0
        %1329 = vmatprep.subr.bf16.mxu0 0
        %1330 = vmatpush2.bf16.xpose.msra.mxu0 0
        %1331 = vmatprep.subr.bf16.mxu0 0
        %1332 = vmatpush2.bf16.xpose.msra.mxu0 0
        %1333 = vmatprep.subr.bf16.mxu0 0
        %1334 = vmatpush2.bf16.xpose.msra.mxu0 0
        %1335 = vmatprep.subr.bf16.mxu0 0
        %1336 = vmatpush2.bf16.xpose.msra.mxu0 0
        %1337 = vmatprep.mubr.bf16.mxu0 0
        %1338 = vmatmul.mubr.bf16.gmra.mxu0 %v1300
        %v1339 = vpop.f32.mrf.mxu0
        %v1340 = vadd.f32 0.0, %v1339
        %v1341 = vpop.f32.mrf.mxu0
        %v1342 = vpop.f32.mrf.mxu0
        %v1343 = vpop.f32.mrf.mxu0
        %1344 = vdwg.mxu0
        %v1345 = vmul.f32 %v1340, 0.25
        %v1346 = vsel %vm1067, %v1345, -inf
        %1347 = vmax.xlane.f32.xlu0 %v1346
        %v1348 = vpop.xlane.xlu0 %1347
        %v1349 = vsub.f32 %v1345, %v1348
        %v1350 = vmul.f32 %v1349, 1.442695
        %v1351 = vpow.pop %v1350
        %v1352 = vsel %vm1067, %v1351, 0.0
        %1353 = vadd.xlane.f32.xlu0 %v1352
        %v1354 = vpop.xlane.xlu0 %1353
        %v1355 = vrcp.pop %v1354
        %v1356 = vmul.f32 %v1351, %v1355
        %v1357 = vpack.c.bf16 %v1356, %v1356
        %v1358 = vpack.c.bf16 %v1292, %v1292
        %v1360 = vsel %vm1067, %v1357, 0
        %v1363 = vsel %vm1084, %v1358, 0
        %1365 = vmatprep.subr.bf16.mxu0 0
        %1366 = vmatpush1.bf16.msra.mxu0 0
        %1367 = vmatprep.subr.bf16.mxu0 0
        %1368 = vmatpush1.bf16.msra.mxu0 0
        %1369 = vmatprep.subr.bf16.mxu0 0
        %1370 = vmatpush1.bf16.msra.mxu0 0
        %1371 = vmatprep.subr.bf16.mxu0 0
        %1372 = vmatpush1.bf16.msra.mxu0 0
        %1373 = vmatprep.subr.bf16.mxu0 0
        %1374 = vmatpush1.bf16.msra.mxu0 0
        %1375 = vmatprep.subr.bf16.mxu0 0
        %1376 = vmatpush1.bf16.msra.mxu0 0
        %1377 = vmatprep.subr.bf16.mxu0 0
        %1378 = vmatpush1.bf16.msra.mxu0 0
        %1379 = vmatprep.subr.bf16.mxu0 0
        %1380 = vmatpush1.bf16.msra.mxu0 %v1363
        %1381 = vmatprep.subr.bf16.mxu0 0
        %1382 = vmatpush2.bf16.msra.mxu0 0
        %1383 = vmatprep.subr.bf16.mxu0 0
        %1384 = vmatpush2.bf16.msra.mxu0 0
        %1385 = vmatprep.subr.bf16.mxu0 0
        %1386 = vmatpush2.bf16.msra.mxu0 0
        %1387 = vmatprep.subr.bf16.mxu0 0
        %1388 = vmatpush2.bf16.msra.mxu0 0
        %1389 = vmatprep.subr.bf16.mxu0 0
        %1390 = vmatpush2.bf16.msra.mxu0 0
        %1391 = vmatprep.subr.bf16.mxu0 0
        %1392 = vmatpush2.bf16.msra.mxu0 0
        %1393 = vmatprep.subr.bf16.mxu0 0
        %1394 = vmatpush2.bf16.msra.mxu0 0
        %1395 = vmatprep.subr.bf16.mxu0 0
        %1396 = vmatpush2.bf16.msra.mxu0 0
        %1397 = vmatprep.mubr.bf16.mxu0 0
        %1398 = vmatmul.mubr.bf16.gmra.mxu0 %v1360
        %v1399 = vpop.f32.mrf.mxu0
        %v1400 = vadd.f32 0.0, %v1399
        %v1401 = vpop.f32.mrf.mxu0
        %v1402 = vpop.f32.mrf.mxu0
        %v1403 = vpop.f32.mrf.mxu0
        %1404 = vdwg.mxu0
        %v1405 = vpack.c.bf16 %v1400, %v1400
        %v1408 = vunpack.c.l.b16 %v841
        %v1409 = vunpack.c.l.b16 %v842
        %v1410 = vpack.c.b16 %v1409, %v1408
        %v1413 = vsel %vm1019, %v1405, 0
        %1415 = vmatprep.subr.bf16.mxu0 0
        %1416 = vmatpush1.bf16.msra.mxu0 0
        %1417 = vmatprep.subr.bf16.mxu0 0
        %1418 = vmatpush1.bf16.msra.mxu0 0
        %1419 = vmatprep.subr.bf16.mxu0 0
        %1420 = vmatpush1.bf16.msra.mxu0 0
        %1421 = vmatprep.subr.bf16.mxu0 0
        %1422 = vmatpush1.bf16.msra.mxu0 0
        %1423 = vmatprep.subr.bf16.mxu0 0
        %1424 = vmatpush1.bf16.msra.mxu0 0
        %1425 = vmatprep.subr.bf16.mxu0 0
        %1426 = vmatpush1.bf16.msra.mxu0 0
        %1427 = vmatprep.subr.bf16.mxu0 0
        %1428 = vmatpush1.bf16.msra.mxu0 0
        %1429 = vmatprep.subr.bf16.mxu0 0
        %1430 = vmatpush1.bf16.msra.mxu0 %v1410
        %1431 = vmatprep.subr.bf16.mxu0 0
        %1432 = vmatpush2.bf16.msra.mxu0 0
        %1433 = vmatprep.subr.bf16.mxu0 0
        %1434 = vmatpush2.bf16.msra.mxu0 0
        %1435 = vmatprep.subr.bf16.mxu0 0
        %1436 = vmatpush2.bf16.msra.mxu0 0
        %1437 = vmatprep.subr.bf16.mxu0 0
        %1438 = vmatpush2.bf16.msra.mxu0 0
        %1439 = vmatprep.subr.bf16.mxu0 0
        %1440 = vmatpush2.bf16.msra.mxu0 0
        %1441 = vmatprep.subr.bf16.mxu0 0
        %1442 = vmatpush2.bf16.msra.mxu0 0
        %1443 = vmatprep.subr.bf16.mxu0 0
        %1444 = vmatpush2.bf16.msra.mxu0 0
        %1445 = vmatprep.subr.bf16.mxu0 0
        %1446 = vmatpush2.bf16.msra.mxu0 0
        %1447 = vmatprep.mubr.bf16.mxu0 0
        %1448 = vmatmul.mubr.bf16.gmra.mxu0 %v1413
        %v1449 = vpop.f32.mrf.mxu0
        %v1450 = vadd.f32 0.0, %v1449
        %v1451 = vpop.f32.mrf.mxu0
        %v1452 = vpop.f32.mrf.mxu0
        %v1453 = vpop.f32.mrf.mxu0
        %1454 = vdwg.mxu0
        %v1457 = vunpack.c.l.b16 %v839
        %v1458 = vunpack.c.l.b16 %v840
        %v1459 = vpack.c.b16 %v1458, %v1457
        %v1462 = vsel %vm1019, %v1128, 0
        %1464 = vmatprep.subr.bf16.mxu0 0
        %1465 = vmatpush1.bf16.msra.mxu0 0
        %1466 = vmatprep.subr.bf16.mxu0 0
        %1467 = vmatpush1.bf16.msra.mxu0 0
        %1468 = vmatprep.subr.bf16.mxu0 0
        %1469 = vmatpush1.bf16.msra.mxu0 0
        %1470 = vmatprep.subr.bf16.mxu0 0
        %1471 = vmatpush1.bf16.msra.mxu0 0
        %1472 = vmatprep.subr.bf16.mxu0 0
        %1473 = vmatpush1.bf16.msra.mxu0 0
        %1474 = vmatprep.subr.bf16.mxu0 0
        %1475 = vmatpush1.bf16.msra.mxu0 0
        %1476 = vmatprep.subr.bf16.mxu0 0
        %1477 = vmatpush1.bf16.msra.mxu0 0
        %1478 = vmatprep.subr.bf16.mxu0 0
        %1479 = vmatpush1.bf16.msra.mxu0 %v1459
        %1480 = vmatprep.subr.bf16.mxu0 0
        %1481 = vmatpush2.bf16.msra.mxu0 0
        %1482 = vmatprep.subr.bf16.mxu0 0
        %1483 = vmatpush2.bf16.msra.mxu0 0
        %1484 = vmatprep.subr.bf16.mxu0 0
        %1485 = vmatpush2.bf16.msra.mxu0 0
        %1486 = vmatprep.subr.bf16.mxu0 0
        %1487 = vmatpush2.bf16.msra.mxu0 0
        %1488 = vmatprep.subr.bf16.mxu0 0
        %1489 = vmatpush2.bf16.msra.mxu0 0
        %1490 = vmatprep.subr.bf16.mxu0 0
        %1491 = vmatpush2.bf16.msra.mxu0 0
        %1492 = vmatprep.subr.bf16.mxu0 0
        %1493 = vmatpush2.bf16.msra.mxu0 0
        %1494 = vmatprep.subr.bf16.mxu0 0
        %1495 = vmatpush2.bf16.msra.mxu0 0
        %1496 = vmatprep.mubr.bf16.mxu0 0
        %1497 = vmatmul.mubr.bf16.gmra.mxu0 %v1462
        %v1498 = vpop.f32.mrf.mxu0
        %v1499 = vadd.f32 %v1450, %v1498
        %v1500 = vpop.f32.mrf.mxu0
        %v1501 = vpop.f32.mrf.mxu0
        %v1502 = vpop.f32.mrf.mxu0
        %1503 = vdwg.mxu0
        %v1504 = vld [vmem:[%s13] sm:$0x1]
        %v1506 = vlaneseq
        %v1507 = vshrl.u32 %v1506, 7
        %v1508 = vsub.s32 0, %v1507
        %v1509 = vrot.slane %v1504, %v1508
        %v1511 = vadd.f32 %v1499, %v1509
        %v1512 = vadd.f32 %v813, %v1511
        %v1513 = vld [vmem:[%s14] sm:$0x1]
        %v1514 = vld [vmem:[%s15] sm:$0x1]
        %v1515 = vsel %vm785, %v1512, 0.0
        %1516 = vadd.xlane.f32.xlu0 %v1515
        %v1517 = vpop.xlane.xlu0 %1516
        %v1518 = vmul.f32 %v1517, %v789
        %v1519 = vsub.f32 %v1512, %v1518
        %v1520 = vmul.f32 %v1519, %v1519
        %v1521 = vsel %vm785, %v1520, 0.0
        %1522 = vadd.xlane.f32.xlu0 %v1521
        %v1523 = vpop.xlane.xlu0 %1522
        %v1524 = vmul.f32 %v1523, %v789
        %v1525 = vadd.f32 %v1524, 1e-12
        %v1526 = vrsqrt.pop %v1525
        %v1527 = vmul.f32 %v1519, %v1526
        %v1529 = vlaneseq
        %v1530 = vshrl.u32 %v1529, 7
        %v1531 = vsub.s32 0, %v1530
        %v1532 = vrot.slane %v1513, %v1531
        %v1534 = vmul.f32 %v1527, %v1532
        %v1536 = vlaneseq
        %v1537 = vshrl.u32 %v1536, 7
        %v1538 = vsub.s32 0, %v1537
        %v1539 = vrot.slane %v1514, %v1538
        %v1541 = vadd.f32 %v1534, %v1539
        %v1542 = vpack.c.bf16 %v1541, %v1541
        %v1543 = vld [vmem:[%s16] sm:$0xf]
        %v1544 = vld [vmem:[%s16 + $0x4] sm:$0xf]
        %v1545 = vld [vmem:[%s16 + $0x8] sm:$0xf]
        %v1546 = vld [vmem:[%s16 + $0xc] sm:$0xf]
        %v1547 = vld [vmem:[%s17] sm:$0x1]
        %v1549 = vlaneseq
        %v1550 = vshrl.u32 %v1549, 7
        %v1551 = vsub.s32 0, %v1550
        %v1552 = vrot.slane %v1547, %v1551
        %v1558 = vunpack.c.l.b16 %v1543
        %v1559 = vunpack.c.l.b16 %v1544
        %v1560 = vunpack.c.l.b16 %v1545
        %v1561 = vunpack.c.l.b16 %v1546
        %v1562 = vpack.c.b16 %v1559, %v1558
        %v1563 = vpack.c.b16 %v1561, %v1560
        %v1567 = vsel %vm785, %v1542, 0
        %1569 = vmatprep.subr.bf16.mxu0 0
        %1570 = vmatpush1.bf16.msra.mxu0 0
        %1571 = vmatprep.subr.bf16.mxu0 0
        %1572 = vmatpush1.bf16.msra.mxu0 0
        %1573 = vmatprep.subr.bf16.mxu0 0
        %1574 = vmatpush1.bf16.msra.mxu0 0
        %1575 = vmatprep.subr.bf16.mxu0 0
        %1576 = vmatpush1.bf16.msra.mxu0 0
        %1577 = vmatprep.subr.bf16.mxu0 0
        %1578 = vmatpush1.bf16.msra.mxu0 0
        %1579 = vmatprep.subr.bf16.mxu0 0
        %1580 = vmatpush1.bf16.msra.mxu0 0
        %1581 = vmatprep.subr.bf16.mxu0 0
        %1582 = vmatpush1.bf16.msra.mxu0 %v1563
        %1583 = vmatprep.subr.bf16.mxu0 0
        %1584 = vmatpush1.bf16.msra.mxu0 %v1562
        %1585 = vmatprep.subr.bf16.mxu0 0
        %1586 = vmatpush2.bf16.msra.mxu0 0
        %1587 = vmatprep.subr.bf16.mxu0 0
        %1588 = vmatpush2.bf16.msra.mxu0 0
        %1589 = vmatprep.subr.bf16.mxu0 0
        %1590 = vmatpush2.bf16.msra.mxu0 0
        %1591 = vmatprep.subr.bf16.mxu0 0
        %1592 = vmatpush2.bf16.msra.mxu0 0
        %1593 = vmatprep.subr.bf16.mxu0 0
        %1594 = vmatpush2.bf16.msra.mxu0 0
        %1595 = vmatprep.subr.bf16.mxu0 0
        %1596 = vmatpush2.bf16.msra.mxu0 0
        %1597 = vmatprep.subr.bf16.mxu0 0
        %1598 = vmatpush2.bf16.msra.mxu0 0
        %1599 = vmatprep.subr.bf16.mxu0 0
        %1600 = vmatpush2.bf16.msra.mxu0 0
        %1601 = vmatprep.mubr.bf16.mxu0 0
        %1602 = vmatmul.mubr.bf16.gmra.mxu0 %v1567
        %v1603 = vpop.f32.mrf.mxu0
        %v1604 = vadd.f32 %v1552, %v1603
        %v1605 = vpop.f32.mrf.mxu0
        %v1606 = vpop.f32.mrf.mxu0
        %v1607 = vpop.f32.mrf.mxu0
        %1608 = vdwg.mxu0
        %v1609 = vmul.f32 %v1604, 0.5
        %v1610 = vmul.f32 %v1604, 0.044715
        %v1611 = vmul.f32 %v1610, %v1604
        %v1612 = vmul.f32 %v1611, %v1604
        %v1613 = vadd.f32 %v1604, %v1612
        %v1614 = vmul.f32 %v1613, 0.7978846
        %v1615 = vtanh.pop %v1614
        %v1616 = vadd.f32 %v1615, 1.0
        %v1617 = vmul.f32 %v1609, %v1616
        %v1618 = vpack.c.bf16 %v1617, %v1617
        %v1619 = vld [vmem:[%s18] sm:$0xf]
        %v1620 = vld [vmem:[%s18 + $0x4] sm:$0xf]
        %v1621 = vld [vmem:[%s18 + $0x8] sm:$0xf]
        %v1622 = vld [vmem:[%s18 + $0xc] sm:$0xf]
        %v1623 = vld [vmem:[%s18 + $0x10] sm:$0xf]
        %v1624 = vld [vmem:[%s18 + $0x14] sm:$0xf]
        %v1625 = vld [vmem:[%s18 + $0x18] sm:$0xf]
        %v1626 = vld [vmem:[%s18 + $0x1c] sm:$0xf]
        %v1627 = vld [vmem:[%s19] sm:$0x1]
        %v1629 = vlaneseq
        %v1630 = vshrl.u32 %v1629, 7
        %v1631 = vsub.s32 0, %v1630
        %v1632 = vrot.slane %v1627, %v1631
        %v1642 = vunpack.c.l.b16 %v1619
        %v1643 = vunpack.c.l.b16 %v1620
        %v1644 = vunpack.c.l.b16 %v1621
        %v1645 = vunpack.c.l.b16 %v1622
        %v1646 = vunpack.c.l.b16 %v1623
        %v1647 = vunpack.c.l.b16 %v1624
        %v1648 = vunpack.c.l.b16 %v1625
        %v1649 = vunpack.c.l.b16 %v1626
        %v1650 = vpack.c.b16 %v1643, %v1642
        %v1651 = vpack.c.b16 %v1645, %v1644
        %v1652 = vpack.c.b16 %v1647, %v1646
        %v1653 = vpack.c.b16 %v1649, %v1648
        %vm1658 = vcmask 523264
        %v1660 = vsel %vm1658, %v1618, 0
        %1662 = vmatprep.subr.bf16.mxu0 0
        %1663 = vmatpush1.bf16.msra.mxu0 0
        %1664 = vmatprep.subr.bf16.mxu0 0
        %1665 = vmatpush1.bf16.msra.mxu0 0
        %1666 = vmatprep.subr.bf16.mxu0 0
        %1667 = vmatpush1.bf16.msra.mxu0 0
        %1668 = vmatprep.subr.bf16.mxu0 0
        %1669 = vmatpush1.bf16.msra.mxu0 0
        %1670 = vmatprep.subr.bf16.mxu0 0
        %1671 = vmatpush1.bf16.msra.mxu0 %v1653
        %1672 = vmatprep.subr.bf16.mxu0 0
        %1673 = vmatpush1.bf16.msra.mxu0 %v1652
        %1674 = vmatprep.subr.bf16.mxu0 0
        %1675 = vmatpush1.bf16.msra.mxu0 %v1651
        %1676 = vmatprep.subr.bf16.mxu0 0
        %1677 = vmatpush1.bf16.msra.mxu0 %v1650
        %1678 = vmatprep.subr.bf16.mxu0 0
        %1679 = vmatpush2.bf16.msra.mxu0 0
        %1680 = vmatprep.subr.bf16.mxu0 0
        %1681 = vmatpush2.bf16.msra.mxu0 0
        %1682 = vmatprep.subr.bf16.mxu0 0
        %1683 = vmatpush2.bf16.msra.mxu0 0
        %1684 = vmatprep.subr.bf16.mxu0 0
        %1685 = vmatpush2.bf16.msra.mxu0 0
        %1686 = vmatprep.subr.bf16.mxu0 0
        %1687 = vmatpush2.bf16.msra.mxu0 0
        %1688 = vmatprep.subr.bf16.mxu0 0
        %1689 = vmatpush2.bf16.msra.mxu0 0
        %1690 = vmatprep.subr.bf16.mxu0 0
        %1691 = vmatpush2.bf16.msra.mxu0 0
        %1692 = vmatprep.subr.bf16.mxu0 0
        %1693 = vmatpush2.bf16.msra.mxu0 0
        %1694 = vmatprep.mubr.bf16.mxu0 0
        %1695 = vmatmul.mubr.bf16.gmra.mxu0 %v1660
        %v1696 = vpop.f32.mrf.mxu0
        %v1697 = vadd.f32 %v1632, %v1696
        %v1698 = vpop.f32.mrf.mxu0
        %v1699 = vpop.f32.mrf.mxu0
        %v1700 = vpop.f32.mrf.mxu0
        %1701 = vdwg.mxu0
        %v1702 = vadd.f32 %v1541, %v1697
        %v1703 = vld [vmem:[%s20] sm:$0x1]
        %v1704 = vld [vmem:[%s21] sm:$0x1]
        %v1705 = vsel %vm785, %v1702, 0.0
        %1706 = vadd.xlane.f32.xlu0 %v1705
        %v1707 = vpop.xlane.xlu0 %1706
        %v1708 = vmul.f32 %v1707, %v789
        %v1709 = vsub.f32 %v1702, %v1708
        %v1710 = vmul.f32 %v1709, %v1709
        %v1711 = vsel %vm785, %v1710, 0.0
        %1712 = vadd.xlane.f32.xlu0 %v1711
        %v1713 = vpop.xlane.xlu0 %1712
        %v1714 = vmul.f32 %v1713, %v789
        %v1715 = vadd.f32 %v1714, 1e-12
        %v1716 = vrsqrt.pop %v1715
        %v1717 = vmul.f32 %v1709, %v1716
        %v1719 = vlaneseq
        %v1720 = vshrl.u32 %v1719, 7
        %v1721 = vsub.s32 0, %v1720
        %v1722 = vrot.slane %v1703, %v1721
        %v1724 = vmul.f32 %v1717, %v1722
        %v1726 = vlaneseq
        %v1727 = vshrl.u32 %v1726, 7
        %v1728 = vsub.s32 0, %v1727
        %v1729 = vrot.slane %v1704, %v1728
        %v1731 = vadd.f32 %v1724, %v1729
        %v1732 = vpack.c.bf16 %v1731, %v1731
        %s1733 = scalar_lea.vmem %s6, 32
        %v1734 = vld [vmem:[%s1733] sm:$0xf]
        %v1735 = vld [vmem:[%s1733 + $0x4] sm:$0xf]
        %v1736 = vld [vmem:[%s1733 + $0x8] sm:$0xf]
        %v1737 = vld [vmem:[%s1733 + $0xc] sm:$0xf]
        %v1738 = vld [vmem:[%s1733 + $0x10] sm:$0xf]
        %v1739 = vld [vmem:[%s1733 + $0x14] sm:$0xf]
        %v1740 = vld [vmem:[%s1733 + $0x18] sm:$0xf]
        %v1741 = vld [vmem:[%s1733 + $0x1c] sm:$0xf]
        %s1742 = scalar_lea.vmem %s8, 32
        %v1743 = vld [vmem:[%s1742] sm:$0xf]
        %v1744 = vld [vmem:[%s1742 + $0x4] sm:$0xf]
        %v1745 = vld [vmem:[%s1742 + $0x8] sm:$0xf]
        %v1746 = vld [vmem:[%s1742 + $0xc] sm:$0xf]
        %v1747 = vld [vmem:[%s1742 + $0x10] sm:$0xf]
        %v1748 = vld [vmem:[%s1742 + $0x14] sm:$0xf]
        %v1749 = vld [vmem:[%s1742 + $0x18] sm:$0xf]
        %v1750 = vld [vmem:[%s1742 + $0x1c] sm:$0xf]
        %s1751 = scalar_lea.vmem %s10, 32
        %v1752 = vld [vmem:[%s1751] sm:$0xf]
        %v1753 = vld [vmem:[%s1751 + $0x4] sm:$0xf]
        %v1754 = vld [vmem:[%s1751 + $0x8] sm:$0xf]
        %v1755 = vld [vmem:[%s1751 + $0xc] sm:$0xf]
        %v1756 = vld [vmem:[%s1751 + $0x10] sm:$0xf]
        %v1757 = vld [vmem:[%s1751 + $0x14] sm:$0xf]
        %v1758 = vld [vmem:[%s1751 + $0x18] sm:$0xf]
        %v1759 = vld [vmem:[%s1751 + $0x1c] sm:$0xf]
        %s1760 = scalar_lea.vmem %s12, 16
        %v1761 = vld [vmem:[%s1760] sm:$0xf]
        %v1762 = vld [vmem:[%s1760 + $0x4] sm:$0xf]
        %v1763 = vld [vmem:[%s1760 + $0x8] sm:$0xf]
        %v1764 = vld [vmem:[%s1760 + $0xc] sm:$0xf]
        %s1765 = scalar_lea.vmem %s7, 2
        %v1766 = vld [vmem:[%s1765] sm:$0x3]
        %s1767 = scalar_lea.vmem %s9, 2
        %v1768 = vld [vmem:[%s1767] sm:$0x3]
        %s1769 = scalar_lea.vmem %s11, 2
        %v1770 = vld [vmem:[%s1769] sm:$0x3]
        %v1771 = vlaneseq
        %v1772 = vshrl.u32 %v1771, 7
        %v1773 = vsub.s32 0, %v1772
        %v1774 = vrot.slane %v1766, %v1773
        %v1779 = vunpack.c.l.b16 %v1734
        %v1780 = vunpack.c.l.b16 %v1735
        %v1781 = vunpack.c.l.b16 %v1736
        %v1782 = vunpack.c.l.b16 %v1737
        %v1783 = vpack.c.b16 %v1780, %v1779
        %v1784 = vpack.c.b16 %v1782, %v1781
        %v1788 = vsel %vm785, %v1732, 0
        %1790 = vmatprep.subr.bf16.mxu0 0
        %1791 = vmatpush1.bf16.msra.mxu0 0
        %1792 = vmatprep.subr.bf16.mxu0 0
        %1793 = vmatpush1.bf16.msra.mxu0 0
        %1794 = vmatprep.subr.bf16.mxu0 0
        %1795 = vmatpush1.bf16.msra.mxu0 0
        %1796 = vmatprep.subr.bf16.mxu0 0
        %1797 = vmatpush1.bf16.msra.mxu0 0
        %1798 = vmatprep.subr.bf16.mxu0 0
        %1799 = vmatpush1.bf16.msra.mxu0 0
        %1800 = vmatprep.subr.bf16.mxu0 0
        %1801 = vmatpush1.bf16.msra.mxu0 0
        %1802 = vmatprep.subr.bf16.mxu0 0
        %1803 = vmatpush1.bf16.msra.mxu0 %v1784
        %1804 = vmatprep.subr.bf16.mxu0 0
        %1805 = vmatpush1.bf16.msra.mxu0 %v1783
        %1806 = vmatprep.subr.bf16.mxu0 0
        %1807 = vmatpush2.bf16.msra.mxu0 0
        %1808 = vmatprep.subr.bf16.mxu0 0
        %1809 = vmatpush2.bf16.msra.mxu0 0
        %1810 = vmatprep.subr.bf16.mxu0 0
        %1811 = vmatpush2.bf16.msra.mxu0 0
        %1812 = vmatprep.subr.bf16.mxu0 0
        %1813 = vmatpush2.bf16.msra.mxu0 0
        %1814 = vmatprep.subr.bf16.mxu0 0
        %1815 = vmatpush2.bf16.msra.mxu0 0
        %1816 = vmatprep.subr.bf16.mxu0 0
        %1817 = vmatpush2.bf16.msra.mxu0 0
        %1818 = vmatprep.subr.bf16.mxu0 0
        %1819 = vmatpush2.bf16.msra.mxu0 0
        %1820 = vmatprep.subr.bf16.mxu0 0
        %1821 = vmatpush2.bf16.msra.mxu0 0
        %1822 = vmatprep.mubr.bf16.mxu0 0
        %1823 = vmatmul.mubr.bf16.gmra.mxu0 %v1788
        %v1824 = vpop.f32.mrf.mxu0
        %v1825 = vadd.f32 %v1774, %v1824
        %v1826 = vpop.f32.mrf.mxu0
        %v1827 = vpop.f32.mrf.mxu0
        %v1828 = vpop.f32.mrf.mxu0
        %1829 = vdwg.mxu0
        %v1830 = vlaneseq
        %v1831 = vshrl.u32 %v1830, 7
        %v1832 = vsub.s32 0, %v1831
        %v1833 = vrot.slane %v1768, %v1832
        %v1838 = vunpack.c.l.b16 %v1743
        %v1839 = vunpack.c.l.b16 %v1744
        %v1840 = vunpack.c.l.b16 %v1745
        %v1841 = vunpack.c.l.b16 %v1746
        %v1842 = vpack.c.b16 %v1839, %v1838
        %v1843 = vpack.c.b16 %v1841, %v1840
        %1846 = vmatprep.subr.bf16.mxu0 0
        %1847 = vmatpush1.bf16.msra.mxu0 0
        %1848 = vmatprep.subr.bf16.mxu0 0
        %1849 = vmatpush1.bf16.msra.mxu0 0
        %1850 = vmatprep.subr.bf16.mxu0 0
        %1851 = vmatpush1.bf16.msra.mxu0 0
        %1852 = vmatprep.subr.bf16.mxu0 0
        %1853 = vmatpush1.bf16.msra.mxu0 0
        %1854 = vmatprep.subr.bf16.mxu0 0
        %1855 = vmatpush1.bf16.msra.mxu0 0
        %1856 = vmatprep.subr.bf16.mxu0 0
        %1857 = vmatpush1.bf16.msra.mxu0 0
        %1858 = vmatprep.subr.bf16.mxu0 0
        %1859 = vmatpush1.bf16.msra.mxu0 %v1843
        %1860 = vmatprep.subr.bf16.mxu0 0
        %1861 = vmatpush1.bf16.msra.mxu0 %v1842
        %1862 = vmatprep.subr.bf16.mxu0 0
        %1863 = vmatpush2.bf16.msra.mxu0 0
        %1864 = vmatprep.subr.bf16.mxu0 0
        %1865 = vmatpush2.bf16.msra.mxu0 0
        %1866 = vmatprep.subr.bf16.mxu0 0
        %1867 = vmatpush2.bf16.msra.mxu0 0
        %1868 = vmatprep.subr.bf16.mxu0 0
        %1869 = vmatpush2.bf16.msra.mxu0 0
        %1870 = vmatprep.subr.bf16.mxu0 0
        %1871 = vmatpush2.bf16.msra.mxu0 0
        %1872 = vmatprep.subr.bf16.mxu0 0
        %1873 = vmatpush2.bf16.msra.mxu0 0
        %1874 = vmatprep.subr.bf16.mxu0 0
        %1875 = vmatpush2.bf16.msra.mxu0 0
        %1876 = vmatprep.subr.bf16.mxu0 0
        %1877 = vmatpush2.bf16.msra.mxu0 0
        %1878 = vmatprep.mubr.bf16.mxu0 0
        %1879 = vmatmul.mubr.bf16.gmra.mxu0 %v1788
        %v1880 = vpop.f32.mrf.mxu0
        %v1881 = vadd.f32 %v1833, %v1880
        %v1882 = vpop.f32.mrf.mxu0
        %v1883 = vpop.f32.mrf.mxu0
        %v1884 = vpop.f32.mrf.mxu0
        %1885 = vdwg.mxu0
        %v1886 = vlaneseq
        %v1887 = vshrl.u32 %v1886, 7
        %v1888 = vsub.s32 0, %v1887
        %v1889 = vrot.slane %v1770, %v1888
        %v1894 = vunpack.c.l.b16 %v1752
        %v1895 = vunpack.c.l.b16 %v1753
        %v1896 = vunpack.c.l.b16 %v1754
        %v1897 = vunpack.c.l.b16 %v1755
        %v1898 = vpack.c.b16 %v1895, %v1894
        %v1899 = vpack.c.b16 %v1897, %v1896
        %1902 = vmatprep.subr.bf16.mxu0 0
        %1903 = vmatpush1.bf16.msra.mxu0 0
        %1904 = vmatprep.subr.bf16.mxu0 0
        %1905 = vmatpush1.bf16.msra.mxu0 0
        %1906 = vmatprep.subr.bf16.mxu0 0
        %1907 = vmatpush1.bf16.msra.mxu0 0
        %1908 = vmatprep.subr.bf16.mxu0 0
        %1909 = vmatpush1.bf16.msra.mxu0 0
        %1910 = vmatprep.subr.bf16.mxu0 0
        %1911 = vmatpush1.bf16.msra.mxu0 0
        %1912 = vmatprep.subr.bf16.mxu0 0
        %1913 = vmatpush1.bf16.msra.mxu0 0
        %1914 = vmatprep.subr.bf16.mxu0 0
        %1915 = vmatpush1.bf16.msra.mxu0 %v1899
        %1916 = vmatprep.subr.bf16.mxu0 0
        %1917 = vmatpush1.bf16.msra.mxu0 %v1898
        %1918 = vmatprep.subr.bf16.mxu0 0
        %1919 = vmatpush2.bf16.msra.mxu0 0
        %1920 = vmatprep.subr.bf16.mxu0 0
        %1921 = vmatpush2.bf16.msra.mxu0 0
        %1922 = vmatprep.subr.bf16.mxu0 0
        %1923 = vmatpush2.bf16.msra.mxu0 0
        %1924 = vmatprep.subr.bf16.mxu0 0
        %1925 = vmatpush2.bf16.msra.mxu0 0
        %1926 = vmatprep.subr.bf16.mxu0 0
        %1927 = vmatpush2.bf16.msra.mxu0 0
        %1928 = vmatprep.subr.bf16.mxu0 0
        %1929 = vmatpush2.bf16.msra.mxu0 0
        %1930 = vmatprep.subr.bf16.mxu0 0
        %1931 = vmatpush2.bf16.msra.mxu0 0
        %1932 = vmatprep.subr.bf16.mxu0 0
        %1933 = vmatpush2.bf16.msra.mxu0 0
        %1934 = vmatprep.mubr.bf16.mxu0 0
        %1935 = vmatmul.mubr.bf16.gmra.mxu0 %v1788
        %v1936 = vpop.f32.mrf.mxu0
        %v1937 = vadd.f32 %v1889, %v1936
        %v1938 = vpop.f32.mrf.mxu0
        %v1939 = vpop.f32.mrf.mxu0
        %v1940 = vpop.f32.mrf.mxu0
        %1941 = vdwg.mxu0
        %v1942 = vpack.c.bf16 %v1825, %v1825
        %v1943 = vpack.c.bf16 %v1881, %v1881
        %v1945 = vsel %vm1019, %v1942, 0
        %v1948 = vsel %vm1019, %v1943, 0
        %1950 = vmatprep.subr.bf16.mxu0 0
        %1951 = vmatpush1.bf16.xpose.msra.mxu0 0
        %1952 = vmatprep.subr.bf16.mxu0 0
        %1953 = vmatpush1.bf16.xpose.msra.mxu0 0
        %1954 = vmatprep.subr.bf16.mxu0 0
        %1955 = vmatpush1.bf16.xpose.msra.mxu0 0
        %1956 = vmatprep.subr.bf16.mxu0 0
        %1957 = vmatpush1.bf16.xpose.msra.mxu0 0
        %1958 = vmatprep.subr.bf16.mxu0 0
        %1959 = vmatpush1.bf16.xpose.msra.mxu0 0
        %1960 = vmatprep.subr.bf16.mxu0 0
        %1961 = vmatpush1.bf16.xpose.msra.mxu0 0
        %1962 = vmatprep.subr.bf16.mxu0 0
        %1963 = vmatpush1.bf16.xpose.msra.mxu0 0
        %1964 = vmatprep.subr.bf16.mxu0 0
        %1965 = vmatpush1.bf16.xpose.msra.mxu0 %v1948
        %1966 = vmatprep.subr.bf16.mxu0 0
        %1967 = vmatpush2.bf16.xpose.msra.mxu0 0
        %1968 = vmatprep.subr.bf16.mxu0 0
        %1969 = vmatpush2.bf16.xpose.msra.mxu0 0
        %1970 = vmatprep.subr.bf16.mxu0 0
        %1971 = vmatpush2.bf16.xpose.msra.mxu0 0
        %1972 = vmatprep.subr.bf16.mxu0 0
        %1973 = vmatpush2.bf16.xpose.msra.mxu0 0
        %1974 = vmatprep.subr.bf16.mxu0 0
        %1975 = vmatpush2.bf16.xpose.msra.mxu0 0
        %1976 = vmatprep.subr.bf16.mxu0 0
        %1977 = vmatpush2.bf16.xpose.msra.mxu0 0
        %1978 = vmatprep.subr.bf16.mxu0 0
        %1979 = vmatpush2.bf16.xpose.msra.mxu0 0
        %1980 = vmatprep.subr.bf16.mxu0 0
        %1981 = vmatpush2.bf16.xpose.msra.mxu0 0
        %1982 = vmatprep.mubr.bf16.mxu0 0
        %1983 = vmatmul.mubr.bf16.gmra.mxu0 %v1945
        %v1984 = vpop.f32.mrf.mxu0
        %v1985 = vadd.f32 0.0, %v1984
        %v1986 = vpop.f32.mrf.mxu0
        %v1987 = vpop.f32.mrf.mxu0
        %v1988 = vpop.f32.mrf.mxu0
        %1989 = vdwg.mxu0
        %v1990 = vmul.f32 %v1985, 0.25
        %v1991 = vsel %vm1067, %v1990, -inf
        %1992 = vmax.xlane.f32.xlu0 %v1991
        %v1993 = vpop.xlane.xlu0 %1992
        %v1994 = vsub.f32 %v1990, %v1993
        %v1995 = vmul.f32 %v1994, 1.442695
        %v1996 = vpow.pop %v1995
        %v1997 = vsel %vm1067, %v1996, 0.0
        %1998 = vadd.xlane.f32.xlu0 %v1997
        %v1999 = vpop.xlane.xlu0 %1998
        %v2000 = vrcp.pop %v1999
        %v2001 = vmul.f32 %v1996, %v2000
        %v2002 = vpack.c.bf16 %v2001, %v2001
        %v2003 = vpack.c.bf16 %v1937, %v1937
        %v2005 = vsel %vm1067, %v2002, 0
        %v2008 = vsel %vm1084, %v2003, 0
        %2010 = vmatprep.subr.bf16.mxu0 0
        %2011 = vmatpush1.bf16.msra.mxu0 0
        %2012 = vmatprep.subr.bf16.mxu0 0
        %2013 = vmatpush1.bf16.msra.mxu0 0
        %2014 = vmatprep.subr.bf16.mxu0 0
        %2015 = vmatpush1.bf16.msra.mxu0 0
        %2016 = vmatprep.subr.bf16.mxu0 0
        %2017 = vmatpush1.bf16.msra.mxu0 0
        %2018 = vmatprep.subr.bf16.mxu0 0
        %2019 = vmatpush1.bf16.msra.mxu0 0
        %2020 = vmatprep.subr.bf16.mxu0 0
        %2021 = vmatpush1.bf16.msra.mxu0 0
        %2022 = vmatprep.subr.bf16.mxu0 0
        %2023 = vmatpush1.bf16.msra.mxu0 0
        %2024 = vmatprep.subr.bf16.mxu0 0
        %2025 = vmatpush1.bf16.msra.mxu0 %v2008
        %2026 = vmatprep.subr.bf16.mxu0 0
        %2027 = vmatpush2.bf16.msra.mxu0 0
        %2028 = vmatprep.subr.bf16.mxu0 0
        %2029 = vmatpush2.bf16.msra.mxu0 0
        %2030 = vmatprep.subr.bf16.mxu0 0
        %2031 = vmatpush2.bf16.msra.mxu0 0
        %2032 = vmatprep.subr.bf16.mxu0 0
        %2033 = vmatpush2.bf16.msra.mxu0 0
        %2034 = vmatprep.subr.bf16.mxu0 0
        %2035 = vmatpush2.bf16.msra.mxu0 0
        %2036 = vmatprep.subr.bf16.mxu0 0
        %2037 = vmatpush2.bf16.msra.mxu0 0
        %2038 = vmatprep.subr.bf16.mxu0 0
        %2039 = vmatpush2.bf16.msra.mxu0 0
        %2040 = vmatprep.subr.bf16.mxu0 0
        %2041 = vmatpush2.bf16.msra.mxu0 0
        %2042 = vmatprep.mubr.bf16.mxu0 0
        %2043 = vmatmul.mubr.bf16.gmra.mxu0 %v2005
        %v2044 = vpop.f32.mrf.mxu0
        %v2045 = vadd.f32 0.0, %v2044
        %v2046 = vpop.f32.mrf.mxu0
        %v2047 = vpop.f32.mrf.mxu0
        %v2048 = vpop.f32.mrf.mxu0
        %2049 = vdwg.mxu0
        %v2050 = vpack.c.bf16 %v2045, %v2045
        %v2051 = vlaneseq
        %v2052 = vshrl.u32 %v2051, 7
        %v2053 = vsub.s32 1, %v2052
        %v2054 = vrot.slane %v1766, %v2053
        %v2059 = vunpack.c.l.b16 %v1738
        %v2060 = vunpack.c.l.b16 %v1739
        %v2061 = vunpack.c.l.b16 %v1740
        %v2062 = vunpack.c.l.b16 %v1741
        %v2063 = vpack.c.b16 %v2060, %v2059
        %v2064 = vpack.c.b16 %v2062, %v2061
        %2067 = vmatprep.subr.bf16.mxu0 0
        %2068 = vmatpush1.bf16.msra.mxu0 0
        %2069 = vmatprep.subr.bf16.mxu0 0
        %2070 = vmatpush1.bf16.msra.mxu0 0
        %2071 = vmatprep.subr.bf16.mxu0 0
        %2072 = vmatpush1.bf16.msra.mxu0 0
        %2073 = vmatprep.subr.bf16.mxu0 0
        %2074 = vmatpush1.bf16.msra.mxu0 0
        %2075 = vmatprep.subr.bf16.mxu0 0
        %2076 = vmatpush1.bf16.msra.mxu0 0
        %2077 = vmatprep.subr.bf16.mxu0 0
        %2078 = vmatpush1.bf16.msra.mxu0 0
        %2079 = vmatprep.subr.bf16.mxu0 0
        %2080 = vmatpush1.bf16.msra.mxu0 %v2064
        %2081 = vmatprep.subr.bf16.mxu0 0
        %2082 = vmatpush1.bf16.msra.mxu0 %v2063
        %2083 = vmatprep.subr.bf16.mxu0 0
        %2084 = vmatpush2.bf16.msra.mxu0 0
        %2085 = vmatprep.subr.bf16.mxu0 0
        %2086 = vmatpush2.bf16.msra.mxu0 0
        %2087 = vmatprep.subr.bf16.mxu0 0
        %2088 = vmatpush2.bf16.msra.mxu0 0
        %2089 = vmatprep.subr.bf16.mxu0 0
        %2090 = vmatpush2.bf16.msra.mxu0 0
        %2091 = vmatprep.subr.bf16.mxu0 0
        %2092 = vmatpush2.bf16.msra.mxu0 0
        %2093 = vmatprep.subr.bf16.mxu0 0
        %2094 = vmatpush2.bf16.msra.mxu0 0
        %2095 = vmatprep.subr.bf16.mxu0 0
        %2096 = vmatpush2.bf16.msra.mxu0 0
        %2097 = vmatprep.subr.bf16.mxu0 0
        %2098 = vmatpush2.bf16.msra.mxu0 0
        %2099 = vmatprep.mubr.bf16.mxu0 0
        %2100 = vmatmul.mubr.bf16.gmra.mxu0 %v1788
        %v2101 = vpop.f32.mrf.mxu0
        %v2102 = vadd.f32 %v2054, %v2101
        %v2103 = vpop.f32.mrf.mxu0
        %v2104 = vpop.f32.mrf.mxu0
        %v2105 = vpop.f32.mrf.mxu0
        %2106 = vdwg.mxu0
        %v2107 = vlaneseq
        %v2108 = vshrl.u32 %v2107, 7
        %v2109 = vsub.s32 1, %v2108
        %v2110 = vrot.slane %v1768, %v2109
        %v2115 = vunpack.c.l.b16 %v1747
        %v2116 = vunpack.c.l.b16 %v1748
        %v2117 = vunpack.c.l.b16 %v1749
        %v2118 = vunpack.c.l.b16 %v1750
        %v2119 = vpack.c.b16 %v2116, %v2115
        %v2120 = vpack.c.b16 %v2118, %v2117
        %2123 = vmatprep.subr.bf16.mxu0 0
        %2124 = vmatpush1.bf16.msra.mxu0 0
        %2125 = vmatprep.subr.bf16.mxu0 0
        %2126 = vmatpush1.bf16.msra.mxu0 0
        %2127 = vmatprep.subr.bf16.mxu0 0
        %2128 = vmatpush1.bf16.msra.mxu0 0
        %2129 = vmatprep.subr.bf16.mxu0 0
        %2130 = vmatpush1.bf16.msra.mxu0 0
        %2131 = vmatprep.subr.bf16.mxu0 0
        %2132 = vmatpush1.bf16.msra.mxu0 0
        %2133 = vmatprep.subr.bf16.mxu0 0
        %2134 = vmatpush1.bf16.msra.mxu0 0
        %2135 = vmatprep.subr.bf16.mxu0 0
        %2136 = vmatpush1.bf16.msra.mxu0 %v2120
        %2137 = vmatprep.subr.bf16.mxu0 0
        %2138 = vmatpush1.bf16.msra.mxu0 %v2119
        %2139 = vmatprep.subr.bf16.mxu0 0
        %2140 = vmatpush2.bf16.msra.mxu0 0
        %2141 = vmatprep.subr.bf16.mxu0 0
        %2142 = vmatpush2.bf16.msra.mxu0 0
        %2143 = vmatprep.subr.bf16.mxu0 0
        %2144 = vmatpush2.bf16.msra.mxu0 0
        %2145 = vmatprep.subr.bf16.mxu0 0
        %2146 = vmatpush2.bf16.msra.mxu0 0
        %2147 = vmatprep.subr.bf16.mxu0 0
        %2148 = vmatpush2.bf16.msra.mxu0 0
        %2149 = vmatprep.subr.bf16.mxu0 0
        %2150 = vmatpush2.bf16.msra.mxu0 0
        %2151 = vmatprep.subr.bf16.mxu0 0
        %2152 = vmatpush2.bf16.msra.mxu0 0
        %2153 = vmatprep.subr.bf16.mxu0 0
        %2154 = vmatpush2.bf16.msra.mxu0 0
        %2155 = vmatprep.mubr.bf16.mxu0 0
        %2156 = vmatmul.mubr.bf16.gmra.mxu0 %v1788
        %v2157 = vpop.f32.mrf.mxu0
        %v2158 = vadd.f32 %v2110, %v2157
        %v2159 = vpop.f32.mrf.mxu0
        %v2160 = vpop.f32.mrf.mxu0
        %v2161 = vpop.f32.mrf.mxu0
        %2162 = vdwg.mxu0
        %v2163 = vlaneseq
        %v2164 = vshrl.u32 %v2163, 7
        %v2165 = vsub.s32 1, %v2164
        %v2166 = vrot.slane %v1770, %v2165
        %v2171 = vunpack.c.l.b16 %v1756
        %v2172 = vunpack.c.l.b16 %v1757
        %v2173 = vunpack.c.l.b16 %v1758
        %v2174 = vunpack.c.l.b16 %v1759
        %v2175 = vpack.c.b16 %v2172, %v2171
        %v2176 = vpack.c.b16 %v2174, %v2173
        %2179 = vmatprep.subr.bf16.mxu0 0
        %2180 = vmatpush1.bf16.msra.mxu0 0
        %2181 = vmatprep.subr.bf16.mxu0 0
        %2182 = vmatpush1.bf16.msra.mxu0 0
        %2183 = vmatprep.subr.bf16.mxu0 0
        %2184 = vmatpush1.bf16.msra.mxu0 0
        %2185 = vmatprep.subr.bf16.mxu0 0
        %2186 = vmatpush1.bf16.msra.mxu0 0
        %2187 = vmatprep.subr.bf16.mxu0 0
        %2188 = vmatpush1.bf16.msra.mxu0 0
        %2189 = vmatprep.subr.bf16.mxu0 0
        %2190 = vmatpush1.bf16.msra.mxu0 0
        %2191 = vmatprep.subr.bf16.mxu0 0
        %2192 = vmatpush1.bf16.msra.mxu0 %v2176
        %2193 = vmatprep.subr.bf16.mxu0 0
        %2194 = vmatpush1.bf16.msra.mxu0 %v2175
        %2195 = vmatprep.subr.bf16.mxu0 0
        %2196 = vmatpush2.bf16.msra.mxu0 0
        %2197 = vmatprep.subr.bf16.mxu0 0
        %2198 = vmatpush2.bf16.msra.mxu0 0
        %2199 = vmatprep.subr.bf16.mxu0 0
        %2200 = vmatpush2.bf16.msra.mxu0 0
        %2201 = vmatprep.subr.bf16.mxu0 0
        %2202 = vmatpush2.bf16.msra.mxu0 0
        %2203 = vmatprep.subr.bf16.mxu0 0
        %2204 = vmatpush2.bf16.msra.mxu0 0
        %2205 = vmatprep.subr.bf16.mxu0 0
        %2206 = vmatpush2.bf16.msra.mxu0 0
        %2207 = vmatprep.subr.bf16.mxu0 0
        %2208 = vmatpush2.bf16.msra.mxu0 0
        %2209 = vmatprep.subr.bf16.mxu0 0
        %2210 = vmatpush2.bf16.msra.mxu0 0
        %2211 = vmatprep.mubr.bf16.mxu0 0
        %2212 = vmatmul.mubr.bf16.gmra.mxu0 %v1788
        %v2213 = vpop.f32.mrf.mxu0
        %v2214 = vadd.f32 %v2166, %v2213
        %v2215 = vpop.f32.mrf.mxu0
        %v2216 = vpop.f32.mrf.mxu0
        %v2217 = vpop.f32.mrf.mxu0
        %2218 = vdwg.mxu0
        %v2219 = vpack.c.bf16 %v2102, %v2102
        %v2220 = vpack.c.bf16 %v2158, %v2158
        %v2222 = vsel %vm1019, %v2219, 0
        %v2225 = vsel %vm1019, %v2220, 0
        %2227 = vmatprep.subr.bf16.mxu0 0
        %2228 = vmatpush1.bf16.xpose.msra.mxu0 0
        %2229 = vmatprep.subr.bf16.mxu0 0
        %2230 = vmatpush1.bf16.xpose.msra.mxu0 0
        %2231 = vmatprep.subr.bf16.mxu0 0
        %2232 = vmatpush1.bf16.xpose.msra.mxu0 0
        %2233 = vmatprep.subr.bf16.mxu0 0
        %2234 = vmatpush1.bf16.xpose.msra.mxu0 0
        %2235 = vmatprep.subr.bf16.mxu0 0
        %2236 = vmatpush1.bf16.xpose.msra.mxu0 0
        %2237 = vmatprep.subr.bf16.mxu0 0
        %2238 = vmatpush1.bf16.xpose.msra.mxu0 0
        %2239 = vmatprep.subr.bf16.mxu0 0
        %2240 = vmatpush1.bf16.xpose.msra.mxu0 0
        %2241 = vmatprep.subr.bf16.mxu0 0
        %2242 = vmatpush1.bf16.xpose.msra.mxu0 %v2225
        %2243 = vmatprep.subr.bf16.mxu0 0
        %2244 = vmatpush2.bf16.xpose.msra.mxu0 0
        %2245 = vmatprep.subr.bf16.mxu0 0
        %2246 = vmatpush2.bf16.xpose.msra.mxu0 0
        %2247 = vmatprep.subr.bf16.mxu0 0
        %2248 = vmatpush2.bf16.xpose.msra.mxu0 0
        %2249 = vmatprep.subr.bf16.mxu0 0
        %2250 = vmatpush2.bf16.xpose.msra.mxu0 0
        %2251 = vmatprep.subr.bf16.mxu0 0
        %2252 = vmatpush2.bf16.xpose.msra.mxu0 0
        %2253 = vmatprep.subr.bf16.mxu0 0
        %2254 = vmatpush2.bf16.xpose.msra.mxu0 0
        %2255 = vmatprep.subr.bf16.mxu0 0
        %2256 = vmatpush2.bf16.xpose.msra.mxu0 0
        %2257 = vmatprep.subr.bf16.mxu0 0
        %2258 = vmatpush2.bf16.xpose.msra.mxu0 0
        %2259 = vmatprep.mubr.bf16.mxu0 0
        %2260 = vmatmul.mubr.bf16.gmra.mxu0 %v2222
        %v2261 = vpop.f32.mrf.mxu0
        %v2262 = vadd.f32 0.0, %v2261
        %v2263 = vpop.f32.mrf.mxu0
        %v2264 = vpop.f32.mrf.mxu0
        %v2265 = vpop.f32.mrf.mxu0
        %2266 = vdwg.mxu0
        %v2267 = vmul.f32 %v2262, 0.25
        %v2268 = vsel %vm1067, %v2267, -inf
        %2269 = vmax.xlane.f32.xlu0 %v2268
        %v2270 = vpop.xlane.xlu0 %2269
        %v2271 = vsub.f32 %v2267, %v2270
        %v2272 = vmul.f32 %v2271, 1.442695
        %v2273 = vpow.pop %v2272
        %v2274 = vsel %vm1067, %v2273, 0.0
        %2275 = vadd.xlane.f32.xlu0 %v2274
        %v2276 = vpop.xlane.xlu0 %2275
        %v2277 = vrcp.pop %v2276
        %v2278 = vmul.f32 %v2273, %v2277
        %v2279 = vpack.c.bf16 %v2278, %v2278
        %v2280 = vpack.c.bf16 %v2214, %v2214
        %v2282 = vsel %vm1067, %v2279, 0
        %v2285 = vsel %vm1084, %v2280, 0
        %2287 = vmatprep.subr.bf16.mxu0 0
        %2288 = vmatpush1.bf16.msra.mxu0 0
        %2289 = vmatprep.subr.bf16.mxu0 0
        %2290 = vmatpush1.bf16.msra.mxu0 0
        %2291 = vmatprep.subr.bf16.mxu0 0
        %2292 = vmatpush1.bf16.msra.mxu0 0
        %2293 = vmatprep.subr.bf16.mxu0 0
        %2294 = vmatpush1.bf16.msra.mxu0 0
        %2295 = vmatprep.subr.bf16.mxu0 0
        %2296 = vmatpush1.bf16.msra.mxu0 0
        %2297 = vmatprep.subr.bf16.mxu0 0
        %2298 = vmatpush1.bf16.msra.mxu0 0
        %2299 = vmatprep.subr.bf16.mxu0 0
        %2300 = vmatpush1.bf16.msra.mxu0 0
        %2301 = vmatprep.subr.bf16.mxu0 0
        %2302 = vmatpush1.bf16.msra.mxu0 %v2285
        %2303 = vmatprep.subr.bf16.mxu0 0
        %2304 = vmatpush2.bf16.msra.mxu0 0
        %2305 = vmatprep.subr.bf16.mxu0 0
        %2306 = vmatpush2.bf16.msra.mxu0 0
        %2307 = vmatprep.subr.bf16.mxu0 0
        %2308 = vmatpush2.bf16.msra.mxu0 0
        %2309 = vmatprep.subr.bf16.mxu0 0
        %2310 = vmatpush2.bf16.msra.mxu0 0
        %2311 = vmatprep.subr.bf16.mxu0 0
        %2312 = vmatpush2.bf16.msra.mxu0 0
        %2313 = vmatprep.subr.bf16.mxu0 0
        %2314 = vmatpush2.bf16.msra.mxu0 0
        %2315 = vmatprep.subr.bf16.mxu0 0
        %2316 = vmatpush2.bf16.msra.mxu0 0
        %2317 = vmatprep.subr.bf16.mxu0 0
        %2318 = vmatpush2.bf16.msra.mxu0 0
        %2319 = vmatprep.mubr.bf16.mxu0 0
        %2320 = vmatmul.mubr.bf16.gmra.mxu0 %v2282
        %v2321 = vpop.f32.mrf.mxu0
        %v2322 = vadd.f32 0.0, %v2321
        %v2323 = vpop.f32.mrf.mxu0
        %v2324 = vpop.f32.mrf.mxu0
        %v2325 = vpop.f32.mrf.mxu0
        %2326 = vdwg.mxu0
        %v2327 = vpack.c.bf16 %v2322, %v2322
        %v2330 = vunpack.c.l.b16 %v1763
        %v2331 = vunpack.c.l.b16 %v1764
        %v2332 = vpack.c.b16 %v2331, %v2330
        %v2335 = vsel %vm1019, %v2327, 0
        %2337 = vmatprep.subr.bf16.mxu0 0
        %2338 = vmatpush1.bf16.msra.mxu0 0
        %2339 = vmatprep.subr.bf16.mxu0 0
        %2340 = vmatpush1.bf16.msra.mxu0 0
        %2341 = vmatprep.subr.bf16.mxu0 0
        %2342 = vmatpush1.bf16.msra.mxu0 0
        %2343 = vmatprep.subr.bf16.mxu0 0
        %2344 = vmatpush1.bf16.msra.mxu0 0
        %2345 = vmatprep.subr.bf16.mxu0 0
        %2346 = vmatpush1.bf16.msra.mxu0 0
        %2347 = vmatprep.subr.bf16.mxu0 0
        %2348 = vmatpush1.bf16.msra.mxu0 0
        %2349 = vmatprep.subr.bf16.mxu0 0
        %2350 = vmatpush1.bf16.msra.mxu0 0
        %2351 = vmatprep.subr.bf16.mxu0 0
        %2352 = vmatpush1.bf16.msra.mxu0 %v2332
        %2353 = vmatprep.subr.bf16.mxu0 0
        %2354 = vmatpush2.bf16.msra.mxu0 0
        %2355 = vmatprep.subr.bf16.mxu0 0
        %2356 = vmatpush2.bf16.msra.mxu0 0
        %2357 = vmatprep.subr.bf16.mxu0 0
        %2358 = vmatpush2.bf16.msra.mxu0 0
        %2359 = vmatprep.subr.bf16.mxu0 0
        %2360 = vmatpush2.bf16.msra.mxu0 0
        %2361 = vmatprep.subr.bf16.mxu0 0
        %2362 = vmatpush2.bf16.msra.mxu0 0
        %2363 = vmatprep.subr.bf16.mxu0 0
        %2364 = vmatpush2.bf16.msra.mxu0 0
        %2365 = vmatprep.subr.bf16.mxu0 0
        %2366 = vmatpush2.bf16.msra.mxu0 0
        %2367 = vmatprep.subr.bf16.mxu0 0
        %2368 = vmatpush2.bf16.msra.mxu0 0
        %2369 = vmatprep.mubr.bf16.mxu0 0
        %2370 = vmatmul.mubr.bf16.gmra.mxu0 %v2335
        %v2371 = vpop.f32.mrf.mxu0
        %v2372 = vadd.f32 0.0, %v2371
        %v2373 = vpop.f32.mrf.mxu0
        %v2374 = vpop.f32.mrf.mxu0
        %v2375 = vpop.f32.mrf.mxu0
        %2376 = vdwg.mxu0
        %v2379 = vunpack.c.l.b16 %v1761
        %v2380 = vunpack.c.l.b16 %v1762
        %v2381 = vpack.c.b16 %v2380, %v2379
        %v2384 = vsel %vm1019, %v2050, 0
        %2386 = vmatprep.subr.bf16.mxu0 0
        %2387 = vmatpush1.bf16.msra.mxu0 0
        %2388 = vmatprep.subr.bf16.mxu0 0
        %2389 = vmatpush1.bf16.msra.mxu0 0
        %2390 = vmatprep.subr.bf16.mxu0 0
        %2391 = vmatpush1.bf16.msra.mxu0 0
        %2392 = vmatprep.subr.bf16.mxu0 0
        %2393 = vmatpush1.bf16.msra.mxu0 0
        %2394 = vmatprep.subr.bf16.mxu0 0
        %2395 = vmatpush1.bf16.msra.mxu0 0
        %2396 = vmatprep.subr.bf16.mxu0 0
        %2397 = vmatpush1.bf16.msra.mxu0 0
        %2398 = vmatprep.subr.bf16.mxu0 0
        %2399 = vmatpush1.bf16.msra.mxu0 0
        %2400 = vmatprep.subr.bf16.mxu0 0
        %2401 = vmatpush1.bf16.msra.mxu0 %v2381
        %2402 = vmatprep.subr.bf16.mxu0 0
        %2403 = vmatpush2.bf16.msra.mxu0 0
        %2404 = vmatprep.subr.bf16.mxu0 0
        %2405 = vmatpush2.bf16.msra.mxu0 0
        %2406 = vmatprep.subr.bf16.mxu0 0
        %2407 = vmatpush2.bf16.msra.mxu0 0
        %2408 = vmatprep.subr.bf16.mxu0 0
        %2409 = vmatpush2.bf16.msra.mxu0 0
        %2410 = vmatprep.subr.bf16.mxu0 0
        %2411 = vmatpush2.bf16.msra.mxu0 0
        %2412 = vmatprep.subr.bf16.mxu0 0
        %2413 = vmatpush2.bf16.msra.mxu0 0
        %2414 = vmatprep.subr.bf16.mxu0 0
        %2415 = vmatpush2.bf16.msra.mxu0 0
        %2416 = vmatprep.subr.bf16.mxu0 0
        %2417 = vmatpush2.bf16.msra.mxu0 0
        %2418 = vmatprep.mubr.bf16.mxu0 0
        %2419 = vmatmul.mubr.bf16.gmra.mxu0 %v2384
        %v2420 = vpop.f32.mrf.mxu0
        %v2421 = vadd.f32 %v2372, %v2420
        %v2422 = vpop.f32.mrf.mxu0
        %v2423 = vpop.f32.mrf.mxu0
        %v2424 = vpop.f32.mrf.mxu0
        %2425 = vdwg.mxu0
        %s2426 = scalar_lea.vmem %s13, 1
        %v2427 = vld [vmem:[%s2426] sm:$0x1]
        %v2429 = vlaneseq
        %v2430 = vshrl.u32 %v2429, 7
        %v2431 = vsub.s32 0, %v2430
        %v2432 = vrot.slane %v2427, %v2431
        %v2434 = vadd.f32 %v2421, %v2432
        %v2435 = vadd.f32 %v1731, %v2434
        %s2436 = scalar_lea.vmem %s14, 1
        %v2437 = vld [vmem:[%s2436] sm:$0x1]
        %s2438 = scalar_lea.vmem %s15, 1
        %v2439 = vld [vmem:[%s2438] sm:$0x1]
        %v2440 = vsel %vm785, %v2435, 0.0
        %2441 = vadd.xlane.f32.xlu0 %v2440
        %v2442 = vpop.xlane.xlu0 %2441
        %v2443 = vmul.f32 %v2442, %v789
        %v2444 = vsub.f32 %v2435, %v2443
        %v2445 = vmul.f32 %v2444, %v2444
        %v2446 = vsel %vm785, %v2445, 0.0
        %2447 = vadd.xlane.f32.xlu0 %v2446
        %v2448 = vpop.xlane.xlu0 %2447
        %v2449 = vmul.f32 %v2448, %v789
        %v2450 = vadd.f32 %v2449, 1e-12
        %v2451 = vrsqrt.pop %v2450
        %v2452 = vmul.f32 %v2444, %v2451
        %v2454 = vlaneseq
        %v2455 = vshrl.u32 %v2454, 7
        %v2456 = vsub.s32 0, %v2455
        %v2457 = vrot.slane %v2437, %v2456
        %v2459 = vmul.f32 %v2452, %v2457
        %v2461 = vlaneseq
        %v2462 = vshrl.u32 %v2461, 7
        %v2463 = vsub.s32 0, %v2462
        %v2464 = vrot.slane %v2439, %v2463
        %v2466 = vadd.f32 %v2459, %v2464
        %v2467 = vpack.c.bf16 %v2466, %v2466
        %s2468 = scalar_lea.vmem %s16, 16
        %v2469 = vld [vmem:[%s2468] sm:$0xf]
        %v2470 = vld [vmem:[%s2468 + $0x4] sm:$0xf]
        %v2471 = vld [vmem:[%s2468 + $0x8] sm:$0xf]
        %v2472 = vld [vmem:[%s2468 + $0xc] sm:$0xf]
        %s2473 = scalar_lea.vmem %s17, 1
        %v2474 = vld [vmem:[%s2473] sm:$0x1]
        %v2476 = vlaneseq
        %v2477 = vshrl.u32 %v2476, 7
        %v2478 = vsub.s32 0, %v2477
        %v2479 = vrot.slane %v2474, %v2478
        %v2485 = vunpack.c.l.b16 %v2469
        %v2486 = vunpack.c.l.b16 %v2470
        %v2487 = vunpack.c.l.b16 %v2471
        %v2488 = vunpack.c.l.b16 %v2472
        %v2489 = vpack.c.b16 %v2486, %v2485
        %v2490 = vpack.c.b16 %v2488, %v2487
        %v2494 = vsel %vm785, %v2467, 0
        %2496 = vmatprep.subr.bf16.mxu0 0
        %2497 = vmatpush1.bf16.msra.mxu0 0
        %2498 = vmatprep.subr.bf16.mxu0 0
        %2499 = vmatpush1.bf16.msra.mxu0 0
        %2500 = vmatprep.subr.bf16.mxu0 0
        %2501 = vmatpush1.bf16.msra.mxu0 0
        %2502 = vmatprep.subr.bf16.mxu0 0
        %2503 = vmatpush1.bf16.msra.mxu0 0
        %2504 = vmatprep.subr.bf16.mxu0 0
        %2505 = vmatpush1.bf16.msra.mxu0 0
        %2506 = vmatprep.subr.bf16.mxu0 0
        %2507 = vmatpush1.bf16.msra.mxu0 0
        %2508 = vmatprep.subr.bf16.mxu0 0
        %2509 = vmatpush1.bf16.msra.mxu0 %v2490
        %2510 = vmatprep.subr.bf16.mxu0 0
        %2511 = vmatpush1.bf16.msra.mxu0 %v2489
        %2512 = vmatprep.subr.bf16.mxu0 0
        %2513 = vmatpush2.bf16.msra.mxu0 0
        %2514 = vmatprep.subr.bf16.mxu0 0
        %2515 = vmatpush2.bf16.msra.mxu0 0
        %2516 = vmatprep.subr.bf16.mxu0 0
        %2517 = vmatpush2.bf16.msra.mxu0 0
        %2518 = vmatprep.subr.bf16.mxu0 0
        %2519 = vmatpush2.bf16.msra.mxu0 0
        %2520 = vmatprep.subr.bf16.mxu0 0
        %2521 = vmatpush2.bf16.msra.mxu0 0
        %2522 = vmatprep.subr.bf16.mxu0 0
        %2523 = vmatpush2.bf16.msra.mxu0 0
        %2524 = vmatprep.subr.bf16.mxu0 0
        %2525 = vmatpush2.bf16.msra.mxu0 0
        %2526 = vmatprep.subr.bf16.mxu0 0
        %2527 = vmatpush2.bf16.msra.mxu0 0
        %2528 = vmatprep.mubr.bf16.mxu0 0
        %2529 = vmatmul.mubr.bf16.gmra.mxu0 %v2494
        %v2530 = vpop.f32.mrf.mxu0
        %v2531 = vadd.f32 %v2479, %v2530
        %v2532 = vpop.f32.mrf.mxu0
        %v2533 = vpop.f32.mrf.mxu0
        %v2534 = vpop.f32.mrf.mxu0
        %2535 = vdwg.mxu0
        %v2536 = vmul.f32 %v2531, 0.5
        %v2537 = vmul.f32 %v2531, 0.044715
        %v2538 = vmul.f32 %v2537, %v2531
        %v2539 = vmul.f32 %v2538, %v2531
        %v2540 = vadd.f32 %v2531, %v2539
        %v2541 = vmul.f32 %v2540, 0.7978846
        %v2542 = vtanh.pop %v2541
        %v2543 = vadd.f32 %v2542, 1.0
        %v2544 = vmul.f32 %v2536, %v2543
        %v2545 = vpack.c.bf16 %v2544, %v2544
        %s2546 = scalar_lea.vmem %s18, 32
        %v2547 = vld [vmem:[%s2546] sm:$0xf]
        %v2548 = vld [vmem:[%s2546 + $0x4] sm:$0xf]
        %v2549 = vld [vmem:[%s2546 + $0x8] sm:$0xf]
        %v2550 = vld [vmem:[%s2546 + $0xc] sm:$0xf]
        %v2551 = vld [vmem:[%s2546 + $0x10] sm:$0xf]
        %v2552 = vld [vmem:[%s2546 + $0x14] sm:$0xf]
        %v2553 = vld [vmem:[%s2546 + $0x18] sm:$0xf]
        %v2554 = vld [vmem:[%s2546 + $0x1c] sm:$0xf]
        %s2555 = scalar_lea.vmem %s19, 1
        %v2556 = vld [vmem:[%s2555] sm:$0x1]
        %v2558 = vlaneseq
        %v2559 = vshrl.u32 %v2558, 7
        %v2560 = vsub.s32 0, %v2559
        %v2561 = vrot.slane %v2556, %v2560
        %v2571 = vunpack.c.l.b16 %v2547
        %v2572 = vunpack.c.l.b16 %v2548
        %v2573 = vunpack.c.l.b16 %v2549
        %v2574 = vunpack.c.l.b16 %v2550
        %v2575 = vunpack.c.l.b16 %v2551
        %v2576 = vunpack.c.l.b16 %v2552
        %v2577 = vunpack.c.l.b16 %v2553
        %v2578 = vunpack.c.l.b16 %v2554
        %v2579 = vpack.c.b16 %v2572, %v2571
        %v2580 = vpack.c.b16 %v2574, %v2573
        %v2581 = vpack.c.b16 %v2576, %v2575
        %v2582 = vpack.c.b16 %v2578, %v2577
        %v2588 = vsel %vm1658, %v2545, 0
        %2590 = vmatprep.subr.bf16.mxu0 0
        %2591 = vmatpush1.bf16.msra.mxu0 0
        %2592 = vmatprep.subr.bf16.mxu0 0
        %2593 = vmatpush1.bf16.msra.mxu0 0
        %2594 = vmatprep.subr.bf16.mxu0 0
        %2595 = vmatpush1.bf16.msra.mxu0 0
        %2596 = vmatprep.subr.bf16.mxu0 0
        %2597 = vmatpush1.bf16.msra.mxu0 0
        %2598 = vmatprep.subr.bf16.mxu0 0
        %2599 = vmatpush1.bf16.msra.mxu0 %v2582
        %2600 = vmatprep.subr.bf16.mxu0 0
        %2601 = vmatpush1.bf16.msra.mxu0 %v2581
        %2602 = vmatprep.subr.bf16.mxu0 0
        %2603 = vmatpush1.bf16.msra.mxu0 %v2580
        %2604 = vmatprep.subr.bf16.mxu0 0
        %2605 = vmatpush1.bf16.msra.mxu0 %v2579
        %2606 = vmatprep.subr.bf16.mxu0 0
        %2607 = vmatpush2.bf16.msra.mxu0 0
        %2608 = vmatprep.subr.bf16.mxu0 0
        %2609 = vmatpush2.bf16.msra.mxu0 0
        %2610 = vmatprep.subr.bf16.mxu0 0
        %2611 = vmatpush2.bf16.msra.mxu0 0
        %2612 = vmatprep.subr.bf16.mxu0 0
        %2613 = vmatpush2.bf16.msra.mxu0 0
        %2614 = vmatprep.subr.bf16.mxu0 0
        %2615 = vmatpush2.bf16.msra.mxu0 0
        %2616 = vmatprep.subr.bf16.mxu0 0
        %2617 = vmatpush2.bf16.msra.mxu0 0
        %2618 = vmatprep.subr.bf16.mxu0 0
        %2619 = vmatpush2.bf16.msra.mxu0 0
        %2620 = vmatprep.subr.bf16.mxu0 0
        %2621 = vmatpush2.bf16.msra.mxu0 0
        %2622 = vmatprep.mubr.bf16.mxu0 0
        %2623 = vmatmul.mubr.bf16.gmra.mxu0 %v2588
        %v2624 = vpop.f32.mrf.mxu0
        %v2625 = vadd.f32 %v2561, %v2624
        %v2626 = vpop.f32.mrf.mxu0
        %v2627 = vpop.f32.mrf.mxu0
        %v2628 = vpop.f32.mrf.mxu0
        %2629 = vdwg.mxu0
        %v2630 = vadd.f32 %v2466, %v2625
        %s2631 = scalar_lea.vmem %s20, 1
        %v2632 = vld [vmem:[%s2631] sm:$0x1]
        %s2633 = scalar_lea.vmem %s21, 1
        %v2634 = vld [vmem:[%s2633] sm:$0x1]
        %v2635 = vsel %vm785, %v2630, 0.0
        %2636 = vadd.xlane.f32.xlu0 %v2635
        %v2637 = vpop.xlane.xlu0 %2636
        %v2638 = vmul.f32 %v2637, %v789
        %v2639 = vsub.f32 %v2630, %v2638
        %v2640 = vmul.f32 %v2639, %v2639
        %v2641 = vsel %vm785, %v2640, 0.0
        %2642 = vadd.xlane.f32.xlu0 %v2641
        %v2643 = vpop.xlane.xlu0 %2642
        %v2644 = vmul.f32 %v2643, %v789
        %v2645 = vadd.f32 %v2644, 1e-12
        %v2646 = vrsqrt.pop %v2645
        %v2647 = vmul.f32 %v2639, %v2646
        %v2649 = vlaneseq
        %v2650 = vshrl.u32 %v2649, 7
        %v2651 = vsub.s32 0, %v2650
        %v2652 = vrot.slane %v2632, %v2651
        %v2654 = vmul.f32 %v2647, %v2652
        %v2656 = vlaneseq
        %v2657 = vshrl.u32 %v2656, 7
        %v2658 = vsub.s32 0, %v2657
        %v2659 = vrot.slane %v2634, %v2658
        %v2661 = vadd.f32 %v2654, %v2659
        %v2662 = vsel %vm785, %v2661, 0.0
        %v2663 = vrot.slane %v2662, 4
        %v2664 = vadd.f32 %v2662, %v2663
        %v2665 = vrot.slane %v2664, 2
        %v2666 = vadd.f32 %v2664, %v2665
        %v2667 = vrot.slane %v2666, 1
        %v2668 = vadd.f32 %v2666, %v2667
        %v2669 = vrcp.pop 8.0
        %v2670 = vmul.f32 %v2668, %v2669
        %vm2671 = vcmask 253952
        %2672 = vst.msk [vmem:[%s673] sm:$0x1] %vm2671, %v2670
        %s2673 = sand.u32 %s511, 1
        %s2674 = scalar_lea.sflag [#allocation3], %s2673
        %s2675 = sand.u32 %s511, 1
        %s2676 = scalar_lea.vmem [#allocation2], %s2675
        // Predicated region
        $region109: #{text_embedding_forward.1} parent=107 // pred_check
          %p2677 = pneg %p521
        $region110: #{text_embedding_forward.1} parent=107 // pred_check_branch
          %2679 = sbr.rel (%p2677) target = $region112
        $region111: #{text_embedding_forward.1} parent=107 // pred_region
          %s2681 = ssub.s32 16, 16
          %2682 = vsyncadd %s2674, %s2681
          %s2683 = smul.addr %s36, 16
          %s2684 = scalar_lea.hbm %s22, %s2683
          %s2686 = sshll.u32 %s2676, 4
          %s2687 = int_to_ptr.vmem [resolvable:$true] %s2686
          %2689 = dma.vmem_to_hbm [thread:$0]  %s2687, 16, %s2684, %s2674
        $region112: #{text_embedding_forward.1} parent=107 // pred_fallthru
          _
      $region108: #{text_embedding_forward.1} parent=5 // pred_fallthru
        _
      %p2690 = scmp.le.s32.totalorder 2, %s31
      // Predicated region
      $region113: #{text_embedding_forward.1} parent=5 // pred_check
        %p2691 = pneg %p2690
      $region114: #{text_embedding_forward.1} parent=5 // pred_check_branch
        %2693 = sbr.rel (%p2691) target = $region116
      $region115: #{text_embedding_forward.1} parent=5 // pred_region
        %s2694 = ssub.s32 %s31, 2
        // Predicated region
        $region117: #{text_embedding_forward.1} parent=115 // pred_check
          %p2695 = pneg %p527
        $region118: #{text_embedding_forward.1} parent=115 // pred_check_branch
          %2697 = sbr.rel (%p2695) target = $region120
        $region119: #{text_embedding_forward.1} parent=115 // pred_region
          %s2698 = sand.u32 %s512, 1
          %s2699 = scalar_lea.sflag [#allocation3], %s2698
          %s2700 = sand.u32 %s512, 1
          %s2701 = scalar_lea.vmem [#allocation2], %s2700
          %2702 = dma.done %s2699, 16
        $region120: #{text_embedding_forward.1} parent=115 // pred_fallthru
          _
      $region116: #{text_embedding_forward.1} parent=5 // pred_fallthru
        _
    $region6: #{text_embedding_forward.1} parent=1 // loop_footer
      %s35 = sadd.s32 1, %s31
    $region7: #{text_embedding_forward.1} parent=1 // loop_footer_branch
      %30 = sbr.rel target = $region3
    $region8: #{text_embedding_forward.1} parent=1 // loop_exit
      _
    %2703 = vsyncpa [#allocation3], 1
    %s2704 = scalar_lea.sflag [#allocation3], 1
    %2705 = vsyncpa %s2704, 1

</llo_original>
